<compile_context>
chip_gen: v7x
topology: tpu7x:2x2x1
jax: 0.10.0
libtpu: 0.0.40
codegen_flags: <defaults>
</compile_context>

<pallas_src>
import functools

import jax
import jax.numpy as jnp
from jax import lax
from jax.experimental import pallas as pl
from jax.experimental.pallas import tpu as pltpu


def _round_up(v, m):
    return (v + m - 1) // m * m


def _hw_config():
    """Per-generation knobs: MXU width and scoped-VMEM limit."""
    try:
        kind = jax.devices()[0].device_kind.lower()
    except Exception:
        kind = ""
    is_v7 = "v7" in kind
    wide_mxu = is_v7 or ("v6" in kind)            # 2x256x256 MXU on v6e / v7x
    # v7x: only 64 MiB physical VMEM per TensorCore -> leave headroom (48 MiB).
    # v5e/v6e: 128 MiB physical, 64 MiB scoped is comfortable.
    vmem_limit = (48 if is_v7 else 64) * 1024 * 1024
    return wide_mxu, vmem_limit


def _pick_band_rows(Hout, Wout, Cin_k, cout_tile, itemsize, use_im2col,
                    max_band_rows=None, budget_bytes=12 * 1024 * 1024):
    """Largest output-row band whose per-band footprint fits the VMEM budget.

    Bands must divide Hout and keep the flat (band*Wout, cout_tile) output block
    sublane-aligned (multiple of 8), unless the band is the whole image.
    """
    def footprint(rows):
        npos = rows * Wout
        k = 9 * Cin_k if use_im2col else Cin_k
        return (npos * cout_tile * 4                  # f32 accumulator
                + 2 * npos * cout_tile * itemsize     # double-buffered output block
                + 2 * npos * k * itemsize)            # im2col patches / tap copies

    valid = [d for d in range(1, Hout + 1)
             if Hout % d == 0 and (d == Hout or (d * Wout) % 8 == 0)]
    ok = [d for d in valid
          if footprint(d) <= budget_bytes
          and (max_band_rows is None or d <= max_band_rows)]
    return max(ok) if ok else min(valid)


def _make_kernel(Wout, Cin_k, band_h, num_bands, cout_tile, use_im2col):
    def kernel(x_ref, w_ref, o_ref):
        # x_ref: (Hp, Wp, Cin_k)     spatially pre-padded NHWC image (batch squeezed)
        # w_ref: (9*Cin_k, ct)       [im2col path]  or  (9, Cin_k, ct)  [per-tap path]
        # o_ref: (band_h*Wout, ct)   flat, lane-dense output slab for this row band
        if num_bands == 1:
            xb = x_ref[...]                                    # (band_h+2, Wp, Cin_k)
        else:
            row0 = pl.program_id(2) * band_h                   # band axis is innermost
            xb = x_ref[pl.ds(row0, band_h + 2), :, :]          # band + 2-row halo

        if use_im2col:
            # Lane-aligned im2col (Cin_k % 128 == 0): one MXU matmul with K = 9*Cin_k.
            taps = [xb[ky:ky + band_h, kx:kx + Wout, :]
                    for ky in range(3) for kx in range(3)]
            patches = jnp.concatenate(taps, axis=-1)           # (band_h, Wout, 9*Cin_k)
            patches = patches.reshape(band_h * Wout, 9 * Cin_k)
            acc = jnp.dot(patches, w_ref[...],
                          preferred_element_type=jnp.float32)
        else:
            # Small Cin: 9 per-tap matmuls accumulated in f32 — avoids the unaligned
            # lane-axis concatenate and its relayout copies (perf review).
            acc = jnp.zeros((band_h * Wout, cout_tile), jnp.float32)
            t = 0
            for ky in range(3):
                for kx in range(3):
                    tap = xb[ky:ky + band_h, kx:kx + Wout, :]
                    tap = tap.reshape(band_h * Wout, Cin_k)
                    acc = acc + jnp.dot(tap, w_ref[t],
                                        preferred_element_type=jnp.float32)
                    t += 1

        # Flat, lane-dense (unmasked) store; (Hout, Wout) reshape happens in the wrapper.
        o_ref[...] = acc.astype(o_ref.dtype)

    return kernel


@functools.partial(
    jax.jit,
    static_argnames=("padding", "use_expansion", "compute_dtype", "max_band_rows"))
def conv2d_modified(x_nchw, w3_oihw, w1_oihw=None, *, padding=0,
                    use_expansion=False, compute_dtype=jnp.bfloat16,
                    max_band_rows=None):
    """Forward pass of Conv2d_mofied (3x3, stride=1, groups=1, bias=False).

    x_nchw:  (N, Cin, H, W)    float32
    w3_oihw: (Cout, Cin, 3, 3) 3x3 conv weight
    w1_oihw: (Cout, Cin, 1, 1) 1x1 expansion weight (only needed when use_expansion)
    returns: (N, Cout, Hout, Wout) in x's dtype.
    compute_dtype=jnp.float32 gives a bit-parity-style path (no bf16 rounding).
    """
    N, Cin, H, W = x_nchw.shape
    Cout = w3_oihw.shape[0]
    Hout, Wout = H + 2 * padding - 2, W + 2 * padding - 2
    assert Hout >= 1 and Wout >= 1

    if use_expansion:
        assert w1_oihw is not None, "use_expansion=True requires the 1x1 weight"
        # PyTorch would also require matching shapes to add the two branches.
        assert Hout == H and Wout == W, "use_expansion requires padding=1"

    wide_mxu, vmem_limit = _hw_config()

    # ---- weights: HWIO; fold the 1x1 branch into the 3x3 centre tap (exact, forward
    # is linear: conv1x1(x) + conv3x3(x) == conv3x3 with w1 added to the centre tap) ----
    w3 = jnp.transpose(w3_oihw, (2, 3, 1, 0)).astype(jnp.float32)   # (3,3,Cin,Cout)
    if use_expansion:
        w1 = jnp.transpose(w1_oihw[:, :, 0, 0], (1, 0))             # (Cin, Cout)
        w3 = w3.at[1, 1].add(w1)

    # Path selection (perf review): lane-aligned im2col for large Cin (pad Cin to a
    # multiple of 128, zero-pad matching weight rows); per-tap matmuls for small Cin.
    use_im2col = Cin >= 128
    Cin_k = _round_up(Cin, 128) if use_im2col else Cin

    # Cout tile: 256 on the 256-wide MXUs (v6e/v7x) when Cout is large enough; else 128.
    cout_tile = 256 if (wide_mxu and Cout >= 256) else 128
    cout_pad = _round_up(Cout, cout_tile)

    itemsize = jnp.dtype(compute_dtype).itemsize
    band_h = _pick_band_rows(Hout, Wout, Cin_k, cout_tile, itemsize, use_im2col,
                             max_band_rows=max_band_rows)
    num_bands = Hout // band_h
    num_ct = cout_pad // cout_tile

    w3 = jnp.pad(w3, ((0, 0), (0, 0), (0, Cin_k - Cin), (0, cout_pad - Cout)))
    w3 = w3.astype(compute_dtype)
    w_arg = (w3.reshape(9 * Cin_k, cout_pad) if use_im2col
             else w3.reshape(9, Cin_k, cout_pad))                    # (ky,kx,cin)-major

    # ---- activations: NCHW -> NHWC + cast + spatial/channel zero pad.  All of this
    # fuses into ONE XLA op that writes the padded compute-dtype NHWC slab, so (vs. the
    # previous in-kernel concatenate padding) there are zero per-grid-step VMEM copies
    # and no extra HBM round trip — only the halo bytes are added to the input DMA.
    Hp, Wp = Hout + 2, Wout + 2
    x = jnp.transpose(x_nchw, (0, 2, 3, 1)).astype(compute_dtype)
    x = jnp.pad(x, ((0, 0), (padding, padding), (padding, padding), (0, Cin_k - Cin)))

    # ---- grid order (perf review, weight residency): keep the larger of
    # {weight slab, one padded image} VMEM-resident across the inner loop.
    w_bytes = 9 * Cin_k * cout_pad * itemsize
    x_img_bytes = Hp * Wp * Cin_k * itemsize
    weights_outer = w_bytes > x_img_bytes
    if weights_outer:
        grid = (num_ct, N, num_bands)
        n_ix = lambda a0, a1, b: a1
        c_ix = lambda a0, a1, b: a0
    else:
        grid = (N, num_ct, num_bands)
        n_ix = lambda a0, a1, b: a0
        c_ix = lambda a0, a1, b: a1

    x_spec = pl.BlockSpec((pl.Squeezed(), Hp, Wp, Cin_k),
                          lambda a0, a1, b: (n_ix(a0, a1, b), 0, 0, 0))
    if use_im2col:
        w_spec = pl.BlockSpec((9 * Cin_k, cout_tile),
                              lambda a0, a1, b: (0, c_ix(a0, a1, b)))
    else:
        w_spec = pl.BlockSpec((9, Cin_k, cout_tile),
                              lambda a0, a1, b: (0, 0, c_ix(a0, a1, b)))
    o_spec = pl.BlockSpec((pl.Squeezed(), band_h * Wout, cout_tile),
                          lambda a0, a1, b: (n_ix(a0, a1, b), b, c_ix(a0, a1, b)))

    kernel = _make_kernel(Wout, Cin_k, band_h, num_bands, cout_tile, use_im2col)

    flops = 2 * N * Hout * Wout * 9 * Cin_k * cout_pad
    bytes_accessed = int(x.size * itemsize + w_arg.size * itemsize
                         + N * Hout * Wout * cout_pad * itemsize)

    out_flat = pl.pallas_call(
        kernel,
        out_shape=jax.ShapeDtypeStruct((N, Hout * Wout, cout_pad), compute_dtype),
        grid_spec=pltpu.PrefetchScalarGridSpec(
            num_scalar_prefetch=0,
            grid=grid,
            in_specs=[x_spec, w_spec],
            out_specs=o_spec),
        compiler_params=pltpu.CompilerParams(
            dimension_semantics=("parallel", "parallel", "arbitrary"),
            vmem_limit_bytes=vmem_limit),
        cost_estimate=pl.CostEstimate(flops=flops, transcendentals=0,
                                      bytes_accessed=bytes_accessed),
    )(x, w_arg)

    # Drop the Cout padding, un-flatten the spatial axis, back to NCHW / input dtype.
    out = out_flat[:, :, :Cout].reshape(N, Hout, Wout, Cout)
    return jnp.transpose(out, (0, 3, 1, 2)).astype(x_nchw.dtype)


def _ref_conv(x_nchw, w_oihw, padding):
    return lax.conv_general_dilated(
        x_nchw, w_oihw, window_strides=(1, 1),
        padding=[(padding, padding), (padding, padding)],
        dimension_numbers=("NCHW", "OIHW", "NCHW"),
        precision=lax.Precision.HIGHEST)


if __name__ == "__main__":
    key = jax.random.PRNGKey(0)
    kx_, k3_, k1_, kx2_, k32_ = jax.random.split(key, 5)

    # Shapes consistent with the module: batch=2, in_planes=4, out_planes=8, 16x16.
    N, Cin, H, W, Cout = 2, 4, 16, 16, 8
    x = jax.random.normal(kx_, (N, Cin, H, W), dtype=jnp.float32)
    w3 = jax.random.normal(k3_, (Cout, Cin, 3, 3), dtype=jnp.float32) * 0.1
    w1 = jax.random.normal(k1_, (Cout, Cin, 1, 1), dtype=jnp.float32) * 0.1

    # bf16-rounded inputs for the bf16-compute references.
    xb = x.astype(jnp.bfloat16).astype(jnp.float32)
    w3b = w3.astype(jnp.bfloat16).astype(jnp.float32)

    # --- A: default forward (use_expansion=False), padding=0, bf16 per-tap path ------
    out_a = jax.block_until_ready(
        conv2d_modified(x, w3, w1, padding=0, use_expansion=False))
    ref_a = _ref_conv(xb, w3b, padding=0)
    assert out_a.shape == (N, Cout, H - 2, W - 2), out_a.shape
    assert jnp.allclose(out_a, ref_a, atol=2e-2, rtol=2e-2), \
        float(jnp.max(jnp.abs(out_a - ref_a)))

    # --- B: expansion forward (conv1x1(x) + conv3x3(x)), padding=1, f32 compute ------
    out_b = jax.block_until_ready(
        conv2d_modified(x, w3, w1, padding=1, use_expansion=True,
                        compute_dtype=jnp.float32))
    w_fused = w3 + jnp.pad(w1, ((0, 0), (0, 0), (1, 1), (1, 1)))
    ref_b = _ref_conv(x, w_fused, padding=1)
    assert out_b.shape == (N, Cout, H, W), out_b.shape
    assert jnp.allclose(out_b, ref_b, atol=2e-2, rtol=2e-2), \
        float(jnp.max(jnp.abs(out_b - ref_b)))

    # --- C: lane-aligned im2col path (Cin = 128), padding=1, bf16 --------------------
    N2, Cin2, H2, W2, Cout2 = 1, 128, 8, 8, 16
    x2 = jax.random.normal(kx2_, (N2, Cin2, H2, W2), dtype=jnp.float32)
    w32 = jax.random.normal(k32_, (Cout2, Cin2, 3, 3), dtype=jnp.float32) * 0.05
    out_c = jax.block_until_ready(
        conv2d_modified(x2, w32, None, padding=1, use_expansion=False))
    ref_c = _ref_conv(x2.astype(jnp.bfloat16).astype(jnp.float32),
                      w32.astype(jnp.bfloat16).astype(jnp.float32), padding=1)
    assert out_c.shape == (N2, Cout2, H2, W2), out_c.shape
    assert jnp.allclose(out_c, ref_c, atol=3e-2, rtol=3e-2), \
        float(jnp.max(jnp.abs(out_c - ref_c)))

    # --- D: multi-band row tiling exercised explicitly (band_h capped at 4) ----------
    out_d = jax.block_until_ready(
        conv2d_modified(x, w3, w1, padding=1, use_expansion=False, max_band_rows=4))
    ref_d = _ref_conv(xb, w3b, padding=1)
    assert out_d.shape == (N, Cout, H, W), out_d.shape
    assert jnp.allclose(out_d, ref_d, atol=2e-2, rtol=2e-2), \
        float(jnp.max(jnp.abs(out_d - ref_d)))

    print("KERNEL_OK")
</pallas_src>

<mosaic_0001>
module attributes {stable_mosaic.version = 11 : i64} {
  func.func @kernel(%arg0: i32, %arg1: i32, %arg2: i32, %arg3: memref<1x16x16x4xbf16, #tpu.memory_space<vmem>>, %arg4: memref<9x4x128xbf16, #tpu.memory_space<vmem>>, %arg5: memref<1x196x128xbf16, #tpu.memory_space<vmem>>) attributes {dimension_semantics = [#tpu.dimension_semantics<parallel>, #tpu.dimension_semantics<parallel>, #tpu.dimension_semantics<arbitrary>], iteration_bounds = array<i64: 1, 2, 1>, scalar_prefetch = 0 : i64, scratch_operands = 0 : i64, tpu.core_type = #tpu.core_type<tc>, window_params = [{transform_indices = @transform_0, window_bounds = array<i64: 1, 16, 16, 4>}, {transform_indices = @transform_1, window_bounds = array<i64: 9, 4, 128>}, {transform_indices = @transform_2, window_bounds = array<i64: 1, 196, 128>}]} {
    %c0 = arith.constant 0 : index
    %c0_0 = arith.constant 0 : index
    %c0_1 = arith.constant 0 : index
    %c0_2 = arith.constant 0 : index
    %0 = vector.load %arg3[%c0, %c0_0, %c0_1, %c0_2] : memref<1x16x16x4xbf16, #tpu.memory_space<vmem>>, vector<1x16x16x4xbf16>
    %1 = vector.shape_cast %0 : vector<1x16x16x4xbf16> to vector<16x16x4xbf16>
    %cst = arith.constant 0.000000e+00 : f32
    %2 = vector.broadcast %cst : f32 to vector<196x128xf32>
    %3 = vector.extract_strided_slice %1 {offsets = [0, 0, 0], sizes = [14, 14, 4], strides = [1, 1, 1]} : vector<16x16x4xbf16> to vector<14x14x4xbf16>
    %4 = vector.shape_cast %3 : vector<14x14x4xbf16> to vector<196x4xbf16>
    %c0_3 = arith.constant 0 : index
    %c0_4 = arith.constant 0 : index
    %c0_5 = arith.constant 0 : index
    %5 = vector.load %arg4[%c0_3, %c0_4, %c0_5] : memref<9x4x128xbf16, #tpu.memory_space<vmem>>, vector<1x4x128xbf16>
    %6 = vector.shape_cast %5 : vector<1x4x128xbf16> to vector<4x128xbf16>
    %cst_6 = arith.constant dense<0.000000e+00> : vector<196x128xf32>
    %7 = tpu.matmul %4, %6, %cst_6 {dimension_numbers = #tpu.dot_dimension_numbers<[1], [0], [0], [1], [0, 0, 1, 1], [], []>} : vector<196x4xbf16>, vector<4x128xbf16>, vector<196x128xf32> -> vector<196x128xf32>
    %8 = arith.addf %2, %7 : vector<196x128xf32>
    %9 = vector.extract_strided_slice %1 {offsets = [0, 1, 0], sizes = [14, 14, 4], strides = [1, 1, 1]} : vector<16x16x4xbf16> to vector<14x14x4xbf16>
    %10 = vector.shape_cast %9 : vector<14x14x4xbf16> to vector<196x4xbf16>
    %c1 = arith.constant 1 : index
    %c0_7 = arith.constant 0 : index
    %c0_8 = arith.constant 0 : index
    %11 = vector.load %arg4[%c1, %c0_7, %c0_8] : memref<9x4x128xbf16, #tpu.memory_space<vmem>>, vector<1x4x128xbf16>
    %12 = vector.shape_cast %11 : vector<1x4x128xbf16> to vector<4x128xbf16>
    %cst_9 = arith.constant dense<0.000000e+00> : vector<196x128xf32>
    %13 = tpu.matmul %10, %12, %cst_9 {dimension_numbers = #tpu.dot_dimension_numbers<[1], [0], [0], [1], [0, 0, 1, 1], [], []>} : vector<196x4xbf16>, vector<4x128xbf16>, vector<196x128xf32> -> vector<196x128xf32>
    %14 = arith.addf %8, %13 : vector<196x128xf32>
    %15 = vector.extract_strided_slice %1 {offsets = [0, 2, 0], sizes = [14, 14, 4], strides = [1, 1, 1]} : vector<16x16x4xbf16> to vector<14x14x4xbf16>
    %16 = vector.shape_cast %15 : vector<14x14x4xbf16> to vector<196x4xbf16>
    %c2 = arith.constant 2 : index
    %c0_10 = arith.constant 0 : index
    %c0_11 = arith.constant 0 : index
    %17 = vector.load %arg4[%c2, %c0_10, %c0_11] : memref<9x4x128xbf16, #tpu.memory_space<vmem>>, vector<1x4x128xbf16>
    %18 = vector.shape_cast %17 : vector<1x4x128xbf16> to vector<4x128xbf16>
    %cst_12 = arith.constant dense<0.000000e+00> : vector<196x128xf32>
    %19 = tpu.matmul %16, %18, %cst_12 {dimension_numbers = #tpu.dot_dimension_numbers<[1], [0], [0], [1], [0, 0, 1, 1], [], []>} : vector<196x4xbf16>, vector<4x128xbf16>, vector<196x128xf32> -> vector<196x128xf32>
    %20 = arith.addf %14, %19 : vector<196x128xf32>
    %21 = vector.extract_strided_slice %1 {offsets = [1, 0, 0], sizes = [14, 14, 4], strides = [1, 1, 1]} : vector<16x16x4xbf16> to vector<14x14x4xbf16>
    %22 = vector.shape_cast %21 : vector<14x14x4xbf16> to vector<196x4xbf16>
    %c3 = arith.constant 3 : index
    %c0_13 = arith.constant 0 : index
    %c0_14 = arith.constant 0 : index
    %23 = vector.load %arg4[%c3, %c0_13, %c0_14] : memref<9x4x128xbf16, #tpu.memory_space<vmem>>, vector<1x4x128xbf16>
    %24 = vector.shape_cast %23 : vector<1x4x128xbf16> to vector<4x128xbf16>
    %cst_15 = arith.constant dense<0.000000e+00> : vector<196x128xf32>
    %25 = tpu.matmul %22, %24, %cst_15 {dimension_numbers = #tpu.dot_dimension_numbers<[1], [0], [0], [1], [0, 0, 1, 1], [], []>} : vector<196x4xbf16>, vector<4x128xbf16>, vector<196x128xf32> -> vector<196x128xf32>
    %26 = arith.addf %20, %25 : vector<196x128xf32>
    %27 = vector.extract_strided_slice %1 {offsets = [1, 1, 0], sizes = [14, 14, 4], strides = [1, 1, 1]} : vector<16x16x4xbf16> to vector<14x14x4xbf16>
    %28 = vector.shape_cast %27 : vector<14x14x4xbf16> to vector<196x4xbf16>
    %c4 = arith.constant 4 : index
    %c0_16 = arith.constant 0 : index
    %c0_17 = arith.constant 0 : index
    %29 = vector.load %arg4[%c4, %c0_16, %c0_17] : memref<9x4x128xbf16, #tpu.memory_space<vmem>>, vector<1x4x128xbf16>
    %30 = vector.shape_cast %29 : vector<1x4x128xbf16> to vector<4x128xbf16>
    %cst_18 = arith.constant dense<0.000000e+00> : vector<196x128xf32>
    %31 = tpu.matmul %28, %30, %cst_18 {dimension_numbers = #tpu.dot_dimension_numbers<[1], [0], [0], [1], [0, 0, 1, 1], [], []>} : vector<196x4xbf16>, vector<4x128xbf16>, vector<196x128xf32> -> vector<196x128xf32>
    %32 = arith.addf %26, %31 : vector<196x128xf32>
    %33 = vector.extract_strided_slice %1 {offsets = [1, 2, 0], sizes = [14, 14, 4], strides = [1, 1, 1]} : vector<16x16x4xbf16> to vector<14x14x4xbf16>
    %34 = vector.shape_cast %33 : vector<14x14x4xbf16> to vector<196x4xbf16>
    %c5 = arith.constant 5 : index
    %c0_19 = arith.constant 0 : index
    %c0_20 = arith.constant 0 : index
    %35 = vector.load %arg4[%c5, %c0_19, %c0_20] : memref<9x4x128xbf16, #tpu.memory_space<vmem>>, vector<1x4x128xbf16>
    %36 = vector.shape_cast %35 : vector<1x4x128xbf16> to vector<4x128xbf16>
    %cst_21 = arith.constant dense<0.000000e+00> : vector<196x128xf32>
    %37 = tpu.matmul %34, %36, %cst_21 {dimension_numbers = #tpu.dot_dimension_numbers<[1], [0], [0], [1], [0, 0, 1, 1], [], []>} : vector<196x4xbf16>, vector<4x128xbf16>, vector<196x128xf32> -> vector<196x128xf32>
    %38 = arith.addf %32, %37 : vector<196x128xf32>
    %39 = vector.extract_strided_slice %1 {offsets = [2, 0, 0], sizes = [14, 14, 4], strides = [1, 1, 1]} : vector<16x16x4xbf16> to vector<14x14x4xbf16>
    %40 = vector.shape_cast %39 : vector<14x14x4xbf16> to vector<196x4xbf16>
    %c6 = arith.constant 6 : index
    %c0_22 = arith.constant 0 : index
    %c0_23 = arith.constant 0 : index
    %41 = vector.load %arg4[%c6, %c0_22, %c0_23] : memref<9x4x128xbf16, #tpu.memory_space<vmem>>, vector<1x4x128xbf16>
    %42 = vector.shape_cast %41 : vector<1x4x128xbf16> to vector<4x128xbf16>
    %cst_24 = arith.constant dense<0.000000e+00> : vector<196x128xf32>
    %43 = tpu.matmul %40, %42, %cst_24 {dimension_numbers = #tpu.dot_dimension_numbers<[1], [0], [0], [1], [0, 0, 1, 1], [], []>} : vector<196x4xbf16>, vector<4x128xbf16>, vector<196x128xf32> -> vector<196x128xf32>
    %44 = arith.addf %38, %43 : vector<196x128xf32>
    %45 = vector.extract_strided_slice %1 {offsets = [2, 1, 0], sizes = [14, 14, 4], strides = [1, 1, 1]} : vector<16x16x4xbf16> to vector<14x14x4xbf16>
    %46 = vector.shape_cast %45 : vector<14x14x4xbf16> to vector<196x4xbf16>
    %c7 = arith.constant 7 : index
    %c0_25 = arith.constant 0 : index
    %c0_26 = arith.constant 0 : index
    %47 = vector.load %arg4[%c7, %c0_25, %c0_26] : memref<9x4x128xbf16, #tpu.memory_space<vmem>>, vector<1x4x128xbf16>
    %48 = vector.shape_cast %47 : vector<1x4x128xbf16> to vector<4x128xbf16>
    %cst_27 = arith.constant dense<0.000000e+00> : vector<196x128xf32>
    %49 = tpu.matmul %46, %48, %cst_27 {dimension_numbers = #tpu.dot_dimension_numbers<[1], [0], [0], [1], [0, 0, 1, 1], [], []>} : vector<196x4xbf16>, vector<4x128xbf16>, vector<196x128xf32> -> vector<196x128xf32>
    %50 = arith.addf %44, %49 : vector<196x128xf32>
    %51 = vector.extract_strided_slice %1 {offsets = [2, 2, 0], sizes = [14, 14, 4], strides = [1, 1, 1]} : vector<16x16x4xbf16> to vector<14x14x4xbf16>
    %52 = vector.shape_cast %51 : vector<14x14x4xbf16> to vector<196x4xbf16>
    %c8 = arith.constant 8 : index
    %c0_28 = arith.constant 0 : index
    %c0_29 = arith.constant 0 : index
    %53 = vector.load %arg4[%c8, %c0_28, %c0_29] : memref<9x4x128xbf16, #tpu.memory_space<vmem>>, vector<1x4x128xbf16>
    %54 = vector.shape_cast %53 : vector<1x4x128xbf16> to vector<4x128xbf16>
    %cst_30 = arith.constant dense<0.000000e+00> : vector<196x128xf32>
    %55 = tpu.matmul %52, %54, %cst_30 {dimension_numbers = #tpu.dot_dimension_numbers<[1], [0], [0], [1], [0, 0, 1, 1], [], []>} : vector<196x4xbf16>, vector<4x128xbf16>, vector<196x128xf32> -> vector<196x128xf32>
    %56 = arith.addf %50, %55 : vector<196x128xf32>
    %57 = arith.truncf %56 : vector<196x128xf32> to vector<196x128xbf16>
    %c0_31 = arith.constant 0 : index
    %c0_32 = arith.constant 0 : index
    %c0_33 = arith.constant 0 : index
    %58 = vector.load %arg5[%c0_31, %c0_32, %c0_33] : memref<1x196x128xbf16, #tpu.memory_space<vmem>>, vector<1x196x128xbf16>
    %59 = vector.shape_cast %58 : vector<1x196x128xbf16> to vector<196x128xbf16>
    %60 = vector.shape_cast %57 : vector<196x128xbf16> to vector<1x196x128xbf16>
    tpu.vector_store %arg5[%c0_31, %c0_32, %c0_33], %60 {strides = array<i32>} : memref<1x196x128xbf16, #tpu.memory_space<vmem>>, vector<1x196x128xbf16>,
    return
  }
  func.func @transform_0(%arg0: i32, %arg1: i32, %arg2: i32) -> (i32, i32, i32, i32) {
    %c0_i32 = arith.constant 0 : i32
    %c0_i32_0 = arith.constant 0 : i32
    %c0_i32_1 = arith.constant 0 : i32
    %c0_i32_2 = arith.constant 0 : i32
    return %arg1, %c0_i32, %c0_i32_0, %c0_i32_1 : i32, i32, i32, i32
  }
  func.func @transform_1(%arg0: i32, %arg1: i32, %arg2: i32) -> (i32, i32, i32) {
    %c0_i32 = arith.constant 0 : i32
    %c0_i32_0 = arith.constant 0 : i32
    %c0_i32_1 = arith.constant 0 : i32
    return %c0_i32, %c0_i32_0, %arg0 : i32, i32, i32
  }
  func.func @transform_2(%arg0: i32, %arg1: i32, %arg2: i32) -> (i32, i32, i32) {
    %c0_i32 = arith.constant 0 : i32
    return %arg1, %arg2, %arg0 : i32, i32, i32
  }
}

</mosaic_0001>

<llo_original>
// kernel: conv2d_modified.1
$region0: #{conv2d_modified.1}
  #allocation0 [shape = 'u32[]', space=smem, size = 0x4, offset = 0x4, fixed_abs, tag = 'smem constant byte address 0x4 - core index']
  #allocation1 [shape = 'u32[144,128]{1,0:T(1,128)}', space=vmem, size = 0x12000, scoped, tag = 'internal scratch']
  %s0 = inlined_call_operand.hbm [shape: bf16[2,16,16,4], index: 0, kind: input, shape index: {}]
  %s1 = inlined_call_operand.hbm [shape: bf16[9,4,128], index: 1, kind: input, shape index: {}]
  %s2 = inlined_call_operand.hbm [shape: bf16[2,196,128], index: 2, kind: output, shape index: {}]
  %s3 = sld [smem:[#allocation0]]
  $region49: #{conv2d_modified.1} parent=0
    _
  %s5 = ssub.s32 1, %s3
  %s6 = scalar_select 0, %s5, %s3
  $region1: #{conv2d_modified.1} parent=0
    #allocation2 [shape = 'u8[131072]{0}', space=vmem, size = 0x20000, scoped, tag = 'input window, operand 0']
    #allocation3 [shape = 's32[2]{0}', space=sflag, size = 0x8, scoped, tag = 'scoped memory for conv2d_modified.1']
    #allocation4 [shape = 's32[2]{0}', space=sflag, size = 0x8, scoped, tag = 'scoped memory for conv2d_modified.1']
    #allocation5 [shape = 'u8[9216]{0}', space=vmem, size = 0x2400, scoped, tag = 'input window, operand 1, single buffered']
    #allocation6 [shape = 's32[1]{0}', space=sflag, size = 0x4, scoped, tag = 'scoped memory for conv2d_modified.1']
    #allocation7 [shape = 'u8[102400]{0}', space=vmem, size = 0x19000, scoped, tag = 'output window, operand 0']
    %7 = vsyncpa [#allocation3], 0
    %s8 = scalar_lea.sflag [#allocation3], 1
    %9 = vsyncpa %s8, 0
    %10 = vsyncpa [#allocation6], 0
    %11 = vsyncpa [#allocation4], 0
    %s12 = scalar_lea.sflag [#allocation4], 1
    %13 = vsyncpa %s12, 0
    loop: start=0, step=1, limit=4
    $region2: #{conv2d_modified.1} parent=1 // loop_pre_header
      _
    $region3: #{conv2d_modified.1} parent=1 // loop_header
      %s15 = sphi 0, %s19
      %p16 = scmp.ge.s32.totalorder %s15, 4
      %s22 = sphi 0, %s41
      %s23 = sphi 0, %s37
      %s24 = sphi 0, %s33
      %s25 = sphi 0, %s22
      %s26 = sphi 0, %s23
      %s27 = sphi 0, %s24
      %s28 = sphi 0, %s25
      %s29 = sphi 0, %s26
      %s30 = sphi 0, %s27
      %s44 = sphi 0, %s46
      %s47 = sphi 0, %s44
      %s48 = sphi 0, %s47
      %s64 = sphi 0, %s48
      %s70 = sphi 0, %s72
      %s73 = sphi 0, %s70
      %s74 = sphi 0, %s73
      %s90 = sphi 0, %s74
      %s100 = sphi 0, %s102
      %s103 = sphi 0, %s100
      %s104 = sphi 0, %s103
      %s120 = sphi 0, %s104
    $region4: #{conv2d_modified.1} parent=1 // loop_header_branch
      %18 = sbr.rel (%p16) target = $region8
    $region5: #{conv2d_modified.1} parent=1 // loop_body
      %s20 = ssub.s32 %s15, 1
      %s21 = ssub.s32 %s15, 2
      %s31 = sadd.s32 1, %s24
      %p32 = scmp.ge.s32.totalorder %s31, 1
      %s33 = scalar_select %p32, 0, %s31
      %s34 = sadd.s32 1, %s23
      %s35 = scalar_select %p32, %s34, %s23
      %p36 = scmp.ge.s32.totalorder %s35, 2
      %s37 = scalar_select %p36, 0, %s35
      %s38 = sadd.s32 1, %s22
      %s39 = scalar_select %p36, %s38, %s22
      %p40 = scmp.ge.s32.totalorder %s39, 1
      %s41 = scalar_select %p40, 0, %s39
      %s42 = ssub.s32 %s23, %s37
      %p43 = scmp.eq.s32.totalorder %s42, 0
      %s45 = sadd.s32 %s44, 1
      %s46 = scalar_select %p43, %s44, %s45
      %p49 = pneg %p43
      %p50 = scmp.eq.s32.totalorder %s15, 1
      %p51 = por %p49, %p50
      %p52 = scmp.ne.s32.totalorder %s44, %s47
      %p53 = scmp.eq.s32.totalorder %s15, 0
      %p54 = por %p52, %p53
      %p55 = scmp.ne.s32.totalorder %s44, %s47
      %p56 = scmp.eq.s32.totalorder %s20, 1
      %p57 = por %p55, %p56
      %p58 = scmp.ne.s32.totalorder %s47, %s48
      %p59 = scmp.eq.s32.totalorder %s20, 0
      %p60 = por %p58, %p59
      %p61 = scmp.ne.s32.totalorder %s47, %s48
      %p62 = scmp.eq.s32.totalorder %s21, 1
      %p63 = por %p61, %p62
      %p65 = scmp.ne.s32.totalorder %s48, %s64
      %p66 = scmp.eq.s32.totalorder %s21, 0
      %p67 = por %p65, %p66
      %s68 = ssub.s32 %s22, %s41
      %p69 = scmp.eq.s32.totalorder %s68, 0
      %s71 = sadd.s32 %s70, 1
      %s72 = scalar_select %p69, %s70, %s71
      %p75 = pneg %p69
      %p76 = scmp.eq.s32.totalorder %s15, 1
      %p77 = por %p75, %p76
      %p78 = scmp.ne.s32.totalorder %s70, %s73
      %p79 = scmp.eq.s32.totalorder %s15, 0
      %p80 = por %p78, %p79
      %p81 = scmp.ne.s32.totalorder %s70, %s73
      %p82 = scmp.eq.s32.totalorder %s20, 1
      %p83 = por %p81, %p82
      %p84 = scmp.ne.s32.totalorder %s73, %s74
      %p85 = scmp.eq.s32.totalorder %s20, 0
      %p86 = por %p84, %p85
      %p87 = scmp.ne.s32.totalorder %s73, %s74
      %p88 = scmp.eq.s32.totalorder %s21, 1
      %p89 = por %p87, %p88
      %p91 = scmp.ne.s32.totalorder %s74, %s90
      %p92 = scmp.eq.s32.totalorder %s21, 0
      %p93 = por %p91, %p92
      %s94 = ssub.s32 %s23, %s37
      %s95 = ssub.s32 %s24, %s33
      %s96 = sor.u32 %s94, %s95
      %s97 = ssub.s32 %s22, %s41
      %s98 = sor.u32 %s96, %s97
      %p99 = scmp.eq.s32.totalorder %s98, 0
      %s101 = sadd.s32 %s100, 1
      %s102 = scalar_select %p99, %s100, %s101
      %p105 = pneg %p99
      %p106 = scmp.eq.s32.totalorder %s15, 1
      %p107 = por %p105, %p106
      %p108 = scmp.ne.s32.totalorder %s100, %s103
      %p109 = scmp.eq.s32.totalorder %s15, 0
      %p110 = por %p108, %p109
      %p111 = scmp.ne.s32.totalorder %s100, %s103
      %p112 = scmp.eq.s32.totalorder %s20, 1
      %p113 = por %p111, %p112
      %p114 = scmp.ne.s32.totalorder %s103, %s104
      %p115 = scmp.eq.s32.totalorder %s20, 0
      %p116 = por %p114, %p115
      %p117 = scmp.ne.s32.totalorder %s103, %s104
      %p118 = scmp.eq.s32.totalorder %s21, 1
      %p119 = por %p117, %p118
      %p121 = scmp.ne.s32.totalorder %s104, %s120
      %p122 = scmp.eq.s32.totalorder %s21, 0
      %p123 = por %p121, %p122
      %p124 = scmp.le.s32.totalorder 1, %s15
      %p125 = scmp.lt.s32.totalorder %s15, 3
      %p126 = pnand %p124, %p125
      %p127 = pneg %p126
      // Predicated region
      $region9: #{conv2d_modified.1} parent=5 // pred_check
        _
      $region10: #{conv2d_modified.1} parent=5 // pred_check_branch
        %129 = sbr.rel (%p126) target = $region12
      $region11: #{conv2d_modified.1} parent=5 // pred_region
        %s130 = ssub.s32 %s15, 1
        // Predicated region
        $region13: #{conv2d_modified.1} parent=11 // pred_check
          %p131 = pneg %p86
        $region14: #{conv2d_modified.1} parent=11 // pred_check_branch
          %133 = sbr.rel (%p131) target = $region16
        $region15: #{conv2d_modified.1} parent=11 // pred_region
          %s135 = ssub.s32 288, 288
          %136 = vsyncadd [#allocation6], %s135
          %s137 = smul.addr %s25, 32
          %s138 = scalar_lea.hbm %s1, %s137
          %s139 = sshll.u32 [#allocation5], 4
          %s140 = int_to_ptr.vmem [resolvable:$true] %s139
          %145 = dma.hbm_to_vmem [thread:$0]  %s138, 288, %s140, [#allocation6], 32, 32, 2
        $region16: #{conv2d_modified.1} parent=11 // pred_fallthru
          _
      $region12: #{conv2d_modified.1} parent=5 // pred_fallthru
        _
      %p146 = scmp.lt.s32.totalorder %s15, 2
      // Predicated region
      $region17: #{conv2d_modified.1} parent=5 // pred_check
        %p147 = pneg %p146
      $region18: #{conv2d_modified.1} parent=5 // pred_check_branch
        %149 = sbr.rel (%p147) target = $region20
      $region19: #{conv2d_modified.1} parent=5 // pred_region
        // Predicated region
        $region21: #{conv2d_modified.1} parent=19 // pred_check
          %p150 = pneg %p54
        $region22: #{conv2d_modified.1} parent=19 // pred_check_branch
          %152 = sbr.rel (%p150) target = $region24
        $region23: #{conv2d_modified.1} parent=19 // pred_region
          %s153 = sand.u32 %s44, 1
          %s154 = scalar_lea.sflag [#allocation3], %s153
          %s155 = sand.u32 %s44, 1
          %s156 = smul.addr %s155, 128
          %s157 = scalar_lea.vmem [#allocation2], %s156
          %s159 = ssub.s32 2048, 2048
          %160 = vsyncadd %s154, %s159
          %s161 = smul.addr %s23, 32
          %s162 = smul.addr %s161, 64
          %s163 = scalar_lea.hbm %s0, %s162
          %s164 = sshll.u32 %s157, 4
          %s165 = int_to_ptr.vmem [resolvable:$true] %s164
          %170 = dma.hbm_to_vmem [thread:$0]  %s163, 2048, %s165, %s154, 64, 64, 4
        $region24: #{conv2d_modified.1} parent=19 // pred_fallthru
          _
      $region20: #{conv2d_modified.1} parent=5 // pred_fallthru
        _
      %p171 = scmp.le.s32.totalorder 1, %s15
      %p172 = scmp.lt.s32.totalorder %s15, 3
      %p173 = pnand %p171, %p172
      %p174 = pneg %p173
      // Predicated region
      $region25: #{conv2d_modified.1} parent=5 // pred_check
        _
      $region26: #{conv2d_modified.1} parent=5 // pred_check_branch
        %176 = sbr.rel (%p173) target = $region28
      $region27: #{conv2d_modified.1} parent=5 // pred_region
        %s177 = ssub.s32 %s15, 1
        %s178 = sand.u32 %s47, 1
        %s179 = scalar_lea.sflag [#allocation3], %s178
        %s180 = sand.u32 %s47, 1
        %s181 = smul.addr %s180, 128
        %s182 = scalar_lea.vmem [#allocation2], %s181
        // Predicated region
        $region29: #{conv2d_modified.1} parent=27 // pred_check
          %p183 = pneg %p60
        $region30: #{conv2d_modified.1} parent=27 // pred_check_branch
          %185 = sbr.rel (%p183) target = $region32
        $region31: #{conv2d_modified.1} parent=27 // pred_region
          %186 = dma.done %s179, 2048
        $region32: #{conv2d_modified.1} parent=27 // pred_fallthru
          _
        // Predicated region
        $region33: #{conv2d_modified.1} parent=27 // pred_check
          %p187 = pneg %p86
        $region34: #{conv2d_modified.1} parent=27 // pred_check_branch
          %189 = sbr.rel (%p187) target = $region36
        $region35: #{conv2d_modified.1} parent=27 // pred_region
          %190 = dma.done [#allocation6], 288
        $region36: #{conv2d_modified.1} parent=27 // pred_fallthru
          _
        %s191 = sand.u32 %s47, 1
        %s192 = scalar_lea.sflag [#allocation3], %s191
        %s193 = sand.u32 %s47, 1
        %s194 = smul.addr %s193, 128
        %s195 = scalar_lea.vmem [#allocation2], %s194
        %p196 = pneg %p60
        %p197 = pneg %p57
        %p198 = pneg %p86
        %p199 = pneg %p83
        %p200 = pneg %p116
        %p201 = pneg %p113
        %s202 = sand.u32 %s103, 1
        %s203 = scalar_lea.sflag [#allocation4], %s202
        %s204 = sand.u32 %s103, 1
        %s205 = smul.addr %s204, 100
        %s206 = scalar_lea.vmem [#allocation7], %s205
        %s207 = smul.u32 25, %s27
        %v209 = vld [vmem:[%s182] sm:$0xf]
        %v210 = vld [vmem:[%s182 + $0x4] sm:$0xf]
        %v211 = vld [vmem:[%s182 + $0x8] sm:$0xf]
        %v212 = vld [vmem:[%s182 + $0xc] sm:$0xf]
        %v213 = vld [vmem:[%s182 + $0x10] sm:$0xf]
        %v214 = vld [vmem:[%s182 + $0x14] sm:$0xf]
        %v215 = vld [vmem:[%s182 + $0x18] sm:$0xf]
        %v216 = vld [vmem:[%s182 + $0x1c] sm:$0xf]
        %v217 = vld [vmem:[%s182 + $0x20] sm:$0xf]
        %v218 = vld [vmem:[%s182 + $0x24] sm:$0xf]
        %v219 = vld [vmem:[%s182 + $0x28] sm:$0xf]
        %v220 = vld [vmem:[%s182 + $0x2c] sm:$0xf]
        %v221 = vld [vmem:[%s182 + $0x30] sm:$0xf]
        %v222 = vld [vmem:[%s182 + $0x34] sm:$0xf]
        %v223 = vld [vmem:[%s182 + $0x38] sm:$0xf]
        %v224 = vld [vmem:[%s182 + $0x3c] sm:$0xf]
        %v225 = vld [vmem:[%s182 + $0x40] sm:$0xf]
        %v226 = vld [vmem:[%s182 + $0x44] sm:$0xf]
        %v227 = vld [vmem:[%s182 + $0x48] sm:$0xf]
        %v228 = vld [vmem:[%s182 + $0x4c] sm:$0xf]
        %v229 = vld [vmem:[%s182 + $0x50] sm:$0xf]
        %v230 = vld [vmem:[%s182 + $0x54] sm:$0xf]
        %v231 = vld [vmem:[%s182 + $0x58] sm:$0xf]
        %v232 = vld [vmem:[%s182 + $0x5c] sm:$0xf]
        %v233 = vld [vmem:[%s182 + $0x60] sm:$0xf]
        %v234 = vld [vmem:[%s182 + $0x64] sm:$0xf]
        %v235 = vld [vmem:[%s182 + $0x68] sm:$0xf]
        %v236 = vld [vmem:[%s182 + $0x6c] sm:$0xf]
        %v237 = vld [vmem:[%s182 + $0x70] sm:$0xf]
        %v238 = vld [vmem:[%s182 + $0x74] sm:$0xf]
        %v239 = vld [vmem:[%s182 + $0x78] sm:$0xf]
        %v240 = vld [vmem:[%s182 + $0x7c] sm:$0xf]
        %v270 = vunpack.c.l.s4 1966171168
        %v271 = vunpack.c.0.s8 %v270
        %v272 = vlaneseq
        %v273 = vshrl.u32 %v272, 7
        %v274 = vsub.s32 %v271, %v273
        %v275 = vrot.slane %v209, %v274
        %v276 = vcombine.high %v275, %v275
        %v278 = vunpack.c.l.s4 1966171168
        %v279 = vunpack.c.0.s8 %v278
        %v280 = vlaneseq
        %v281 = vshrl.u32 %v280, 7
        %v282 = vsub.s32 %v279, %v281
        %v283 = vrot.slane %v275, %v282
        %v285 = vunpack.c.l.s4 1966171168
        %v286 = vunpack.c.0.s8 %v285
        %v287 = vlaneseq
        %v288 = vshrl.u32 %v287, 7
        %v289 = vsub.s32 %v286, %v288
        %v290 = vrot.slane %v276, %v289
        %v291 = vcombine.high %v283, %v283
        %v292 = vcombine.high %v290, %v290
        %v294 = vunpack.c.l.s4 1966171168
        %v295 = vunpack.c.0.s8 %v294
        %v296 = vlaneseq
        %v297 = vshrl.u32 %v296, 7
        %v298 = vsub.s32 %v295, %v297
        %v299 = vrot.slane %v210, %v298
        %v300 = vcombine.high %v299, %v299
        %v302 = vunpack.c.l.s4 1966171168
        %v303 = vunpack.c.0.s8 %v302
        %v304 = vlaneseq
        %v305 = vshrl.u32 %v304, 7
        %v306 = vsub.s32 %v303, %v305
        %v307 = vrot.slane %v299, %v306
        %v309 = vunpack.c.l.s4 1966171168
        %v310 = vunpack.c.0.s8 %v309
        %v311 = vlaneseq
        %v312 = vshrl.u32 %v311, 7
        %v313 = vsub.s32 %v310, %v312
        %v314 = vrot.slane %v300, %v313
        %v315 = vcombine.high %v307, %v307
        %v317 = vunpack.c.l.s4 1966171168
        %v318 = vunpack.c.0.s8 %v317
        %v319 = vlaneseq
        %v320 = vshrl.u32 %v319, 7
        %v321 = vsub.s32 %v318, %v320
        %v322 = vrot.slane %v211, %v321
        %v323 = vcombine.high %v322, %v322
        %v325 = vunpack.c.l.s4 1966171168
        %v326 = vunpack.c.0.s8 %v325
        %v327 = vlaneseq
        %v328 = vshrl.u32 %v327, 7
        %v329 = vsub.s32 %v326, %v328
        %v330 = vrot.slane %v322, %v329
        %v332 = vunpack.c.l.s4 1966171168
        %v333 = vunpack.c.0.s8 %v332
        %v334 = vlaneseq
        %v335 = vshrl.u32 %v334, 7
        %v336 = vsub.s32 %v333, %v335
        %v337 = vrot.slane %v323, %v336
        %v338 = vcombine.high %v330, %v330
        %v339 = vcombine.high %v337, %v337
        %v341 = vunpack.c.l.s4 1966171168
        %v342 = vunpack.c.0.s8 %v341
        %v343 = vlaneseq
        %v344 = vshrl.u32 %v343, 7
        %v345 = vsub.s32 %v342, %v344
        %v346 = vrot.slane %v212, %v345
        %v347 = vcombine.high %v346, %v346
        %v349 = vunpack.c.l.s4 1966171168
        %v350 = vunpack.c.0.s8 %v349
        %v351 = vlaneseq
        %v352 = vshrl.u32 %v351, 7
        %v353 = vsub.s32 %v350, %v352
        %v354 = vrot.slane %v346, %v353
        %v356 = vunpack.c.l.s4 1966171168
        %v357 = vunpack.c.0.s8 %v356
        %v358 = vlaneseq
        %v359 = vshrl.u32 %v358, 7
        %v360 = vsub.s32 %v357, %v359
        %v361 = vrot.slane %v347, %v360
        %v362 = vcombine.high %v354, %v354
        %v364 = vunpack.c.l.s4 1966171168
        %v365 = vunpack.c.0.s8 %v364
        %v366 = vlaneseq
        %v367 = vshrl.u32 %v366, 7
        %v368 = vsub.s32 %v365, %v367
        %v369 = vrot.slane %v213, %v368
        %v370 = vcombine.high %v369, %v369
        %v372 = vunpack.c.l.s4 1966171168
        %v373 = vunpack.c.0.s8 %v372
        %v374 = vlaneseq
        %v375 = vshrl.u32 %v374, 7
        %v376 = vsub.s32 %v373, %v375
        %v377 = vrot.slane %v369, %v376
        %v379 = vunpack.c.l.s4 1966171168
        %v380 = vunpack.c.0.s8 %v379
        %v381 = vlaneseq
        %v382 = vshrl.u32 %v381, 7
        %v383 = vsub.s32 %v380, %v382
        %v384 = vrot.slane %v370, %v383
        %v385 = vcombine.high %v377, %v377
        %v386 = vcombine.high %v384, %v384
        %v388 = vunpack.c.l.s4 1966171168
        %v389 = vunpack.c.0.s8 %v388
        %v390 = vlaneseq
        %v391 = vshrl.u32 %v390, 7
        %v392 = vsub.s32 %v389, %v391
        %v393 = vrot.slane %v214, %v392
        %v394 = vcombine.high %v393, %v393
        %v396 = vunpack.c.l.s4 1966171168
        %v397 = vunpack.c.0.s8 %v396
        %v398 = vlaneseq
        %v399 = vshrl.u32 %v398, 7
        %v400 = vsub.s32 %v397, %v399
        %v401 = vrot.slane %v393, %v400
        %v403 = vunpack.c.l.s4 1966171168
        %v404 = vunpack.c.0.s8 %v403
        %v405 = vlaneseq
        %v406 = vshrl.u32 %v405, 7
        %v407 = vsub.s32 %v404, %v406
        %v408 = vrot.slane %v394, %v407
        %v409 = vcombine.high %v401, %v401
        %v411 = vunpack.c.l.s4 1966171168
        %v412 = vunpack.c.0.s8 %v411
        %v413 = vlaneseq
        %v414 = vshrl.u32 %v413, 7
        %v415 = vsub.s32 %v412, %v414
        %v416 = vrot.slane %v215, %v415
        %v417 = vcombine.high %v416, %v416
        %v419 = vunpack.c.l.s4 1966171168
        %v420 = vunpack.c.0.s8 %v419
        %v421 = vlaneseq
        %v422 = vshrl.u32 %v421, 7
        %v423 = vsub.s32 %v420, %v422
        %v424 = vrot.slane %v416, %v423
        %v426 = vunpack.c.l.s4 1966171168
        %v427 = vunpack.c.0.s8 %v426
        %v428 = vlaneseq
        %v429 = vshrl.u32 %v428, 7
        %v430 = vsub.s32 %v427, %v429
        %v431 = vrot.slane %v417, %v430
        %v432 = vcombine.high %v424, %v424
        %v433 = vcombine.high %v431, %v431
        %v435 = vunpack.c.l.s4 1966171168
        %v436 = vunpack.c.0.s8 %v435
        %v437 = vlaneseq
        %v438 = vshrl.u32 %v437, 7
        %v439 = vsub.s32 %v436, %v438
        %v440 = vrot.slane %v216, %v439
        %v441 = vcombine.high %v440, %v440
        %v443 = vunpack.c.l.s4 1966171168
        %v444 = vunpack.c.0.s8 %v443
        %v445 = vlaneseq
        %v446 = vshrl.u32 %v445, 7
        %v447 = vsub.s32 %v444, %v446
        %v448 = vrot.slane %v440, %v447
        %v450 = vunpack.c.l.s4 1966171168
        %v451 = vunpack.c.0.s8 %v450
        %v452 = vlaneseq
        %v453 = vshrl.u32 %v452, 7
        %v454 = vsub.s32 %v451, %v453
        %v455 = vrot.slane %v441, %v454
        %v456 = vcombine.high %v448, %v448
        %v458 = vunpack.c.l.s4 1966171168
        %v459 = vunpack.c.0.s8 %v458
        %v460 = vlaneseq
        %v461 = vshrl.u32 %v460, 7
        %v462 = vsub.s32 %v459, %v461
        %v463 = vrot.slane %v217, %v462
        %v464 = vcombine.high %v463, %v463
        %v466 = vunpack.c.l.s4 1966171168
        %v467 = vunpack.c.0.s8 %v466
        %v468 = vlaneseq
        %v469 = vshrl.u32 %v468, 7
        %v470 = vsub.s32 %v467, %v469
        %v471 = vrot.slane %v463, %v470
        %v473 = vunpack.c.l.s4 1966171168
        %v474 = vunpack.c.0.s8 %v473
        %v475 = vlaneseq
        %v476 = vshrl.u32 %v475, 7
        %v477 = vsub.s32 %v474, %v476
        %v478 = vrot.slane %v464, %v477
        %v479 = vcombine.high %v471, %v471
        %v480 = vcombine.high %v478, %v478
        %v482 = vunpack.c.l.s4 1966171168
        %v483 = vunpack.c.0.s8 %v482
        %v484 = vlaneseq
        %v485 = vshrl.u32 %v484, 7
        %v486 = vsub.s32 %v483, %v485
        %v487 = vrot.slane %v218, %v486
        %v488 = vcombine.high %v487, %v487
        %v490 = vunpack.c.l.s4 1966171168
        %v491 = vunpack.c.0.s8 %v490
        %v492 = vlaneseq
        %v493 = vshrl.u32 %v492, 7
        %v494 = vsub.s32 %v491, %v493
        %v495 = vrot.slane %v487, %v494
        %v497 = vunpack.c.l.s4 1966171168
        %v498 = vunpack.c.0.s8 %v497
        %v499 = vlaneseq
        %v500 = vshrl.u32 %v499, 7
        %v501 = vsub.s32 %v498, %v500
        %v502 = vrot.slane %v488, %v501
        %v503 = vcombine.high %v495, %v495
        %v505 = vunpack.c.l.s4 1966171168
        %v506 = vunpack.c.0.s8 %v505
        %v507 = vlaneseq
        %v508 = vshrl.u32 %v507, 7
        %v509 = vsub.s32 %v506, %v508
        %v510 = vrot.slane %v219, %v509
        %v511 = vcombine.high %v510, %v510
        %v513 = vunpack.c.l.s4 1966171168
        %v514 = vunpack.c.0.s8 %v513
        %v515 = vlaneseq
        %v516 = vshrl.u32 %v515, 7
        %v517 = vsub.s32 %v514, %v516
        %v518 = vrot.slane %v510, %v517
        %v520 = vunpack.c.l.s4 1966171168
        %v521 = vunpack.c.0.s8 %v520
        %v522 = vlaneseq
        %v523 = vshrl.u32 %v522, 7
        %v524 = vsub.s32 %v521, %v523
        %v525 = vrot.slane %v511, %v524
        %v526 = vcombine.high %v518, %v518
        %v527 = vcombine.high %v525, %v525
        %v529 = vunpack.c.l.s4 1966171168
        %v530 = vunpack.c.0.s8 %v529
        %v531 = vlaneseq
        %v532 = vshrl.u32 %v531, 7
        %v533 = vsub.s32 %v530, %v532
        %v534 = vrot.slane %v220, %v533
        %v535 = vcombine.high %v534, %v534
        %v537 = vunpack.c.l.s4 1966171168
        %v538 = vunpack.c.0.s8 %v537
        %v539 = vlaneseq
        %v540 = vshrl.u32 %v539, 7
        %v541 = vsub.s32 %v538, %v540
        %v542 = vrot.slane %v534, %v541
        %v544 = vunpack.c.l.s4 1966171168
        %v545 = vunpack.c.0.s8 %v544
        %v546 = vlaneseq
        %v547 = vshrl.u32 %v546, 7
        %v548 = vsub.s32 %v545, %v547
        %v549 = vrot.slane %v535, %v548
        %v550 = vcombine.high %v542, %v542
        %v552 = vunpack.c.l.s4 1966171168
        %v553 = vunpack.c.0.s8 %v552
        %v554 = vlaneseq
        %v555 = vshrl.u32 %v554, 7
        %v556 = vsub.s32 %v553, %v555
        %v557 = vrot.slane %v221, %v556
        %v558 = vcombine.high %v557, %v557
        %v560 = vunpack.c.l.s4 1966171168
        %v561 = vunpack.c.0.s8 %v560
        %v562 = vlaneseq
        %v563 = vshrl.u32 %v562, 7
        %v564 = vsub.s32 %v561, %v563
        %v565 = vrot.slane %v557, %v564
        %v567 = vunpack.c.l.s4 1966171168
        %v568 = vunpack.c.0.s8 %v567
        %v569 = vlaneseq
        %v570 = vshrl.u32 %v569, 7
        %v571 = vsub.s32 %v568, %v570
        %v572 = vrot.slane %v558, %v571
        %v573 = vcombine.high %v565, %v565
        %v574 = vcombine.high %v572, %v572
        %v576 = vunpack.c.l.s4 1966171168
        %v577 = vunpack.c.0.s8 %v576
        %v578 = vlaneseq
        %v579 = vshrl.u32 %v578, 7
        %v580 = vsub.s32 %v577, %v579
        %v581 = vrot.slane %v222, %v580
        %v582 = vcombine.high %v581, %v581
        %v584 = vunpack.c.l.s4 1966171168
        %v585 = vunpack.c.0.s8 %v584
        %v586 = vlaneseq
        %v587 = vshrl.u32 %v586, 7
        %v588 = vsub.s32 %v585, %v587
        %v589 = vrot.slane %v581, %v588
        %v591 = vunpack.c.l.s4 1966171168
        %v592 = vunpack.c.0.s8 %v591
        %v593 = vlaneseq
        %v594 = vshrl.u32 %v593, 7
        %v595 = vsub.s32 %v592, %v594
        %v596 = vrot.slane %v582, %v595
        %v597 = vcombine.high %v589, %v589
        %v599 = vunpack.c.l.s4 1966171168
        %v600 = vunpack.c.0.s8 %v599
        %v601 = vlaneseq
        %v602 = vshrl.u32 %v601, 7
        %v603 = vsub.s32 %v600, %v602
        %v604 = vrot.slane %v223, %v603
        %v605 = vcombine.high %v604, %v604
        %v607 = vunpack.c.l.s4 1966171168
        %v608 = vunpack.c.0.s8 %v607
        %v609 = vlaneseq
        %v610 = vshrl.u32 %v609, 7
        %v611 = vsub.s32 %v608, %v610
        %v612 = vrot.slane %v604, %v611
        %v614 = vunpack.c.l.s4 1966171168
        %v615 = vunpack.c.0.s8 %v614
        %v616 = vlaneseq
        %v617 = vshrl.u32 %v616, 7
        %v618 = vsub.s32 %v615, %v617
        %v619 = vrot.slane %v605, %v618
        %v620 = vcombine.high %v612, %v612
        %v621 = vcombine.high %v619, %v619
        %v623 = vunpack.c.l.s4 1966171168
        %v624 = vunpack.c.0.s8 %v623
        %v625 = vlaneseq
        %v626 = vshrl.u32 %v625, 7
        %v627 = vsub.s32 %v624, %v626
        %v628 = vrot.slane %v224, %v627
        %v629 = vcombine.high %v628, %v628
        %v631 = vunpack.c.l.s4 1966171168
        %v632 = vunpack.c.0.s8 %v631
        %v633 = vlaneseq
        %v634 = vshrl.u32 %v633, 7
        %v635 = vsub.s32 %v632, %v634
        %v636 = vrot.slane %v628, %v635
        %v638 = vunpack.c.l.s4 1966171168
        %v639 = vunpack.c.0.s8 %v638
        %v640 = vlaneseq
        %v641 = vshrl.u32 %v640, 7
        %v642 = vsub.s32 %v639, %v641
        %v643 = vrot.slane %v629, %v642
        %v644 = vcombine.high %v636, %v636
        %v646 = vunpack.c.l.s4 1966171168
        %v647 = vunpack.c.0.s8 %v646
        %v648 = vlaneseq
        %v649 = vshrl.u32 %v648, 7
        %v650 = vsub.s32 %v647, %v649
        %v651 = vrot.slane %v225, %v650
        %v652 = vcombine.high %v651, %v651
        %v654 = vunpack.c.l.s4 1966171168
        %v655 = vunpack.c.0.s8 %v654
        %v656 = vlaneseq
        %v657 = vshrl.u32 %v656, 7
        %v658 = vsub.s32 %v655, %v657
        %v659 = vrot.slane %v651, %v658
        %v661 = vunpack.c.l.s4 1966171168
        %v662 = vunpack.c.0.s8 %v661
        %v663 = vlaneseq
        %v664 = vshrl.u32 %v663, 7
        %v665 = vsub.s32 %v662, %v664
        %v666 = vrot.slane %v652, %v665
        %v667 = vcombine.high %v659, %v659
        %v668 = vcombine.high %v666, %v666
        %v670 = vunpack.c.l.s4 1966171168
        %v671 = vunpack.c.0.s8 %v670
        %v672 = vlaneseq
        %v673 = vshrl.u32 %v672, 7
        %v674 = vsub.s32 %v671, %v673
        %v675 = vrot.slane %v226, %v674
        %v676 = vcombine.high %v675, %v675
        %v678 = vunpack.c.l.s4 1966171168
        %v679 = vunpack.c.0.s8 %v678
        %v680 = vlaneseq
        %v681 = vshrl.u32 %v680, 7
        %v682 = vsub.s32 %v679, %v681
        %v683 = vrot.slane %v675, %v682
        %v685 = vunpack.c.l.s4 1966171168
        %v686 = vunpack.c.0.s8 %v685
        %v687 = vlaneseq
        %v688 = vshrl.u32 %v687, 7
        %v689 = vsub.s32 %v686, %v688
        %v690 = vrot.slane %v676, %v689
        %v691 = vcombine.high %v683, %v683
        %v693 = vunpack.c.l.s4 1966171168
        %v694 = vunpack.c.0.s8 %v693
        %v695 = vlaneseq
        %v696 = vshrl.u32 %v695, 7
        %v697 = vsub.s32 %v694, %v696
        %v698 = vrot.slane %v227, %v697
        %v699 = vcombine.high %v698, %v698
        %v701 = vunpack.c.l.s4 1966171168
        %v702 = vunpack.c.0.s8 %v701
        %v703 = vlaneseq
        %v704 = vshrl.u32 %v703, 7
        %v705 = vsub.s32 %v702, %v704
        %v706 = vrot.slane %v698, %v705
        %v708 = vunpack.c.l.s4 1966171168
        %v709 = vunpack.c.0.s8 %v708
        %v710 = vlaneseq
        %v711 = vshrl.u32 %v710, 7
        %v712 = vsub.s32 %v709, %v711
        %v713 = vrot.slane %v699, %v712
        %v714 = vcombine.high %v706, %v706
        %v715 = vcombine.high %v713, %v713
        %v717 = vunpack.c.l.s4 1966171168
        %v718 = vunpack.c.0.s8 %v717
        %v719 = vlaneseq
        %v720 = vshrl.u32 %v719, 7
        %v721 = vsub.s32 %v718, %v720
        %v722 = vrot.slane %v228, %v721
        %v723 = vcombine.high %v722, %v722
        %v725 = vunpack.c.l.s4 1966171168
        %v726 = vunpack.c.0.s8 %v725
        %v727 = vlaneseq
        %v728 = vshrl.u32 %v727, 7
        %v729 = vsub.s32 %v726, %v728
        %v730 = vrot.slane %v722, %v729
        %v732 = vunpack.c.l.s4 1966171168
        %v733 = vunpack.c.0.s8 %v732
        %v734 = vlaneseq
        %v735 = vshrl.u32 %v734, 7
        %v736 = vsub.s32 %v733, %v735
        %v737 = vrot.slane %v723, %v736
        %v738 = vcombine.high %v730, %v730
        %v740 = vunpack.c.l.s4 1966171168
        %v741 = vunpack.c.0.s8 %v740
        %v742 = vlaneseq
        %v743 = vshrl.u32 %v742, 7
        %v744 = vsub.s32 %v741, %v743
        %v745 = vrot.slane %v229, %v744
        %v746 = vcombine.high %v745, %v745
        %v748 = vunpack.c.l.s4 1966171168
        %v749 = vunpack.c.0.s8 %v748
        %v750 = vlaneseq
        %v751 = vshrl.u32 %v750, 7
        %v752 = vsub.s32 %v749, %v751
        %v753 = vrot.slane %v745, %v752
        %v755 = vunpack.c.l.s4 1966171168
        %v756 = vunpack.c.0.s8 %v755
        %v757 = vlaneseq
        %v758 = vshrl.u32 %v757, 7
        %v759 = vsub.s32 %v756, %v758
        %v760 = vrot.slane %v746, %v759
        %v761 = vcombine.high %v753, %v753
        %v762 = vcombine.high %v760, %v760
        %v764 = vunpack.c.l.s4 1966171168
        %v765 = vunpack.c.0.s8 %v764
        %v766 = vlaneseq
        %v767 = vshrl.u32 %v766, 7
        %v768 = vsub.s32 %v765, %v767
        %v769 = vrot.slane %v230, %v768
        %v770 = vcombine.high %v769, %v769
        %v772 = vunpack.c.l.s4 1966171168
        %v773 = vunpack.c.0.s8 %v772
        %v774 = vlaneseq
        %v775 = vshrl.u32 %v774, 7
        %v776 = vsub.s32 %v773, %v775
        %v777 = vrot.slane %v769, %v776
        %v779 = vunpack.c.l.s4 1966171168
        %v780 = vunpack.c.0.s8 %v779
        %v781 = vlaneseq
        %v782 = vshrl.u32 %v781, 7
        %v783 = vsub.s32 %v780, %v782
        %v784 = vrot.slane %v770, %v783
        %v785 = vcombine.high %v777, %v777
        %v787 = vunpack.c.l.s4 1966171168
        %v788 = vunpack.c.0.s8 %v787
        %v789 = vlaneseq
        %v790 = vshrl.u32 %v789, 7
        %v791 = vsub.s32 %v788, %v790
        %v792 = vrot.slane %v231, %v791
        %v793 = vcombine.high %v792, %v792
        %v795 = vunpack.c.l.s4 1966171168
        %v796 = vunpack.c.0.s8 %v795
        %v797 = vlaneseq
        %v798 = vshrl.u32 %v797, 7
        %v799 = vsub.s32 %v796, %v798
        %v800 = vrot.slane %v792, %v799
        %v802 = vunpack.c.l.s4 1966171168
        %v803 = vunpack.c.0.s8 %v802
        %v804 = vlaneseq
        %v805 = vshrl.u32 %v804, 7
        %v806 = vsub.s32 %v803, %v805
        %v807 = vrot.slane %v793, %v806
        %v808 = vcombine.high %v800, %v800
        %v809 = vcombine.high %v807, %v807
        %v811 = vunpack.c.l.s4 1966171168
        %v812 = vunpack.c.0.s8 %v811
        %v813 = vlaneseq
        %v814 = vshrl.u32 %v813, 7
        %v815 = vsub.s32 %v812, %v814
        %v816 = vrot.slane %v232, %v815
        %v817 = vcombine.high %v816, %v816
        %v819 = vunpack.c.l.s4 1966171168
        %v820 = vunpack.c.0.s8 %v819
        %v821 = vlaneseq
        %v822 = vshrl.u32 %v821, 7
        %v823 = vsub.s32 %v820, %v822
        %v824 = vrot.slane %v816, %v823
        %v826 = vunpack.c.l.s4 1966171168
        %v827 = vunpack.c.0.s8 %v826
        %v828 = vlaneseq
        %v829 = vshrl.u32 %v828, 7
        %v830 = vsub.s32 %v827, %v829
        %v831 = vrot.slane %v817, %v830
        %v832 = vcombine.high %v824, %v824
        %v834 = vunpack.c.l.s4 1966171168
        %v835 = vunpack.c.0.s8 %v834
        %v836 = vlaneseq
        %v837 = vshrl.u32 %v836, 7
        %v838 = vsub.s32 %v835, %v837
        %v839 = vrot.slane %v233, %v838
        %v840 = vcombine.high %v839, %v839
        %v842 = vunpack.c.l.s4 1966171168
        %v843 = vunpack.c.0.s8 %v842
        %v844 = vlaneseq
        %v845 = vshrl.u32 %v844, 7
        %v846 = vsub.s32 %v843, %v845
        %v847 = vrot.slane %v839, %v846
        %v849 = vunpack.c.l.s4 1966171168
        %v850 = vunpack.c.0.s8 %v849
        %v851 = vlaneseq
        %v852 = vshrl.u32 %v851, 7
        %v853 = vsub.s32 %v850, %v852
        %v854 = vrot.slane %v840, %v853
        %v855 = vcombine.high %v847, %v847
        %v856 = vcombine.high %v854, %v854
        %v858 = vunpack.c.l.s4 1966171168
        %v859 = vunpack.c.0.s8 %v858
        %v860 = vlaneseq
        %v861 = vshrl.u32 %v860, 7
        %v862 = vsub.s32 %v859, %v861
        %v863 = vrot.slane %v234, %v862
        %v864 = vcombine.high %v863, %v863
        %v866 = vunpack.c.l.s4 1966171168
        %v867 = vunpack.c.0.s8 %v866
        %v868 = vlaneseq
        %v869 = vshrl.u32 %v868, 7
        %v870 = vsub.s32 %v867, %v869
        %v871 = vrot.slane %v863, %v870
        %v873 = vunpack.c.l.s4 1966171168
        %v874 = vunpack.c.0.s8 %v873
        %v875 = vlaneseq
        %v876 = vshrl.u32 %v875, 7
        %v877 = vsub.s32 %v874, %v876
        %v878 = vrot.slane %v864, %v877
        %v879 = vcombine.high %v871, %v871
        %v881 = vunpack.c.l.s4 1966171168
        %v882 = vunpack.c.0.s8 %v881
        %v883 = vlaneseq
        %v884 = vshrl.u32 %v883, 7
        %v885 = vsub.s32 %v882, %v884
        %v886 = vrot.slane %v235, %v885
        %v887 = vcombine.high %v886, %v886
        %v889 = vunpack.c.l.s4 1966171168
        %v890 = vunpack.c.0.s8 %v889
        %v891 = vlaneseq
        %v892 = vshrl.u32 %v891, 7
        %v893 = vsub.s32 %v890, %v892
        %v894 = vrot.slane %v886, %v893
        %v896 = vunpack.c.l.s4 1966171168
        %v897 = vunpack.c.0.s8 %v896
        %v898 = vlaneseq
        %v899 = vshrl.u32 %v898, 7
        %v900 = vsub.s32 %v897, %v899
        %v901 = vrot.slane %v887, %v900
        %v902 = vcombine.high %v894, %v894
        %v903 = vcombine.high %v901, %v901
        %v905 = vunpack.c.l.s4 1966171168
        %v906 = vunpack.c.0.s8 %v905
        %v907 = vlaneseq
        %v908 = vshrl.u32 %v907, 7
        %v909 = vsub.s32 %v906, %v908
        %v910 = vrot.slane %v236, %v909
        %v911 = vcombine.high %v910, %v910
        %v913 = vunpack.c.l.s4 1966171168
        %v914 = vunpack.c.0.s8 %v913
        %v915 = vlaneseq
        %v916 = vshrl.u32 %v915, 7
        %v917 = vsub.s32 %v914, %v916
        %v918 = vrot.slane %v910, %v917
        %v920 = vunpack.c.l.s4 1966171168
        %v921 = vunpack.c.0.s8 %v920
        %v922 = vlaneseq
        %v923 = vshrl.u32 %v922, 7
        %v924 = vsub.s32 %v921, %v923
        %v925 = vrot.slane %v911, %v924
        %v926 = vcombine.high %v918, %v918
        %v927 = vld [vmem:[#allocation5] sm:$0x3]
        %v928 = vcombine.high %v314, %v314
        %v929 = vcombine.high %v361, %v361
        %v930 = vcombine.high %v408, %v408
        %v931 = vcombine.high %v455, %v455
        %v932 = vcombine.high %v502, %v502
        %v933 = vcombine.high %v549, %v549
        %v934 = vcombine.high %v596, %v596
        %v935 = vcombine.high %v643, %v643
        %v936 = vcombine.high %v690, %v690
        %v937 = vcombine.high %v737, %v737
        %v938 = vcombine.high %v784, %v784
        %v939 = vcombine.high %v831, %v831
        %v940 = vcombine.high %v878, %v878
        %v941 = vcombine.high %v925, %v925
        %vm942 = vsmask.f32 256
        %vm943 = vsmask.f32 1284
        %vm944 = vmor %vm942, %vm943
        %vm945 = vsmask.f32 2312
        %vm946 = vmor %vm944, %vm945
        %vm947 = vsmask.f32 3340
        %vm948 = vmor %vm946, %vm947
        %vm949 = vsmask.f32 4368
        %vm950 = vmor %vm948, %vm949
        %vm951 = vsmask.f32 5396
        %vm952 = vmor %vm950, %vm951
        %vm953 = vsmask.f32 6424
        %vm954 = vmor %vm952, %vm953
        %vm955 = vsmask.f32 7452
        %vm956 = vmor %vm954, %vm955
        %v958 = vshrl.u32 %v283, 16
        %v960 = vrot.slane %v958, 7
        %v961 = vrot.slane %v960, 1
        %v963 = vshll.u32 %v290, 16
        %v965 = vsel %vm956, %v961, %v963
        %v966 = vshrl.u32 %v290, 16
        %v968 = vrot.slane %v966, 7
        %v969 = vrot.slane %v968, 1
        %v971 = vshll.u32 %v291, 16
        %v973 = vsel %vm956, %v969, %v971
        %v974 = vshrl.u32 %v291, 16
        %v976 = vrot.slane %v974, 7
        %v977 = vrot.slane %v976, 1
        %v979 = vshll.u32 %v292, 16
        %v981 = vsel %vm956, %v977, %v979
        %v982 = vshrl.u32 %v292, 16
        %v984 = vrot.slane %v982, 7
        %v985 = vrot.slane %v984, 1
        %v987 = vshll.u32 %v307, 16
        %v989 = vsel %vm956, %v985, %v987
        %v990 = vshrl.u32 %v307, 16
        %v992 = vrot.slane %v990, 7
        %v993 = vrot.slane %v992, 1
        %v995 = vshll.u32 %v314, 16
        %v997 = vsel %vm956, %v993, %v995
        %v998 = vshrl.u32 %v314, 16
        %v1000 = vrot.slane %v998, 7
        %v1001 = vrot.slane %v1000, 1
        %v1003 = vshll.u32 %v315, 16
        %v1005 = vsel %vm956, %v1001, %v1003
        %v1006 = vshrl.u32 %v315, 16
        %v1008 = vrot.slane %v1006, 7
        %v1009 = vrot.slane %v1008, 1
        %v1011 = vshll.u32 %v928, 16
        %v1013 = vsel %vm956, %v1009, %v1011
        %v1015 = vshrl.u32 %v330, 16
        %v1017 = vrot.slane %v1015, 7
        %v1018 = vrot.slane %v1017, 1
        %v1020 = vshll.u32 %v337, 16
        %v1022 = vsel %vm956, %v1018, %v1020
        %v1023 = vshrl.u32 %v337, 16
        %v1025 = vrot.slane %v1023, 7
        %v1026 = vrot.slane %v1025, 1
        %v1028 = vshll.u32 %v338, 16
        %v1030 = vsel %vm956, %v1026, %v1028
        %v1031 = vshrl.u32 %v338, 16
        %v1033 = vrot.slane %v1031, 7
        %v1034 = vrot.slane %v1033, 1
        %v1036 = vshll.u32 %v339, 16
        %v1038 = vsel %vm956, %v1034, %v1036
        %v1039 = vshrl.u32 %v339, 16
        %v1041 = vrot.slane %v1039, 7
        %v1042 = vrot.slane %v1041, 1
        %v1044 = vshll.u32 %v354, 16
        %v1046 = vsel %vm956, %v1042, %v1044
        %v1047 = vshrl.u32 %v354, 16
        %v1049 = vrot.slane %v1047, 7
        %v1050 = vrot.slane %v1049, 1
        %v1052 = vshll.u32 %v361, 16
        %v1054 = vsel %vm956, %v1050, %v1052
        %v1055 = vshrl.u32 %v361, 16
        %v1057 = vrot.slane %v1055, 7
        %v1058 = vrot.slane %v1057, 1
        %v1060 = vshll.u32 %v362, 16
        %v1062 = vsel %vm956, %v1058, %v1060
        %v1063 = vshrl.u32 %v362, 16
        %v1065 = vrot.slane %v1063, 7
        %v1066 = vrot.slane %v1065, 1
        %v1068 = vshll.u32 %v929, 16
        %v1070 = vsel %vm956, %v1066, %v1068
        %v1072 = vshrl.u32 %v377, 16
        %v1074 = vrot.slane %v1072, 7
        %v1075 = vrot.slane %v1074, 1
        %v1077 = vshll.u32 %v384, 16
        %v1079 = vsel %vm956, %v1075, %v1077
        %v1080 = vshrl.u32 %v384, 16
        %v1082 = vrot.slane %v1080, 7
        %v1083 = vrot.slane %v1082, 1
        %v1085 = vshll.u32 %v385, 16
        %v1087 = vsel %vm956, %v1083, %v1085
        %v1088 = vshrl.u32 %v385, 16
        %v1090 = vrot.slane %v1088, 7
        %v1091 = vrot.slane %v1090, 1
        %v1093 = vshll.u32 %v386, 16
        %v1095 = vsel %vm956, %v1091, %v1093
        %v1096 = vshrl.u32 %v386, 16
        %v1098 = vrot.slane %v1096, 7
        %v1099 = vrot.slane %v1098, 1
        %v1101 = vshll.u32 %v401, 16
        %v1103 = vsel %vm956, %v1099, %v1101
        %v1104 = vshrl.u32 %v401, 16
        %v1106 = vrot.slane %v1104, 7
        %v1107 = vrot.slane %v1106, 1
        %v1109 = vshll.u32 %v408, 16
        %v1111 = vsel %vm956, %v1107, %v1109
        %v1112 = vshrl.u32 %v408, 16
        %v1114 = vrot.slane %v1112, 7
        %v1115 = vrot.slane %v1114, 1
        %v1117 = vshll.u32 %v409, 16
        %v1119 = vsel %vm956, %v1115, %v1117
        %v1120 = vshrl.u32 %v409, 16
        %v1122 = vrot.slane %v1120, 7
        %v1123 = vrot.slane %v1122, 1
        %v1125 = vshll.u32 %v930, 16
        %v1127 = vsel %vm956, %v1123, %v1125
        %v1129 = vshrl.u32 %v424, 16
        %v1131 = vrot.slane %v1129, 7
        %v1132 = vrot.slane %v1131, 1
        %v1134 = vshll.u32 %v431, 16
        %v1136 = vsel %vm956, %v1132, %v1134
        %v1137 = vshrl.u32 %v431, 16
        %v1139 = vrot.slane %v1137, 7
        %v1140 = vrot.slane %v1139, 1
        %v1142 = vshll.u32 %v432, 16
        %v1144 = vsel %vm956, %v1140, %v1142
        %v1145 = vshrl.u32 %v432, 16
        %v1147 = vrot.slane %v1145, 7
        %v1148 = vrot.slane %v1147, 1
        %v1150 = vshll.u32 %v433, 16
        %v1152 = vsel %vm956, %v1148, %v1150
        %v1153 = vshrl.u32 %v433, 16
        %v1155 = vrot.slane %v1153, 7
        %v1156 = vrot.slane %v1155, 1
        %v1158 = vshll.u32 %v448, 16
        %v1160 = vsel %vm956, %v1156, %v1158
        %v1161 = vshrl.u32 %v448, 16
        %v1163 = vrot.slane %v1161, 7
        %v1164 = vrot.slane %v1163, 1
        %v1166 = vshll.u32 %v455, 16
        %v1168 = vsel %vm956, %v1164, %v1166
        %v1169 = vshrl.u32 %v455, 16
        %v1171 = vrot.slane %v1169, 7
        %v1172 = vrot.slane %v1171, 1
        %v1174 = vshll.u32 %v456, 16
        %v1176 = vsel %vm956, %v1172, %v1174
        %v1177 = vshrl.u32 %v456, 16
        %v1179 = vrot.slane %v1177, 7
        %v1180 = vrot.slane %v1179, 1
        %v1182 = vshll.u32 %v931, 16
        %v1184 = vsel %vm956, %v1180, %v1182
        %v1186 = vshrl.u32 %v471, 16
        %v1188 = vrot.slane %v1186, 7
        %v1189 = vrot.slane %v1188, 1
        %v1191 = vshll.u32 %v478, 16
        %v1193 = vsel %vm956, %v1189, %v1191
        %v1194 = vshrl.u32 %v478, 16
        %v1196 = vrot.slane %v1194, 7
        %v1197 = vrot.slane %v1196, 1
        %v1199 = vshll.u32 %v479, 16
        %v1201 = vsel %vm956, %v1197, %v1199
        %v1202 = vshrl.u32 %v479, 16
        %v1204 = vrot.slane %v1202, 7
        %v1205 = vrot.slane %v1204, 1
        %v1207 = vshll.u32 %v480, 16
        %v1209 = vsel %vm956, %v1205, %v1207
        %v1210 = vshrl.u32 %v480, 16
        %v1212 = vrot.slane %v1210, 7
        %v1213 = vrot.slane %v1212, 1
        %v1215 = vshll.u32 %v495, 16
        %v1217 = vsel %vm956, %v1213, %v1215
        %v1218 = vshrl.u32 %v495, 16
        %v1220 = vrot.slane %v1218, 7
        %v1221 = vrot.slane %v1220, 1
        %v1223 = vshll.u32 %v502, 16
        %v1225 = vsel %vm956, %v1221, %v1223
        %v1226 = vshrl.u32 %v502, 16
        %v1228 = vrot.slane %v1226, 7
        %v1229 = vrot.slane %v1228, 1
        %v1231 = vshll.u32 %v503, 16
        %v1233 = vsel %vm956, %v1229, %v1231
        %v1234 = vshrl.u32 %v503, 16
        %v1236 = vrot.slane %v1234, 7
        %v1237 = vrot.slane %v1236, 1
        %v1239 = vshll.u32 %v932, 16
        %v1241 = vsel %vm956, %v1237, %v1239
        %v1243 = vshrl.u32 %v518, 16
        %v1245 = vrot.slane %v1243, 7
        %v1246 = vrot.slane %v1245, 1
        %v1248 = vshll.u32 %v525, 16
        %v1250 = vsel %vm956, %v1246, %v1248
        %v1251 = vshrl.u32 %v525, 16
        %v1253 = vrot.slane %v1251, 7
        %v1254 = vrot.slane %v1253, 1
        %v1256 = vshll.u32 %v526, 16
        %v1258 = vsel %vm956, %v1254, %v1256
        %v1259 = vshrl.u32 %v526, 16
        %v1261 = vrot.slane %v1259, 7
        %v1262 = vrot.slane %v1261, 1
        %v1264 = vshll.u32 %v527, 16
        %v1266 = vsel %vm956, %v1262, %v1264
        %v1267 = vshrl.u32 %v527, 16
        %v1269 = vrot.slane %v1267, 7
        %v1270 = vrot.slane %v1269, 1
        %v1272 = vshll.u32 %v542, 16
        %v1274 = vsel %vm956, %v1270, %v1272
        %v1275 = vshrl.u32 %v542, 16
        %v1277 = vrot.slane %v1275, 7
        %v1278 = vrot.slane %v1277, 1
        %v1280 = vshll.u32 %v549, 16
        %v1282 = vsel %vm956, %v1278, %v1280
        %v1283 = vshrl.u32 %v549, 16
        %v1285 = vrot.slane %v1283, 7
        %v1286 = vrot.slane %v1285, 1
        %v1288 = vshll.u32 %v550, 16
        %v1290 = vsel %vm956, %v1286, %v1288
        %v1291 = vshrl.u32 %v550, 16
        %v1293 = vrot.slane %v1291, 7
        %v1294 = vrot.slane %v1293, 1
        %v1296 = vshll.u32 %v933, 16
        %v1298 = vsel %vm956, %v1294, %v1296
        %v1300 = vshrl.u32 %v565, 16
        %v1302 = vrot.slane %v1300, 7
        %v1303 = vrot.slane %v1302, 1
        %v1305 = vshll.u32 %v572, 16
        %v1307 = vsel %vm956, %v1303, %v1305
        %v1308 = vshrl.u32 %v572, 16
        %v1310 = vrot.slane %v1308, 7
        %v1311 = vrot.slane %v1310, 1
        %v1313 = vshll.u32 %v573, 16
        %v1315 = vsel %vm956, %v1311, %v1313
        %v1316 = vshrl.u32 %v573, 16
        %v1318 = vrot.slane %v1316, 7
        %v1319 = vrot.slane %v1318, 1
        %v1321 = vshll.u32 %v574, 16
        %v1323 = vsel %vm956, %v1319, %v1321
        %v1324 = vshrl.u32 %v574, 16
        %v1326 = vrot.slane %v1324, 7
        %v1327 = vrot.slane %v1326, 1
        %v1329 = vshll.u32 %v589, 16
        %v1331 = vsel %vm956, %v1327, %v1329
        %v1332 = vshrl.u32 %v589, 16
        %v1334 = vrot.slane %v1332, 7
        %v1335 = vrot.slane %v1334, 1
        %v1337 = vshll.u32 %v596, 16
        %v1339 = vsel %vm956, %v1335, %v1337
        %v1340 = vshrl.u32 %v596, 16
        %v1342 = vrot.slane %v1340, 7
        %v1343 = vrot.slane %v1342, 1
        %v1345 = vshll.u32 %v597, 16
        %v1347 = vsel %vm956, %v1343, %v1345
        %v1348 = vshrl.u32 %v597, 16
        %v1350 = vrot.slane %v1348, 7
        %v1351 = vrot.slane %v1350, 1
        %v1353 = vshll.u32 %v934, 16
        %v1355 = vsel %vm956, %v1351, %v1353
        %v1357 = vshrl.u32 %v612, 16
        %v1359 = vrot.slane %v1357, 7
        %v1360 = vrot.slane %v1359, 1
        %v1362 = vshll.u32 %v619, 16
        %v1364 = vsel %vm956, %v1360, %v1362
        %v1365 = vshrl.u32 %v619, 16
        %v1367 = vrot.slane %v1365, 7
        %v1368 = vrot.slane %v1367, 1
        %v1370 = vshll.u32 %v620, 16
        %v1372 = vsel %vm956, %v1368, %v1370
        %v1373 = vshrl.u32 %v620, 16
        %v1375 = vrot.slane %v1373, 7
        %v1376 = vrot.slane %v1375, 1
        %v1378 = vshll.u32 %v621, 16
        %v1380 = vsel %vm956, %v1376, %v1378
        %v1381 = vshrl.u32 %v621, 16
        %v1383 = vrot.slane %v1381, 7
        %v1384 = vrot.slane %v1383, 1
        %v1386 = vshll.u32 %v636, 16
        %v1388 = vsel %vm956, %v1384, %v1386
        %v1389 = vshrl.u32 %v636, 16
        %v1391 = vrot.slane %v1389, 7
        %v1392 = vrot.slane %v1391, 1
        %v1394 = vshll.u32 %v643, 16
        %v1396 = vsel %vm956, %v1392, %v1394
        %v1397 = vshrl.u32 %v643, 16
        %v1399 = vrot.slane %v1397, 7
        %v1400 = vrot.slane %v1399, 1
        %v1402 = vshll.u32 %v644, 16
        %v1404 = vsel %vm956, %v1400, %v1402
        %v1405 = vshrl.u32 %v644, 16
        %v1407 = vrot.slane %v1405, 7
        %v1408 = vrot.slane %v1407, 1
        %v1410 = vshll.u32 %v935, 16
        %v1412 = vsel %vm956, %v1408, %v1410
        %v1414 = vshrl.u32 %v659, 16
        %v1416 = vrot.slane %v1414, 7
        %v1417 = vrot.slane %v1416, 1
        %v1419 = vshll.u32 %v666, 16
        %v1421 = vsel %vm956, %v1417, %v1419
        %v1422 = vshrl.u32 %v666, 16
        %v1424 = vrot.slane %v1422, 7
        %v1425 = vrot.slane %v1424, 1
        %v1427 = vshll.u32 %v667, 16
        %v1429 = vsel %vm956, %v1425, %v1427
        %v1430 = vshrl.u32 %v667, 16
        %v1432 = vrot.slane %v1430, 7
        %v1433 = vrot.slane %v1432, 1
        %v1435 = vshll.u32 %v668, 16
        %v1437 = vsel %vm956, %v1433, %v1435
        %v1438 = vshrl.u32 %v668, 16
        %v1440 = vrot.slane %v1438, 7
        %v1441 = vrot.slane %v1440, 1
        %v1443 = vshll.u32 %v683, 16
        %v1445 = vsel %vm956, %v1441, %v1443
        %v1446 = vshrl.u32 %v683, 16
        %v1448 = vrot.slane %v1446, 7
        %v1449 = vrot.slane %v1448, 1
        %v1451 = vshll.u32 %v690, 16
        %v1453 = vsel %vm956, %v1449, %v1451
        %v1454 = vshrl.u32 %v690, 16
        %v1456 = vrot.slane %v1454, 7
        %v1457 = vrot.slane %v1456, 1
        %v1459 = vshll.u32 %v691, 16
        %v1461 = vsel %vm956, %v1457, %v1459
        %v1462 = vshrl.u32 %v691, 16
        %v1464 = vrot.slane %v1462, 7
        %v1465 = vrot.slane %v1464, 1
        %v1467 = vshll.u32 %v936, 16
        %v1469 = vsel %vm956, %v1465, %v1467
        %v1471 = vshrl.u32 %v706, 16
        %v1473 = vrot.slane %v1471, 7
        %v1474 = vrot.slane %v1473, 1
        %v1476 = vshll.u32 %v713, 16
        %v1478 = vsel %vm956, %v1474, %v1476
        %v1479 = vshrl.u32 %v713, 16
        %v1481 = vrot.slane %v1479, 7
        %v1482 = vrot.slane %v1481, 1
        %v1484 = vshll.u32 %v714, 16
        %v1486 = vsel %vm956, %v1482, %v1484
        %v1487 = vshrl.u32 %v714, 16
        %v1489 = vrot.slane %v1487, 7
        %v1490 = vrot.slane %v1489, 1
        %v1492 = vshll.u32 %v715, 16
        %v1494 = vsel %vm956, %v1490, %v1492
        %v1495 = vshrl.u32 %v715, 16
        %v1497 = vrot.slane %v1495, 7
        %v1498 = vrot.slane %v1497, 1
        %v1500 = vshll.u32 %v730, 16
        %v1502 = vsel %vm956, %v1498, %v1500
        %v1503 = vshrl.u32 %v730, 16
        %v1505 = vrot.slane %v1503, 7
        %v1506 = vrot.slane %v1505, 1
        %v1508 = vshll.u32 %v737, 16
        %v1510 = vsel %vm956, %v1506, %v1508
        %v1511 = vshrl.u32 %v737, 16
        %v1513 = vrot.slane %v1511, 7
        %v1514 = vrot.slane %v1513, 1
        %v1516 = vshll.u32 %v738, 16
        %v1518 = vsel %vm956, %v1514, %v1516
        %v1519 = vshrl.u32 %v738, 16
        %v1521 = vrot.slane %v1519, 7
        %v1522 = vrot.slane %v1521, 1
        %v1524 = vshll.u32 %v937, 16
        %v1526 = vsel %vm956, %v1522, %v1524
        %v1528 = vshrl.u32 %v753, 16
        %v1530 = vrot.slane %v1528, 7
        %v1531 = vrot.slane %v1530, 1
        %v1533 = vshll.u32 %v760, 16
        %v1535 = vsel %vm956, %v1531, %v1533
        %v1536 = vshrl.u32 %v760, 16
        %v1538 = vrot.slane %v1536, 7
        %v1539 = vrot.slane %v1538, 1
        %v1541 = vshll.u32 %v761, 16
        %v1543 = vsel %vm956, %v1539, %v1541
        %v1544 = vshrl.u32 %v761, 16
        %v1546 = vrot.slane %v1544, 7
        %v1547 = vrot.slane %v1546, 1
        %v1549 = vshll.u32 %v762, 16
        %v1551 = vsel %vm956, %v1547, %v1549
        %v1552 = vshrl.u32 %v762, 16
        %v1554 = vrot.slane %v1552, 7
        %v1555 = vrot.slane %v1554, 1
        %v1557 = vshll.u32 %v777, 16
        %v1559 = vsel %vm956, %v1555, %v1557
        %v1560 = vshrl.u32 %v777, 16
        %v1562 = vrot.slane %v1560, 7
        %v1563 = vrot.slane %v1562, 1
        %v1565 = vshll.u32 %v784, 16
        %v1567 = vsel %vm956, %v1563, %v1565
        %v1568 = vshrl.u32 %v784, 16
        %v1570 = vrot.slane %v1568, 7
        %v1571 = vrot.slane %v1570, 1
        %v1573 = vshll.u32 %v785, 16
        %v1575 = vsel %vm956, %v1571, %v1573
        %v1576 = vshrl.u32 %v785, 16
        %v1578 = vrot.slane %v1576, 7
        %v1579 = vrot.slane %v1578, 1
        %v1581 = vshll.u32 %v938, 16
        %v1583 = vsel %vm956, %v1579, %v1581
        %v1585 = vshrl.u32 %v800, 16
        %v1587 = vrot.slane %v1585, 7
        %v1588 = vrot.slane %v1587, 1
        %v1590 = vshll.u32 %v807, 16
        %v1592 = vsel %vm956, %v1588, %v1590
        %v1593 = vshrl.u32 %v807, 16
        %v1595 = vrot.slane %v1593, 7
        %v1596 = vrot.slane %v1595, 1
        %v1598 = vshll.u32 %v808, 16
        %v1600 = vsel %vm956, %v1596, %v1598
        %v1601 = vshrl.u32 %v808, 16
        %v1603 = vrot.slane %v1601, 7
        %v1604 = vrot.slane %v1603, 1
        %v1606 = vshll.u32 %v809, 16
        %v1608 = vsel %vm956, %v1604, %v1606
        %v1609 = vshrl.u32 %v809, 16
        %v1611 = vrot.slane %v1609, 7
        %v1612 = vrot.slane %v1611, 1
        %v1614 = vshll.u32 %v824, 16
        %v1616 = vsel %vm956, %v1612, %v1614
        %v1617 = vshrl.u32 %v824, 16
        %v1619 = vrot.slane %v1617, 7
        %v1620 = vrot.slane %v1619, 1
        %v1622 = vshll.u32 %v831, 16
        %v1624 = vsel %vm956, %v1620, %v1622
        %v1625 = vshrl.u32 %v831, 16
        %v1627 = vrot.slane %v1625, 7
        %v1628 = vrot.slane %v1627, 1
        %v1630 = vshll.u32 %v832, 16
        %v1632 = vsel %vm956, %v1628, %v1630
        %v1633 = vshrl.u32 %v832, 16
        %v1635 = vrot.slane %v1633, 7
        %v1636 = vrot.slane %v1635, 1
        %v1638 = vshll.u32 %v939, 16
        %v1640 = vsel %vm956, %v1636, %v1638
        %v1642 = vshrl.u32 %v847, 16
        %v1644 = vrot.slane %v1642, 7
        %v1645 = vrot.slane %v1644, 1
        %v1647 = vshll.u32 %v854, 16
        %v1649 = vsel %vm956, %v1645, %v1647
        %v1650 = vshrl.u32 %v854, 16
        %v1652 = vrot.slane %v1650, 7
        %v1653 = vrot.slane %v1652, 1
        %v1655 = vshll.u32 %v855, 16
        %v1657 = vsel %vm956, %v1653, %v1655
        %v1658 = vshrl.u32 %v855, 16
        %v1660 = vrot.slane %v1658, 7
        %v1661 = vrot.slane %v1660, 1
        %v1663 = vshll.u32 %v856, 16
        %v1665 = vsel %vm956, %v1661, %v1663
        %v1666 = vshrl.u32 %v856, 16
        %v1668 = vrot.slane %v1666, 7
        %v1669 = vrot.slane %v1668, 1
        %v1671 = vshll.u32 %v871, 16
        %v1673 = vsel %vm956, %v1669, %v1671
        %v1674 = vshrl.u32 %v871, 16
        %v1676 = vrot.slane %v1674, 7
        %v1677 = vrot.slane %v1676, 1
        %v1679 = vshll.u32 %v878, 16
        %v1681 = vsel %vm956, %v1677, %v1679
        %v1682 = vshrl.u32 %v878, 16
        %v1684 = vrot.slane %v1682, 7
        %v1685 = vrot.slane %v1684, 1
        %v1687 = vshll.u32 %v879, 16
        %v1689 = vsel %vm956, %v1685, %v1687
        %v1690 = vshrl.u32 %v879, 16
        %v1692 = vrot.slane %v1690, 7
        %v1693 = vrot.slane %v1692, 1
        %v1695 = vshll.u32 %v940, 16
        %v1697 = vsel %vm956, %v1693, %v1695
        %v1699 = vshrl.u32 %v894, 16
        %v1701 = vrot.slane %v1699, 7
        %v1702 = vrot.slane %v1701, 1
        %v1704 = vshll.u32 %v901, 16
        %v1706 = vsel %vm956, %v1702, %v1704
        %v1707 = vshrl.u32 %v901, 16
        %v1709 = vrot.slane %v1707, 7
        %v1710 = vrot.slane %v1709, 1
        %v1712 = vshll.u32 %v902, 16
        %v1714 = vsel %vm956, %v1710, %v1712
        %v1715 = vshrl.u32 %v902, 16
        %v1717 = vrot.slane %v1715, 7
        %v1718 = vrot.slane %v1717, 1
        %v1720 = vshll.u32 %v903, 16
        %v1722 = vsel %vm956, %v1718, %v1720
        %v1723 = vshrl.u32 %v903, 16
        %v1725 = vrot.slane %v1723, 7
        %v1726 = vrot.slane %v1725, 1
        %v1728 = vshll.u32 %v918, 16
        %v1730 = vsel %vm956, %v1726, %v1728
        %v1731 = vshrl.u32 %v918, 16
        %v1733 = vrot.slane %v1731, 7
        %v1734 = vrot.slane %v1733, 1
        %v1736 = vshll.u32 %v925, 16
        %v1738 = vsel %vm956, %v1734, %v1736
        %v1739 = vshrl.u32 %v925, 16
        %v1741 = vrot.slane %v1739, 7
        %v1742 = vrot.slane %v1741, 1
        %v1744 = vshll.u32 %v926, 16
        %v1746 = vsel %vm956, %v1742, %v1744
        %v1747 = vshrl.u32 %v926, 16
        %v1749 = vrot.slane %v1747, 7
        %v1750 = vrot.slane %v1749, 1
        %v1752 = vshll.u32 %v941, 16
        %v1754 = vsel %vm956, %v1750, %v1752
        %s1755 = scalar_lea.vmem [#allocation5], 2
        %v1756 = vld [vmem:[%s1755] sm:$0x3]
        %v1757 = vcombine.low %v965, %v973
        %v1758 = vcombine.low %v981, %v989
        %v1759 = vcombine.low %v997, %v1005
        %v1760 = vcombine.low %v1013, %v1022
        %v1762 = vunpack.c.l.s4 1966171168
        %v1763 = vunpack.c.0.s8 %v1762
        %v1764 = vlaneseq
        %v1765 = vshrl.u32 %v1764, 7
        %v1766 = vsub.s32 %v1763, %v1765
        %v1767 = vrot.slane %v1757, %v1766
        %v1769 = vunpack.c.l.s4 1966171168
        %v1770 = vunpack.c.0.s8 %v1769
        %v1771 = vlaneseq
        %v1772 = vshrl.u32 %v1771, 7
        %v1773 = vsub.s32 %v1770, %v1772
        %v1774 = vrot.slane %v1758, %v1773
        %v1776 = vunpack.c.l.s4 1966171168
        %v1777 = vunpack.c.0.s8 %v1776
        %v1778 = vlaneseq
        %v1779 = vshrl.u32 %v1778, 7
        %v1780 = vsub.s32 %v1777, %v1779
        %v1781 = vrot.slane %v1759, %v1780
        %v1783 = vunpack.c.l.s4 1966171168
        %v1784 = vunpack.c.0.s8 %v1783
        %v1785 = vlaneseq
        %v1786 = vshrl.u32 %v1785, 7
        %v1787 = vsub.s32 %v1784, %v1786
        %v1788 = vrot.slane %v1760, %v1787
        %v1789 = vcombine.low %v1767, %v1774
        %v1790 = vcombine.low %v1781, %v1788
        %v1792 = vunpack.c.l.s4 1966171168
        %v1793 = vunpack.c.0.s8 %v1792
        %v1794 = vlaneseq
        %v1795 = vshrl.u32 %v1794, 7
        %v1796 = vsub.s32 %v1793, %v1795
        %v1797 = vrot.slane %v1789, %v1796
        %v1799 = vunpack.c.l.s4 1966171168
        %v1800 = vunpack.c.0.s8 %v1799
        %v1801 = vlaneseq
        %v1802 = vshrl.u32 %v1801, 7
        %v1803 = vsub.s32 %v1800, %v1802
        %v1804 = vrot.slane %v1790, %v1803
        %v1805 = vcombine.low %v1797, %v1804
        %v1806 = vcombine.low %v1030, %v1038
        %v1807 = vcombine.low %v1046, %v1054
        %v1808 = vcombine.low %v1062, %v1070
        %v1809 = vcombine.low %v1079, %v1087
        %v1811 = vunpack.c.l.s4 1966171168
        %v1812 = vunpack.c.0.s8 %v1811
        %v1813 = vlaneseq
        %v1814 = vshrl.u32 %v1813, 7
        %v1815 = vsub.s32 %v1812, %v1814
        %v1816 = vrot.slane %v1806, %v1815
        %v1818 = vunpack.c.l.s4 1966171168
        %v1819 = vunpack.c.0.s8 %v1818
        %v1820 = vlaneseq
        %v1821 = vshrl.u32 %v1820, 7
        %v1822 = vsub.s32 %v1819, %v1821
        %v1823 = vrot.slane %v1807, %v1822
        %v1825 = vunpack.c.l.s4 1966171168
        %v1826 = vunpack.c.0.s8 %v1825
        %v1827 = vlaneseq
        %v1828 = vshrl.u32 %v1827, 7
        %v1829 = vsub.s32 %v1826, %v1828
        %v1830 = vrot.slane %v1808, %v1829
        %v1832 = vunpack.c.l.s4 1966171168
        %v1833 = vunpack.c.0.s8 %v1832
        %v1834 = vlaneseq
        %v1835 = vshrl.u32 %v1834, 7
        %v1836 = vsub.s32 %v1833, %v1835
        %v1837 = vrot.slane %v1809, %v1836
        %v1838 = vcombine.low %v1816, %v1823
        %v1839 = vcombine.low %v1830, %v1837
        %v1841 = vunpack.c.l.s4 1966171168
        %v1842 = vunpack.c.0.s8 %v1841
        %v1843 = vlaneseq
        %v1844 = vshrl.u32 %v1843, 7
        %v1845 = vsub.s32 %v1842, %v1844
        %v1846 = vrot.slane %v1838, %v1845
        %v1848 = vunpack.c.l.s4 1966171168
        %v1849 = vunpack.c.0.s8 %v1848
        %v1850 = vlaneseq
        %v1851 = vshrl.u32 %v1850, 7
        %v1852 = vsub.s32 %v1849, %v1851
        %v1853 = vrot.slane %v1839, %v1852
        %v1854 = vcombine.low %v1846, %v1853
        %v1855 = vcombine.low %v1095, %v1103
        %v1856 = vcombine.low %v1111, %v1119
        %v1857 = vcombine.low %v1127, %v1136
        %v1858 = vcombine.low %v1144, %v1152
        %v1860 = vunpack.c.l.s4 1966171168
        %v1861 = vunpack.c.0.s8 %v1860
        %v1862 = vlaneseq
        %v1863 = vshrl.u32 %v1862, 7
        %v1864 = vsub.s32 %v1861, %v1863
        %v1865 = vrot.slane %v1855, %v1864
        %v1867 = vunpack.c.l.s4 1966171168
        %v1868 = vunpack.c.0.s8 %v1867
        %v1869 = vlaneseq
        %v1870 = vshrl.u32 %v1869, 7
        %v1871 = vsub.s32 %v1868, %v1870
        %v1872 = vrot.slane %v1856, %v1871
        %v1874 = vunpack.c.l.s4 1966171168
        %v1875 = vunpack.c.0.s8 %v1874
        %v1876 = vlaneseq
        %v1877 = vshrl.u32 %v1876, 7
        %v1878 = vsub.s32 %v1875, %v1877
        %v1879 = vrot.slane %v1857, %v1878
        %v1881 = vunpack.c.l.s4 1966171168
        %v1882 = vunpack.c.0.s8 %v1881
        %v1883 = vlaneseq
        %v1884 = vshrl.u32 %v1883, 7
        %v1885 = vsub.s32 %v1882, %v1884
        %v1886 = vrot.slane %v1858, %v1885
        %v1887 = vcombine.low %v1865, %v1872
        %v1888 = vcombine.low %v1879, %v1886
        %v1890 = vunpack.c.l.s4 1966171168
        %v1891 = vunpack.c.0.s8 %v1890
        %v1892 = vlaneseq
        %v1893 = vshrl.u32 %v1892, 7
        %v1894 = vsub.s32 %v1891, %v1893
        %v1895 = vrot.slane %v1887, %v1894
        %v1897 = vunpack.c.l.s4 1966171168
        %v1898 = vunpack.c.0.s8 %v1897
        %v1899 = vlaneseq
        %v1900 = vshrl.u32 %v1899, 7
        %v1901 = vsub.s32 %v1898, %v1900
        %v1902 = vrot.slane %v1888, %v1901
        %v1903 = vcombine.low %v1895, %v1902
        %v1904 = vcombine.low %v1160, %v1168
        %v1905 = vcombine.low %v1176, %v1184
        %v1906 = vcombine.low %v1193, %v1201
        %v1907 = vcombine.low %v1209, %v1217
        %v1909 = vunpack.c.l.s4 1966171168
        %v1910 = vunpack.c.0.s8 %v1909
        %v1911 = vlaneseq
        %v1912 = vshrl.u32 %v1911, 7
        %v1913 = vsub.s32 %v1910, %v1912
        %v1914 = vrot.slane %v1904, %v1913
        %v1916 = vunpack.c.l.s4 1966171168
        %v1917 = vunpack.c.0.s8 %v1916
        %v1918 = vlaneseq
        %v1919 = vshrl.u32 %v1918, 7
        %v1920 = vsub.s32 %v1917, %v1919
        %v1921 = vrot.slane %v1905, %v1920
        %v1923 = vunpack.c.l.s4 1966171168
        %v1924 = vunpack.c.0.s8 %v1923
        %v1925 = vlaneseq
        %v1926 = vshrl.u32 %v1925, 7
        %v1927 = vsub.s32 %v1924, %v1926
        %v1928 = vrot.slane %v1906, %v1927
        %v1930 = vunpack.c.l.s4 1966171168
        %v1931 = vunpack.c.0.s8 %v1930
        %v1932 = vlaneseq
        %v1933 = vshrl.u32 %v1932, 7
        %v1934 = vsub.s32 %v1931, %v1933
        %v1935 = vrot.slane %v1907, %v1934
        %v1936 = vcombine.low %v1914, %v1921
        %v1937 = vcombine.low %v1928, %v1935
        %v1939 = vunpack.c.l.s4 1966171168
        %v1940 = vunpack.c.0.s8 %v1939
        %v1941 = vlaneseq
        %v1942 = vshrl.u32 %v1941, 7
        %v1943 = vsub.s32 %v1940, %v1942
        %v1944 = vrot.slane %v1936, %v1943
        %v1946 = vunpack.c.l.s4 1966171168
        %v1947 = vunpack.c.0.s8 %v1946
        %v1948 = vlaneseq
        %v1949 = vshrl.u32 %v1948, 7
        %v1950 = vsub.s32 %v1947, %v1949
        %v1951 = vrot.slane %v1937, %v1950
        %v1952 = vcombine.low %v1944, %v1951
        %v1953 = vcombine.low %v1225, %v1233
        %v1954 = vcombine.low %v1241, %v1250
        %v1955 = vcombine.low %v1258, %v1266
        %v1956 = vcombine.low %v1274, %v1282
        %v1958 = vunpack.c.l.s4 1966171168
        %v1959 = vunpack.c.0.s8 %v1958
        %v1960 = vlaneseq
        %v1961 = vshrl.u32 %v1960, 7
        %v1962 = vsub.s32 %v1959, %v1961
        %v1963 = vrot.slane %v1953, %v1962
        %v1965 = vunpack.c.l.s4 1966171168
        %v1966 = vunpack.c.0.s8 %v1965
        %v1967 = vlaneseq
        %v1968 = vshrl.u32 %v1967, 7
        %v1969 = vsub.s32 %v1966, %v1968
        %v1970 = vrot.slane %v1954, %v1969
        %v1972 = vunpack.c.l.s4 1966171168
        %v1973 = vunpack.c.0.s8 %v1972
        %v1974 = vlaneseq
        %v1975 = vshrl.u32 %v1974, 7
        %v1976 = vsub.s32 %v1973, %v1975
        %v1977 = vrot.slane %v1955, %v1976
        %v1979 = vunpack.c.l.s4 1966171168
        %v1980 = vunpack.c.0.s8 %v1979
        %v1981 = vlaneseq
        %v1982 = vshrl.u32 %v1981, 7
        %v1983 = vsub.s32 %v1980, %v1982
        %v1984 = vrot.slane %v1956, %v1983
        %v1985 = vcombine.low %v1963, %v1970
        %v1986 = vcombine.low %v1977, %v1984
        %v1988 = vunpack.c.l.s4 1966171168
        %v1989 = vunpack.c.0.s8 %v1988
        %v1990 = vlaneseq
        %v1991 = vshrl.u32 %v1990, 7
        %v1992 = vsub.s32 %v1989, %v1991
        %v1993 = vrot.slane %v1985, %v1992
        %v1995 = vunpack.c.l.s4 1966171168
        %v1996 = vunpack.c.0.s8 %v1995
        %v1997 = vlaneseq
        %v1998 = vshrl.u32 %v1997, 7
        %v1999 = vsub.s32 %v1996, %v1998
        %v2000 = vrot.slane %v1986, %v1999
        %v2001 = vcombine.low %v1993, %v2000
        %v2002 = vcombine.low %v1290, %v1298
        %v2003 = vcombine.low %v1307, %v1315
        %v2004 = vcombine.low %v1323, %v1331
        %v2005 = vcombine.low %v1339, %v1347
        %v2007 = vunpack.c.l.s4 1966171168
        %v2008 = vunpack.c.0.s8 %v2007
        %v2009 = vlaneseq
        %v2010 = vshrl.u32 %v2009, 7
        %v2011 = vsub.s32 %v2008, %v2010
        %v2012 = vrot.slane %v2002, %v2011
        %v2014 = vunpack.c.l.s4 1966171168
        %v2015 = vunpack.c.0.s8 %v2014
        %v2016 = vlaneseq
        %v2017 = vshrl.u32 %v2016, 7
        %v2018 = vsub.s32 %v2015, %v2017
        %v2019 = vrot.slane %v2003, %v2018
        %v2021 = vunpack.c.l.s4 1966171168
        %v2022 = vunpack.c.0.s8 %v2021
        %v2023 = vlaneseq
        %v2024 = vshrl.u32 %v2023, 7
        %v2025 = vsub.s32 %v2022, %v2024
        %v2026 = vrot.slane %v2004, %v2025
        %v2028 = vunpack.c.l.s4 1966171168
        %v2029 = vunpack.c.0.s8 %v2028
        %v2030 = vlaneseq
        %v2031 = vshrl.u32 %v2030, 7
        %v2032 = vsub.s32 %v2029, %v2031
        %v2033 = vrot.slane %v2005, %v2032
        %v2034 = vcombine.low %v2012, %v2019
        %v2035 = vcombine.low %v2026, %v2033
        %v2037 = vunpack.c.l.s4 1966171168
        %v2038 = vunpack.c.0.s8 %v2037
        %v2039 = vlaneseq
        %v2040 = vshrl.u32 %v2039, 7
        %v2041 = vsub.s32 %v2038, %v2040
        %v2042 = vrot.slane %v2034, %v2041
        %v2044 = vunpack.c.l.s4 1966171168
        %v2045 = vunpack.c.0.s8 %v2044
        %v2046 = vlaneseq
        %v2047 = vshrl.u32 %v2046, 7
        %v2048 = vsub.s32 %v2045, %v2047
        %v2049 = vrot.slane %v2035, %v2048
        %v2050 = vcombine.low %v2042, %v2049
        %v2051 = vcombine.low %v1355, %v1364
        %v2052 = vcombine.low %v1372, %v1380
        %v2053 = vcombine.low %v1388, %v1396
        %v2054 = vcombine.low %v1404, %v1412
        %v2056 = vunpack.c.l.s4 1966171168
        %v2057 = vunpack.c.0.s8 %v2056
        %v2058 = vlaneseq
        %v2059 = vshrl.u32 %v2058, 7
        %v2060 = vsub.s32 %v2057, %v2059
        %v2061 = vrot.slane %v2051, %v2060
        %v2063 = vunpack.c.l.s4 1966171168
        %v2064 = vunpack.c.0.s8 %v2063
        %v2065 = vlaneseq
        %v2066 = vshrl.u32 %v2065, 7
        %v2067 = vsub.s32 %v2064, %v2066
        %v2068 = vrot.slane %v2052, %v2067
        %v2070 = vunpack.c.l.s4 1966171168
        %v2071 = vunpack.c.0.s8 %v2070
        %v2072 = vlaneseq
        %v2073 = vshrl.u32 %v2072, 7
        %v2074 = vsub.s32 %v2071, %v2073
        %v2075 = vrot.slane %v2053, %v2074
        %v2077 = vunpack.c.l.s4 1966171168
        %v2078 = vunpack.c.0.s8 %v2077
        %v2079 = vlaneseq
        %v2080 = vshrl.u32 %v2079, 7
        %v2081 = vsub.s32 %v2078, %v2080
        %v2082 = vrot.slane %v2054, %v2081
        %v2083 = vcombine.low %v2061, %v2068
        %v2084 = vcombine.low %v2075, %v2082
        %v2086 = vunpack.c.l.s4 1966171168
        %v2087 = vunpack.c.0.s8 %v2086
        %v2088 = vlaneseq
        %v2089 = vshrl.u32 %v2088, 7
        %v2090 = vsub.s32 %v2087, %v2089
        %v2091 = vrot.slane %v2083, %v2090
        %v2093 = vunpack.c.l.s4 1966171168
        %v2094 = vunpack.c.0.s8 %v2093
        %v2095 = vlaneseq
        %v2096 = vshrl.u32 %v2095, 7
        %v2097 = vsub.s32 %v2094, %v2096
        %v2098 = vrot.slane %v2084, %v2097
        %v2099 = vcombine.low %v2091, %v2098
        %v2100 = vcombine.low %v1421, %v1429
        %v2101 = vcombine.low %v1437, %v1445
        %v2102 = vcombine.low %v1453, %v1461
        %v2103 = vcombine.low %v1469, %v1478
        %v2105 = vunpack.c.l.s4 1966171168
        %v2106 = vunpack.c.0.s8 %v2105
        %v2107 = vlaneseq
        %v2108 = vshrl.u32 %v2107, 7
        %v2109 = vsub.s32 %v2106, %v2108
        %v2110 = vrot.slane %v2100, %v2109
        %v2112 = vunpack.c.l.s4 1966171168
        %v2113 = vunpack.c.0.s8 %v2112
        %v2114 = vlaneseq
        %v2115 = vshrl.u32 %v2114, 7
        %v2116 = vsub.s32 %v2113, %v2115
        %v2117 = vrot.slane %v2101, %v2116
        %v2119 = vunpack.c.l.s4 1966171168
        %v2120 = vunpack.c.0.s8 %v2119
        %v2121 = vlaneseq
        %v2122 = vshrl.u32 %v2121, 7
        %v2123 = vsub.s32 %v2120, %v2122
        %v2124 = vrot.slane %v2102, %v2123
        %v2126 = vunpack.c.l.s4 1966171168
        %v2127 = vunpack.c.0.s8 %v2126
        %v2128 = vlaneseq
        %v2129 = vshrl.u32 %v2128, 7
        %v2130 = vsub.s32 %v2127, %v2129
        %v2131 = vrot.slane %v2103, %v2130
        %v2132 = vcombine.low %v2110, %v2117
        %v2133 = vcombine.low %v2124, %v2131
        %v2135 = vunpack.c.l.s4 1966171168
        %v2136 = vunpack.c.0.s8 %v2135
        %v2137 = vlaneseq
        %v2138 = vshrl.u32 %v2137, 7
        %v2139 = vsub.s32 %v2136, %v2138
        %v2140 = vrot.slane %v2132, %v2139
        %v2142 = vunpack.c.l.s4 1966171168
        %v2143 = vunpack.c.0.s8 %v2142
        %v2144 = vlaneseq
        %v2145 = vshrl.u32 %v2144, 7
        %v2146 = vsub.s32 %v2143, %v2145
        %v2147 = vrot.slane %v2133, %v2146
        %v2148 = vcombine.low %v2140, %v2147
        %v2149 = vcombine.low %v1486, %v1494
        %v2150 = vcombine.low %v1502, %v1510
        %v2151 = vcombine.low %v1518, %v1526
        %v2152 = vcombine.low %v1535, %v1543
        %v2154 = vunpack.c.l.s4 1966171168
        %v2155 = vunpack.c.0.s8 %v2154
        %v2156 = vlaneseq
        %v2157 = vshrl.u32 %v2156, 7
        %v2158 = vsub.s32 %v2155, %v2157
        %v2159 = vrot.slane %v2149, %v2158
        %v2161 = vunpack.c.l.s4 1966171168
        %v2162 = vunpack.c.0.s8 %v2161
        %v2163 = vlaneseq
        %v2164 = vshrl.u32 %v2163, 7
        %v2165 = vsub.s32 %v2162, %v2164
        %v2166 = vrot.slane %v2150, %v2165
        %v2168 = vunpack.c.l.s4 1966171168
        %v2169 = vunpack.c.0.s8 %v2168
        %v2170 = vlaneseq
        %v2171 = vshrl.u32 %v2170, 7
        %v2172 = vsub.s32 %v2169, %v2171
        %v2173 = vrot.slane %v2151, %v2172
        %v2175 = vunpack.c.l.s4 1966171168
        %v2176 = vunpack.c.0.s8 %v2175
        %v2177 = vlaneseq
        %v2178 = vshrl.u32 %v2177, 7
        %v2179 = vsub.s32 %v2176, %v2178
        %v2180 = vrot.slane %v2152, %v2179
        %v2181 = vcombine.low %v2159, %v2166
        %v2182 = vcombine.low %v2173, %v2180
        %v2184 = vunpack.c.l.s4 1966171168
        %v2185 = vunpack.c.0.s8 %v2184
        %v2186 = vlaneseq
        %v2187 = vshrl.u32 %v2186, 7
        %v2188 = vsub.s32 %v2185, %v2187
        %v2189 = vrot.slane %v2181, %v2188
        %v2191 = vunpack.c.l.s4 1966171168
        %v2192 = vunpack.c.0.s8 %v2191
        %v2193 = vlaneseq
        %v2194 = vshrl.u32 %v2193, 7
        %v2195 = vsub.s32 %v2192, %v2194
        %v2196 = vrot.slane %v2182, %v2195
        %v2197 = vcombine.low %v2189, %v2196
        %v2198 = vcombine.low %v1551, %v1559
        %v2199 = vcombine.low %v1567, %v1575
        %v2200 = vcombine.low %v1583, %v1592
        %v2201 = vcombine.low %v1600, %v1608
        %v2203 = vunpack.c.l.s4 1966171168
        %v2204 = vunpack.c.0.s8 %v2203
        %v2205 = vlaneseq
        %v2206 = vshrl.u32 %v2205, 7
        %v2207 = vsub.s32 %v2204, %v2206
        %v2208 = vrot.slane %v2198, %v2207
        %v2210 = vunpack.c.l.s4 1966171168
        %v2211 = vunpack.c.0.s8 %v2210
        %v2212 = vlaneseq
        %v2213 = vshrl.u32 %v2212, 7
        %v2214 = vsub.s32 %v2211, %v2213
        %v2215 = vrot.slane %v2199, %v2214
        %v2217 = vunpack.c.l.s4 1966171168
        %v2218 = vunpack.c.0.s8 %v2217
        %v2219 = vlaneseq
        %v2220 = vshrl.u32 %v2219, 7
        %v2221 = vsub.s32 %v2218, %v2220
        %v2222 = vrot.slane %v2200, %v2221
        %v2224 = vunpack.c.l.s4 1966171168
        %v2225 = vunpack.c.0.s8 %v2224
        %v2226 = vlaneseq
        %v2227 = vshrl.u32 %v2226, 7
        %v2228 = vsub.s32 %v2225, %v2227
        %v2229 = vrot.slane %v2201, %v2228
        %v2230 = vcombine.low %v2208, %v2215
        %v2231 = vcombine.low %v2222, %v2229
        %v2233 = vunpack.c.l.s4 1966171168
        %v2234 = vunpack.c.0.s8 %v2233
        %v2235 = vlaneseq
        %v2236 = vshrl.u32 %v2235, 7
        %v2237 = vsub.s32 %v2234, %v2236
        %v2238 = vrot.slane %v2230, %v2237
        %v2240 = vunpack.c.l.s4 1966171168
        %v2241 = vunpack.c.0.s8 %v2240
        %v2242 = vlaneseq
        %v2243 = vshrl.u32 %v2242, 7
        %v2244 = vsub.s32 %v2241, %v2243
        %v2245 = vrot.slane %v2231, %v2244
        %v2246 = vcombine.low %v2238, %v2245
        %v2247 = vcombine.low %v1616, %v1624
        %v2248 = vcombine.low %v1632, %v1640
        %v2249 = vcombine.low %v1649, %v1657
        %v2250 = vcombine.low %v1665, %v1673
        %v2252 = vunpack.c.l.s4 1966171168
        %v2253 = vunpack.c.0.s8 %v2252
        %v2254 = vlaneseq
        %v2255 = vshrl.u32 %v2254, 7
        %v2256 = vsub.s32 %v2253, %v2255
        %v2257 = vrot.slane %v2247, %v2256
        %v2259 = vunpack.c.l.s4 1966171168
        %v2260 = vunpack.c.0.s8 %v2259
        %v2261 = vlaneseq
        %v2262 = vshrl.u32 %v2261, 7
        %v2263 = vsub.s32 %v2260, %v2262
        %v2264 = vrot.slane %v2248, %v2263
        %v2266 = vunpack.c.l.s4 1966171168
        %v2267 = vunpack.c.0.s8 %v2266
        %v2268 = vlaneseq
        %v2269 = vshrl.u32 %v2268, 7
        %v2270 = vsub.s32 %v2267, %v2269
        %v2271 = vrot.slane %v2249, %v2270
        %v2273 = vunpack.c.l.s4 1966171168
        %v2274 = vunpack.c.0.s8 %v2273
        %v2275 = vlaneseq
        %v2276 = vshrl.u32 %v2275, 7
        %v2277 = vsub.s32 %v2274, %v2276
        %v2278 = vrot.slane %v2250, %v2277
        %v2279 = vcombine.low %v2257, %v2264
        %v2280 = vcombine.low %v2271, %v2278
        %v2282 = vunpack.c.l.s4 1966171168
        %v2283 = vunpack.c.0.s8 %v2282
        %v2284 = vlaneseq
        %v2285 = vshrl.u32 %v2284, 7
        %v2286 = vsub.s32 %v2283, %v2285
        %v2287 = vrot.slane %v2279, %v2286
        %v2289 = vunpack.c.l.s4 1966171168
        %v2290 = vunpack.c.0.s8 %v2289
        %v2291 = vlaneseq
        %v2292 = vshrl.u32 %v2291, 7
        %v2293 = vsub.s32 %v2290, %v2292
        %v2294 = vrot.slane %v2280, %v2293
        %v2295 = vcombine.low %v2287, %v2294
        %v2296 = vcombine.low %v1681, %v1689
        %v2297 = vcombine.low %v1697, %v1706
        %v2298 = vcombine.low %v1714, %v1722
        %v2299 = vcombine.low %v1730, %v1738
        %v2301 = vunpack.c.l.s4 1966171168
        %v2302 = vunpack.c.0.s8 %v2301
        %v2303 = vlaneseq
        %v2304 = vshrl.u32 %v2303, 7
        %v2305 = vsub.s32 %v2302, %v2304
        %v2306 = vrot.slane %v2296, %v2305
        %v2308 = vunpack.c.l.s4 1966171168
        %v2309 = vunpack.c.0.s8 %v2308
        %v2310 = vlaneseq
        %v2311 = vshrl.u32 %v2310, 7
        %v2312 = vsub.s32 %v2309, %v2311
        %v2313 = vrot.slane %v2297, %v2312
        %v2315 = vunpack.c.l.s4 1966171168
        %v2316 = vunpack.c.0.s8 %v2315
        %v2317 = vlaneseq
        %v2318 = vshrl.u32 %v2317, 7
        %v2319 = vsub.s32 %v2316, %v2318
        %v2320 = vrot.slane %v2298, %v2319
        %v2322 = vunpack.c.l.s4 1966171168
        %v2323 = vunpack.c.0.s8 %v2322
        %v2324 = vlaneseq
        %v2325 = vshrl.u32 %v2324, 7
        %v2326 = vsub.s32 %v2323, %v2325
        %v2327 = vrot.slane %v2299, %v2326
        %v2328 = vcombine.low %v2306, %v2313
        %v2329 = vcombine.low %v2320, %v2327
        %v2331 = vunpack.c.l.s4 1966171168
        %v2332 = vunpack.c.0.s8 %v2331
        %v2333 = vlaneseq
        %v2334 = vshrl.u32 %v2333, 7
        %v2335 = vsub.s32 %v2332, %v2334
        %v2336 = vrot.slane %v2328, %v2335
        %v2338 = vunpack.c.l.s4 1966171168
        %v2339 = vunpack.c.0.s8 %v2338
        %v2340 = vlaneseq
        %v2341 = vshrl.u32 %v2340, 7
        %v2342 = vsub.s32 %v2339, %v2341
        %v2343 = vrot.slane %v2329, %v2342
        %v2344 = vcombine.low %v2336, %v2343
        %v2345 = vcombine.low %v1746, %v1754
        %v2347 = vunpack.c.l.s4 1966171168
        %v2348 = vunpack.c.0.s8 %v2347
        %v2349 = vlaneseq
        %v2350 = vshrl.u32 %v2349, 7
        %v2351 = vsub.s32 %v2348, %v2350
        %v2352 = vrot.slane %v2345, %v2351
        %v2354 = vunpack.c.l.s4 1966171168
        %v2355 = vunpack.c.0.s8 %v2354
        %v2356 = vlaneseq
        %v2357 = vshrl.u32 %v2356, 7
        %v2358 = vsub.s32 %v2355, %v2357
        %v2359 = vrot.slane %v2352, %v2358
        %vm2360 = vcmask 31744
        %v2362 = vsel %vm2360, %v1805, 0
        %v2365 = vsel %vm2360, %v1854, 0
        %v2368 = vsel %vm2360, %v1903, 0
        %v2371 = vsel %vm2360, %v1952, 0
        %v2374 = vsel %vm2360, %v2001, 0
        %v2377 = vsel %vm2360, %v2050, 0
        %v2380 = vsel %vm2360, %v2099, 0
        %v2383 = vsel %vm2360, %v2148, 0
        %v2386 = vsel %vm2360, %v2197, 0
        %v2389 = vsel %vm2360, %v2246, 0
        %v2392 = vsel %vm2360, %v2295, 0
        %v2395 = vsel %vm2360, %v2344, 0
        %v2398 = vsel %vm2360, %v2359, 0
        %vm2400 = vcmask 1041408
        %v2402 = vsel %vm2400, %v1756, 0
        %2404 = vmatprep.subr.bf16.mxu0 0
        %2405 = vmatpush1.bf16.msra.mxu0 %v2402
        %2406 = vmatprep.subr.bf16.mxu0 0
        %2407 = vmatpush1.bf16.msra.mxu0 0
        %2408 = vmatprep.subr.bf16.mxu0 0
        %2409 = vmatpush1.bf16.msra.mxu0 0
        %2410 = vmatprep.subr.bf16.mxu0 0
        %2411 = vmatpush1.bf16.msra.mxu0 0
        %2412 = vmatprep.subr.bf16.mxu0 0
        %2413 = vmatpush1.bf16.msra.mxu0 0
        %2414 = vmatprep.subr.bf16.mxu0 0
        %2415 = vmatpush1.bf16.msra.mxu0 0
        %2416 = vmatprep.subr.bf16.mxu0 0
        %2417 = vmatpush1.bf16.msra.mxu0 0
        %2418 = vmatprep.subr.bf16.mxu0 0
        %2419 = vmatpush1.bf16.msra.mxu0 0
        %2420 = vmatprep.subr.bf16.mxu0 0
        %2421 = vmatpush1.bf16.msra.mxu0 0
        %2422 = vmatprep.subr.bf16.mxu0 0
        %2423 = vmatpush1.bf16.msra.mxu0 0
        %2424 = vmatprep.subr.bf16.mxu0 0
        %2425 = vmatpush1.bf16.msra.mxu0 0
        %2426 = vmatprep.subr.bf16.mxu0 0
        %2427 = vmatpush1.bf16.msra.mxu0 0
        %2428 = vmatprep.subr.bf16.mxu0 0
        %2429 = vmatpush1.bf16.msra.mxu0 0
        %2430 = vmatprep.subr.bf16.mxu0 0
        %2431 = vmatpush1.bf16.msra.mxu0 0
        %2432 = vmatprep.subr.bf16.mxu0 0
        %2433 = vmatpush1.bf16.msra.mxu0 0
        %2434 = vmatprep.subr.bf16.mxu0 0
        %2435 = vmatpush1.bf16.msra.mxu0 0
        %2436 = vmatprep.mubr.bf16.mxu0 0
        %2437 = vmatmul.mubr.bf16.gmra.mrb[0].mxu0 %v2362
        %v2438 = vpop.f32.mrb[0].mxu0
        %v2439 = vadd.f32 0.0, %v2438
        %v2440 = vpop.f32.mrb[0].mxu0
        %v2441 = vpop.f32.mrb[0].mxu0
        %v2442 = vadd.f32 0.0, %v2441
        %v2443 = vpop.f32.mrb[0].mxu0
        %2444 = vmatprep.mubr.bf16.mxu0 0
        %2445 = vmatmul.mubr.bf16.gmra.mrb[0].mxu0 %v2365
        %v2446 = vpop.f32.mrb[0].mxu0
        %v2447 = vadd.f32 0.0, %v2446
        %v2448 = vpop.f32.mrb[0].mxu0
        %v2449 = vpop.f32.mrb[0].mxu0
        %v2450 = vadd.f32 0.0, %v2449
        %v2451 = vpop.f32.mrb[0].mxu0
        %2452 = vmatprep.mubr.bf16.mxu0 0
        %2453 = vmatmul.mubr.bf16.gmra.mrb[0].mxu0 %v2368
        %v2454 = vpop.f32.mrb[0].mxu0
        %v2455 = vadd.f32 0.0, %v2454
        %v2456 = vpop.f32.mrb[0].mxu0
        %v2457 = vpop.f32.mrb[0].mxu0
        %v2458 = vadd.f32 0.0, %v2457
        %v2459 = vpop.f32.mrb[0].mxu0
        %2460 = vmatprep.mubr.bf16.mxu0 0
        %2461 = vmatmul.mubr.bf16.gmra.mrb[0].mxu0 %v2371
        %v2462 = vpop.f32.mrb[0].mxu0
        %v2463 = vadd.f32 0.0, %v2462
        %v2464 = vpop.f32.mrb[0].mxu0
        %v2465 = vpop.f32.mrb[0].mxu0
        %v2466 = vadd.f32 0.0, %v2465
        %v2467 = vpop.f32.mrb[0].mxu0
        %2468 = vmatprep.mubr.bf16.mxu0 0
        %2469 = vmatmul.mubr.bf16.gmra.mrb[0].mxu0 %v2374
        %v2470 = vpop.f32.mrb[0].mxu0
        %v2471 = vadd.f32 0.0, %v2470
        %v2472 = vpop.f32.mrb[0].mxu0
        %v2473 = vpop.f32.mrb[0].mxu0
        %v2474 = vadd.f32 0.0, %v2473
        %v2475 = vpop.f32.mrb[0].mxu0
        %2476 = vmatprep.mubr.bf16.mxu0 0
        %2477 = vmatmul.mubr.bf16.gmra.mrb[0].mxu0 %v2377
        %v2478 = vpop.f32.mrb[0].mxu0
        %v2479 = vadd.f32 0.0, %v2478
        %v2480 = vpop.f32.mrb[0].mxu0
        %v2481 = vpop.f32.mrb[0].mxu0
        %v2482 = vadd.f32 0.0, %v2481
        %v2483 = vpop.f32.mrb[0].mxu0
        %2484 = vmatprep.mubr.bf16.mxu0 0
        %2485 = vmatmul.mubr.bf16.gmra.mrb[0].mxu0 %v2380
        %v2486 = vpop.f32.mrb[0].mxu0
        %v2487 = vadd.f32 0.0, %v2486
        %v2488 = vpop.f32.mrb[0].mxu0
        %v2489 = vpop.f32.mrb[0].mxu0
        %v2490 = vadd.f32 0.0, %v2489
        %v2491 = vpop.f32.mrb[0].mxu0
        %2492 = vmatprep.mubr.bf16.mxu0 0
        %2493 = vmatmul.mubr.bf16.gmra.mrb[0].mxu0 %v2383
        %v2494 = vpop.f32.mrb[0].mxu0
        %v2495 = vadd.f32 0.0, %v2494
        %v2496 = vpop.f32.mrb[0].mxu0
        %v2497 = vpop.f32.mrb[0].mxu0
        %v2498 = vadd.f32 0.0, %v2497
        %v2499 = vpop.f32.mrb[0].mxu0
        %2500 = vmatprep.mubr.bf16.mxu0 0
        %2501 = vmatmul.mubr.bf16.gmra.mrb[0].mxu0 %v2386
        %v2502 = vpop.f32.mrb[0].mxu0
        %v2503 = vadd.f32 0.0, %v2502
        %v2504 = vpop.f32.mrb[0].mxu0
        %v2505 = vpop.f32.mrb[0].mxu0
        %v2506 = vadd.f32 0.0, %v2505
        %v2507 = vpop.f32.mrb[0].mxu0
        %2508 = vmatprep.mubr.bf16.mxu0 0
        %2509 = vmatmul.mubr.bf16.gmra.mrb[0].mxu0 %v2389
        %v2510 = vpop.f32.mrb[0].mxu0
        %v2511 = vadd.f32 0.0, %v2510
        %v2512 = vpop.f32.mrb[0].mxu0
        %v2513 = vpop.f32.mrb[0].mxu0
        %v2514 = vadd.f32 0.0, %v2513
        %v2515 = vpop.f32.mrb[0].mxu0
        %2516 = vmatprep.mubr.bf16.mxu0 0
        %2517 = vmatmul.mubr.bf16.gmra.mrb[0].mxu0 %v2392
        %v2518 = vpop.f32.mrb[0].mxu0
        %v2519 = vadd.f32 0.0, %v2518
        %v2520 = vpop.f32.mrb[0].mxu0
        %v2521 = vpop.f32.mrb[0].mxu0
        %v2522 = vadd.f32 0.0, %v2521
        %v2523 = vpop.f32.mrb[0].mxu0
        %2524 = vmatprep.mubr.bf16.mxu0 0
        %2525 = vmatmul.mubr.bf16.gmra.mrb[0].mxu0 %v2395
        %v2526 = vpop.f32.mrb[0].mxu0
        %v2527 = vadd.f32 0.0, %v2526
        %v2528 = vpop.f32.mrb[0].mxu0
        %v2529 = vpop.f32.mrb[0].mxu0
        %v2530 = vadd.f32 0.0, %v2529
        %v2531 = vpop.f32.mrb[0].mxu0
        %2532 = vmatprep.mubr.bf16.mxu0 0
        %2533 = vmatmul.mubr.bf16.gmra.mrb[0].mxu0 %v2398
        %v2534 = vpop.f32.mrb[0].mxu0
        %v2535 = vadd.f32 0.0, %v2534
        %v2536 = vpop.f32.mrb[0].mxu0
        %v2537 = vpop.f32.mrb[0].mxu0
        %v2538 = vpop.f32.mrb[0].mxu0
        %2539 = vdwg.mxu0
        %v2540 = vcombine.low %v283, %v290
        %v2541 = vcombine.low %v291, %v292
        %v2542 = vcombine.low %v307, %v314
        %v2543 = vcombine.low %v315, %v330
        %v2545 = vunpack.c.l.s4 1966171168
        %v2546 = vunpack.c.0.s8 %v2545
        %v2547 = vlaneseq
        %v2548 = vshrl.u32 %v2547, 7
        %v2549 = vsub.s32 %v2546, %v2548
        %v2550 = vrot.slane %v2540, %v2549
        %v2552 = vunpack.c.l.s4 1966171168
        %v2553 = vunpack.c.0.s8 %v2552
        %v2554 = vlaneseq
        %v2555 = vshrl.u32 %v2554, 7
        %v2556 = vsub.s32 %v2553, %v2555
        %v2557 = vrot.slane %v2541, %v2556
        %v2559 = vunpack.c.l.s4 1966171168
        %v2560 = vunpack.c.0.s8 %v2559
        %v2561 = vlaneseq
        %v2562 = vshrl.u32 %v2561, 7
        %v2563 = vsub.s32 %v2560, %v2562
        %v2564 = vrot.slane %v2542, %v2563
        %v2566 = vunpack.c.l.s4 1966171168
        %v2567 = vunpack.c.0.s8 %v2566
        %v2568 = vlaneseq
        %v2569 = vshrl.u32 %v2568, 7
        %v2570 = vsub.s32 %v2567, %v2569
        %v2571 = vrot.slane %v2543, %v2570
        %v2572 = vcombine.low %v2550, %v2557
        %v2573 = vcombine.low %v2564, %v2571
        %v2575 = vunpack.c.l.s4 1966171168
        %v2576 = vunpack.c.0.s8 %v2575
        %v2577 = vlaneseq
        %v2578 = vshrl.u32 %v2577, 7
        %v2579 = vsub.s32 %v2576, %v2578
        %v2580 = vrot.slane %v2572, %v2579
        %v2582 = vunpack.c.l.s4 1966171168
        %v2583 = vunpack.c.0.s8 %v2582
        %v2584 = vlaneseq
        %v2585 = vshrl.u32 %v2584, 7
        %v2586 = vsub.s32 %v2583, %v2585
        %v2587 = vrot.slane %v2573, %v2586
        %v2588 = vcombine.low %v2580, %v2587
        %v2589 = vcombine.low %v337, %v338
        %v2590 = vcombine.low %v339, %v354
        %v2591 = vcombine.low %v361, %v362
        %v2592 = vcombine.low %v377, %v384
        %v2594 = vunpack.c.l.s4 1966171168
        %v2595 = vunpack.c.0.s8 %v2594
        %v2596 = vlaneseq
        %v2597 = vshrl.u32 %v2596, 7
        %v2598 = vsub.s32 %v2595, %v2597
        %v2599 = vrot.slane %v2589, %v2598
        %v2601 = vunpack.c.l.s4 1966171168
        %v2602 = vunpack.c.0.s8 %v2601
        %v2603 = vlaneseq
        %v2604 = vshrl.u32 %v2603, 7
        %v2605 = vsub.s32 %v2602, %v2604
        %v2606 = vrot.slane %v2590, %v2605
        %v2608 = vunpack.c.l.s4 1966171168
        %v2609 = vunpack.c.0.s8 %v2608
        %v2610 = vlaneseq
        %v2611 = vshrl.u32 %v2610, 7
        %v2612 = vsub.s32 %v2609, %v2611
        %v2613 = vrot.slane %v2591, %v2612
        %v2615 = vunpack.c.l.s4 1966171168
        %v2616 = vunpack.c.0.s8 %v2615
        %v2617 = vlaneseq
        %v2618 = vshrl.u32 %v2617, 7
        %v2619 = vsub.s32 %v2616, %v2618
        %v2620 = vrot.slane %v2592, %v2619
        %v2621 = vcombine.low %v2599, %v2606
        %v2622 = vcombine.low %v2613, %v2620
        %v2624 = vunpack.c.l.s4 1966171168
        %v2625 = vunpack.c.0.s8 %v2624
        %v2626 = vlaneseq
        %v2627 = vshrl.u32 %v2626, 7
        %v2628 = vsub.s32 %v2625, %v2627
        %v2629 = vrot.slane %v2621, %v2628
        %v2631 = vunpack.c.l.s4 1966171168
        %v2632 = vunpack.c.0.s8 %v2631
        %v2633 = vlaneseq
        %v2634 = vshrl.u32 %v2633, 7
        %v2635 = vsub.s32 %v2632, %v2634
        %v2636 = vrot.slane %v2622, %v2635
        %v2637 = vcombine.low %v2629, %v2636
        %v2638 = vcombine.low %v385, %v386
        %v2639 = vcombine.low %v401, %v408
        %v2640 = vcombine.low %v409, %v424
        %v2641 = vcombine.low %v431, %v432
        %v2643 = vunpack.c.l.s4 1966171168
        %v2644 = vunpack.c.0.s8 %v2643
        %v2645 = vlaneseq
        %v2646 = vshrl.u32 %v2645, 7
        %v2647 = vsub.s32 %v2644, %v2646
        %v2648 = vrot.slane %v2638, %v2647
        %v2650 = vunpack.c.l.s4 1966171168
        %v2651 = vunpack.c.0.s8 %v2650
        %v2652 = vlaneseq
        %v2653 = vshrl.u32 %v2652, 7
        %v2654 = vsub.s32 %v2651, %v2653
        %v2655 = vrot.slane %v2639, %v2654
        %v2657 = vunpack.c.l.s4 1966171168
        %v2658 = vunpack.c.0.s8 %v2657
        %v2659 = vlaneseq
        %v2660 = vshrl.u32 %v2659, 7
        %v2661 = vsub.s32 %v2658, %v2660
        %v2662 = vrot.slane %v2640, %v2661
        %v2664 = vunpack.c.l.s4 1966171168
        %v2665 = vunpack.c.0.s8 %v2664
        %v2666 = vlaneseq
        %v2667 = vshrl.u32 %v2666, 7
        %v2668 = vsub.s32 %v2665, %v2667
        %v2669 = vrot.slane %v2641, %v2668
        %v2670 = vcombine.low %v2648, %v2655
        %v2671 = vcombine.low %v2662, %v2669
        %v2673 = vunpack.c.l.s4 1966171168
        %v2674 = vunpack.c.0.s8 %v2673
        %v2675 = vlaneseq
        %v2676 = vshrl.u32 %v2675, 7
        %v2677 = vsub.s32 %v2674, %v2676
        %v2678 = vrot.slane %v2670, %v2677
        %v2680 = vunpack.c.l.s4 1966171168
        %v2681 = vunpack.c.0.s8 %v2680
        %v2682 = vlaneseq
        %v2683 = vshrl.u32 %v2682, 7
        %v2684 = vsub.s32 %v2681, %v2683
        %v2685 = vrot.slane %v2671, %v2684
        %v2686 = vcombine.low %v2678, %v2685
        %v2687 = vcombine.low %v433, %v448
        %v2688 = vcombine.low %v455, %v456
        %v2689 = vcombine.low %v471, %v478
        %v2690 = vcombine.low %v479, %v480
        %v2692 = vunpack.c.l.s4 1966171168
        %v2693 = vunpack.c.0.s8 %v2692
        %v2694 = vlaneseq
        %v2695 = vshrl.u32 %v2694, 7
        %v2696 = vsub.s32 %v2693, %v2695
        %v2697 = vrot.slane %v2687, %v2696
        %v2699 = vunpack.c.l.s4 1966171168
        %v2700 = vunpack.c.0.s8 %v2699
        %v2701 = vlaneseq
        %v2702 = vshrl.u32 %v2701, 7
        %v2703 = vsub.s32 %v2700, %v2702
        %v2704 = vrot.slane %v2688, %v2703
        %v2706 = vunpack.c.l.s4 1966171168
        %v2707 = vunpack.c.0.s8 %v2706
        %v2708 = vlaneseq
        %v2709 = vshrl.u32 %v2708, 7
        %v2710 = vsub.s32 %v2707, %v2709
        %v2711 = vrot.slane %v2689, %v2710
        %v2713 = vunpack.c.l.s4 1966171168
        %v2714 = vunpack.c.0.s8 %v2713
        %v2715 = vlaneseq
        %v2716 = vshrl.u32 %v2715, 7
        %v2717 = vsub.s32 %v2714, %v2716
        %v2718 = vrot.slane %v2690, %v2717
        %v2719 = vcombine.low %v2697, %v2704
        %v2720 = vcombine.low %v2711, %v2718
        %v2722 = vunpack.c.l.s4 1966171168
        %v2723 = vunpack.c.0.s8 %v2722
        %v2724 = vlaneseq
        %v2725 = vshrl.u32 %v2724, 7
        %v2726 = vsub.s32 %v2723, %v2725
        %v2727 = vrot.slane %v2719, %v2726
        %v2729 = vunpack.c.l.s4 1966171168
        %v2730 = vunpack.c.0.s8 %v2729
        %v2731 = vlaneseq
        %v2732 = vshrl.u32 %v2731, 7
        %v2733 = vsub.s32 %v2730, %v2732
        %v2734 = vrot.slane %v2720, %v2733
        %v2735 = vcombine.low %v2727, %v2734
        %v2736 = vcombine.low %v495, %v502
        %v2737 = vcombine.low %v503, %v518
        %v2738 = vcombine.low %v525, %v526
        %v2739 = vcombine.low %v527, %v542
        %v2741 = vunpack.c.l.s4 1966171168
        %v2742 = vunpack.c.0.s8 %v2741
        %v2743 = vlaneseq
        %v2744 = vshrl.u32 %v2743, 7
        %v2745 = vsub.s32 %v2742, %v2744
        %v2746 = vrot.slane %v2736, %v2745
        %v2748 = vunpack.c.l.s4 1966171168
        %v2749 = vunpack.c.0.s8 %v2748
        %v2750 = vlaneseq
        %v2751 = vshrl.u32 %v2750, 7
        %v2752 = vsub.s32 %v2749, %v2751
        %v2753 = vrot.slane %v2737, %v2752
        %v2755 = vunpack.c.l.s4 1966171168
        %v2756 = vunpack.c.0.s8 %v2755
        %v2757 = vlaneseq
        %v2758 = vshrl.u32 %v2757, 7
        %v2759 = vsub.s32 %v2756, %v2758
        %v2760 = vrot.slane %v2738, %v2759
        %v2762 = vunpack.c.l.s4 1966171168
        %v2763 = vunpack.c.0.s8 %v2762
        %v2764 = vlaneseq
        %v2765 = vshrl.u32 %v2764, 7
        %v2766 = vsub.s32 %v2763, %v2765
        %v2767 = vrot.slane %v2739, %v2766
        %v2768 = vcombine.low %v2746, %v2753
        %v2769 = vcombine.low %v2760, %v2767
        %v2771 = vunpack.c.l.s4 1966171168
        %v2772 = vunpack.c.0.s8 %v2771
        %v2773 = vlaneseq
        %v2774 = vshrl.u32 %v2773, 7
        %v2775 = vsub.s32 %v2772, %v2774
        %v2776 = vrot.slane %v2768, %v2775
        %v2778 = vunpack.c.l.s4 1966171168
        %v2779 = vunpack.c.0.s8 %v2778
        %v2780 = vlaneseq
        %v2781 = vshrl.u32 %v2780, 7
        %v2782 = vsub.s32 %v2779, %v2781
        %v2783 = vrot.slane %v2769, %v2782
        %v2784 = vcombine.low %v2776, %v2783
        %v2785 = vcombine.low %v549, %v550
        %v2786 = vcombine.low %v565, %v572
        %v2787 = vcombine.low %v573, %v574
        %v2788 = vcombine.low %v589, %v596
        %v2790 = vunpack.c.l.s4 1966171168
        %v2791 = vunpack.c.0.s8 %v2790
        %v2792 = vlaneseq
        %v2793 = vshrl.u32 %v2792, 7
        %v2794 = vsub.s32 %v2791, %v2793
        %v2795 = vrot.slane %v2785, %v2794
        %v2797 = vunpack.c.l.s4 1966171168
        %v2798 = vunpack.c.0.s8 %v2797
        %v2799 = vlaneseq
        %v2800 = vshrl.u32 %v2799, 7
        %v2801 = vsub.s32 %v2798, %v2800
        %v2802 = vrot.slane %v2786, %v2801
        %v2804 = vunpack.c.l.s4 1966171168
        %v2805 = vunpack.c.0.s8 %v2804
        %v2806 = vlaneseq
        %v2807 = vshrl.u32 %v2806, 7
        %v2808 = vsub.s32 %v2805, %v2807
        %v2809 = vrot.slane %v2787, %v2808
        %v2811 = vunpack.c.l.s4 1966171168
        %v2812 = vunpack.c.0.s8 %v2811
        %v2813 = vlaneseq
        %v2814 = vshrl.u32 %v2813, 7
        %v2815 = vsub.s32 %v2812, %v2814
        %v2816 = vrot.slane %v2788, %v2815
        %v2817 = vcombine.low %v2795, %v2802
        %v2818 = vcombine.low %v2809, %v2816
        %v2820 = vunpack.c.l.s4 1966171168
        %v2821 = vunpack.c.0.s8 %v2820
        %v2822 = vlaneseq
        %v2823 = vshrl.u32 %v2822, 7
        %v2824 = vsub.s32 %v2821, %v2823
        %v2825 = vrot.slane %v2817, %v2824
        %v2827 = vunpack.c.l.s4 1966171168
        %v2828 = vunpack.c.0.s8 %v2827
        %v2829 = vlaneseq
        %v2830 = vshrl.u32 %v2829, 7
        %v2831 = vsub.s32 %v2828, %v2830
        %v2832 = vrot.slane %v2818, %v2831
        %v2833 = vcombine.low %v2825, %v2832
        %v2834 = vcombine.low %v597, %v612
        %v2835 = vcombine.low %v619, %v620
        %v2836 = vcombine.low %v621, %v636
        %v2837 = vcombine.low %v643, %v644
        %v2839 = vunpack.c.l.s4 1966171168
        %v2840 = vunpack.c.0.s8 %v2839
        %v2841 = vlaneseq
        %v2842 = vshrl.u32 %v2841, 7
        %v2843 = vsub.s32 %v2840, %v2842
        %v2844 = vrot.slane %v2834, %v2843
        %v2846 = vunpack.c.l.s4 1966171168
        %v2847 = vunpack.c.0.s8 %v2846
        %v2848 = vlaneseq
        %v2849 = vshrl.u32 %v2848, 7
        %v2850 = vsub.s32 %v2847, %v2849
        %v2851 = vrot.slane %v2835, %v2850
        %v2853 = vunpack.c.l.s4 1966171168
        %v2854 = vunpack.c.0.s8 %v2853
        %v2855 = vlaneseq
        %v2856 = vshrl.u32 %v2855, 7
        %v2857 = vsub.s32 %v2854, %v2856
        %v2858 = vrot.slane %v2836, %v2857
        %v2860 = vunpack.c.l.s4 1966171168
        %v2861 = vunpack.c.0.s8 %v2860
        %v2862 = vlaneseq
        %v2863 = vshrl.u32 %v2862, 7
        %v2864 = vsub.s32 %v2861, %v2863
        %v2865 = vrot.slane %v2837, %v2864
        %v2866 = vcombine.low %v2844, %v2851
        %v2867 = vcombine.low %v2858, %v2865
        %v2869 = vunpack.c.l.s4 1966171168
        %v2870 = vunpack.c.0.s8 %v2869
        %v2871 = vlaneseq
        %v2872 = vshrl.u32 %v2871, 7
        %v2873 = vsub.s32 %v2870, %v2872
        %v2874 = vrot.slane %v2866, %v2873
        %v2876 = vunpack.c.l.s4 1966171168
        %v2877 = vunpack.c.0.s8 %v2876
        %v2878 = vlaneseq
        %v2879 = vshrl.u32 %v2878, 7
        %v2880 = vsub.s32 %v2877, %v2879
        %v2881 = vrot.slane %v2867, %v2880
        %v2882 = vcombine.low %v2874, %v2881
        %v2883 = vcombine.low %v659, %v666
        %v2884 = vcombine.low %v667, %v668
        %v2885 = vcombine.low %v683, %v690
        %v2886 = vcombine.low %v691, %v706
        %v2888 = vunpack.c.l.s4 1966171168
        %v2889 = vunpack.c.0.s8 %v2888
        %v2890 = vlaneseq
        %v2891 = vshrl.u32 %v2890, 7
        %v2892 = vsub.s32 %v2889, %v2891
        %v2893 = vrot.slane %v2883, %v2892
        %v2895 = vunpack.c.l.s4 1966171168
        %v2896 = vunpack.c.0.s8 %v2895
        %v2897 = vlaneseq
        %v2898 = vshrl.u32 %v2897, 7
        %v2899 = vsub.s32 %v2896, %v2898
        %v2900 = vrot.slane %v2884, %v2899
        %v2902 = vunpack.c.l.s4 1966171168
        %v2903 = vunpack.c.0.s8 %v2902
        %v2904 = vlaneseq
        %v2905 = vshrl.u32 %v2904, 7
        %v2906 = vsub.s32 %v2903, %v2905
        %v2907 = vrot.slane %v2885, %v2906
        %v2909 = vunpack.c.l.s4 1966171168
        %v2910 = vunpack.c.0.s8 %v2909
        %v2911 = vlaneseq
        %v2912 = vshrl.u32 %v2911, 7
        %v2913 = vsub.s32 %v2910, %v2912
        %v2914 = vrot.slane %v2886, %v2913
        %v2915 = vcombine.low %v2893, %v2900
        %v2916 = vcombine.low %v2907, %v2914
        %v2918 = vunpack.c.l.s4 1966171168
        %v2919 = vunpack.c.0.s8 %v2918
        %v2920 = vlaneseq
        %v2921 = vshrl.u32 %v2920, 7
        %v2922 = vsub.s32 %v2919, %v2921
        %v2923 = vrot.slane %v2915, %v2922
        %v2925 = vunpack.c.l.s4 1966171168
        %v2926 = vunpack.c.0.s8 %v2925
        %v2927 = vlaneseq
        %v2928 = vshrl.u32 %v2927, 7
        %v2929 = vsub.s32 %v2926, %v2928
        %v2930 = vrot.slane %v2916, %v2929
        %v2931 = vcombine.low %v2923, %v2930
        %v2932 = vcombine.low %v713, %v714
        %v2933 = vcombine.low %v715, %v730
        %v2934 = vcombine.low %v737, %v738
        %v2935 = vcombine.low %v753, %v760
        %v2937 = vunpack.c.l.s4 1966171168
        %v2938 = vunpack.c.0.s8 %v2937
        %v2939 = vlaneseq
        %v2940 = vshrl.u32 %v2939, 7
        %v2941 = vsub.s32 %v2938, %v2940
        %v2942 = vrot.slane %v2932, %v2941
        %v2944 = vunpack.c.l.s4 1966171168
        %v2945 = vunpack.c.0.s8 %v2944
        %v2946 = vlaneseq
        %v2947 = vshrl.u32 %v2946, 7
        %v2948 = vsub.s32 %v2945, %v2947
        %v2949 = vrot.slane %v2933, %v2948
        %v2951 = vunpack.c.l.s4 1966171168
        %v2952 = vunpack.c.0.s8 %v2951
        %v2953 = vlaneseq
        %v2954 = vshrl.u32 %v2953, 7
        %v2955 = vsub.s32 %v2952, %v2954
        %v2956 = vrot.slane %v2934, %v2955
        %v2958 = vunpack.c.l.s4 1966171168
        %v2959 = vunpack.c.0.s8 %v2958
        %v2960 = vlaneseq
        %v2961 = vshrl.u32 %v2960, 7
        %v2962 = vsub.s32 %v2959, %v2961
        %v2963 = vrot.slane %v2935, %v2962
        %v2964 = vcombine.low %v2942, %v2949
        %v2965 = vcombine.low %v2956, %v2963
        %v2967 = vunpack.c.l.s4 1966171168
        %v2968 = vunpack.c.0.s8 %v2967
        %v2969 = vlaneseq
        %v2970 = vshrl.u32 %v2969, 7
        %v2971 = vsub.s32 %v2968, %v2970
        %v2972 = vrot.slane %v2964, %v2971
        %v2974 = vunpack.c.l.s4 1966171168
        %v2975 = vunpack.c.0.s8 %v2974
        %v2976 = vlaneseq
        %v2977 = vshrl.u32 %v2976, 7
        %v2978 = vsub.s32 %v2975, %v2977
        %v2979 = vrot.slane %v2965, %v2978
        %v2980 = vcombine.low %v2972, %v2979
        %v2981 = vcombine.low %v761, %v762
        %v2982 = vcombine.low %v777, %v784
        %v2983 = vcombine.low %v785, %v800
        %v2984 = vcombine.low %v807, %v808
        %v2986 = vunpack.c.l.s4 1966171168
        %v2987 = vunpack.c.0.s8 %v2986
        %v2988 = vlaneseq
        %v2989 = vshrl.u32 %v2988, 7
        %v2990 = vsub.s32 %v2987, %v2989
        %v2991 = vrot.slane %v2981, %v2990
        %v2993 = vunpack.c.l.s4 1966171168
        %v2994 = vunpack.c.0.s8 %v2993
        %v2995 = vlaneseq
        %v2996 = vshrl.u32 %v2995, 7
        %v2997 = vsub.s32 %v2994, %v2996
        %v2998 = vrot.slane %v2982, %v2997
        %v3000 = vunpack.c.l.s4 1966171168
        %v3001 = vunpack.c.0.s8 %v3000
        %v3002 = vlaneseq
        %v3003 = vshrl.u32 %v3002, 7
        %v3004 = vsub.s32 %v3001, %v3003
        %v3005 = vrot.slane %v2983, %v3004
        %v3007 = vunpack.c.l.s4 1966171168
        %v3008 = vunpack.c.0.s8 %v3007
        %v3009 = vlaneseq
        %v3010 = vshrl.u32 %v3009, 7
        %v3011 = vsub.s32 %v3008, %v3010
        %v3012 = vrot.slane %v2984, %v3011
        %v3013 = vcombine.low %v2991, %v2998
        %v3014 = vcombine.low %v3005, %v3012
        %v3016 = vunpack.c.l.s4 1966171168
        %v3017 = vunpack.c.0.s8 %v3016
        %v3018 = vlaneseq
        %v3019 = vshrl.u32 %v3018, 7
        %v3020 = vsub.s32 %v3017, %v3019
        %v3021 = vrot.slane %v3013, %v3020
        %v3023 = vunpack.c.l.s4 1966171168
        %v3024 = vunpack.c.0.s8 %v3023
        %v3025 = vlaneseq
        %v3026 = vshrl.u32 %v3025, 7
        %v3027 = vsub.s32 %v3024, %v3026
        %v3028 = vrot.slane %v3014, %v3027
        %v3029 = vcombine.low %v3021, %v3028
        %v3030 = vcombine.low %v809, %v824
        %v3031 = vcombine.low %v831, %v832
        %v3032 = vcombine.low %v847, %v854
        %v3033 = vcombine.low %v855, %v856
        %v3035 = vunpack.c.l.s4 1966171168
        %v3036 = vunpack.c.0.s8 %v3035
        %v3037 = vlaneseq
        %v3038 = vshrl.u32 %v3037, 7
        %v3039 = vsub.s32 %v3036, %v3038
        %v3040 = vrot.slane %v3030, %v3039
        %v3042 = vunpack.c.l.s4 1966171168
        %v3043 = vunpack.c.0.s8 %v3042
        %v3044 = vlaneseq
        %v3045 = vshrl.u32 %v3044, 7
        %v3046 = vsub.s32 %v3043, %v3045
        %v3047 = vrot.slane %v3031, %v3046
        %v3049 = vunpack.c.l.s4 1966171168
        %v3050 = vunpack.c.0.s8 %v3049
        %v3051 = vlaneseq
        %v3052 = vshrl.u32 %v3051, 7
        %v3053 = vsub.s32 %v3050, %v3052
        %v3054 = vrot.slane %v3032, %v3053
        %v3056 = vunpack.c.l.s4 1966171168
        %v3057 = vunpack.c.0.s8 %v3056
        %v3058 = vlaneseq
        %v3059 = vshrl.u32 %v3058, 7
        %v3060 = vsub.s32 %v3057, %v3059
        %v3061 = vrot.slane %v3033, %v3060
        %v3062 = vcombine.low %v3040, %v3047
        %v3063 = vcombine.low %v3054, %v3061
        %v3065 = vunpack.c.l.s4 1966171168
        %v3066 = vunpack.c.0.s8 %v3065
        %v3067 = vlaneseq
        %v3068 = vshrl.u32 %v3067, 7
        %v3069 = vsub.s32 %v3066, %v3068
        %v3070 = vrot.slane %v3062, %v3069
        %v3072 = vunpack.c.l.s4 1966171168
        %v3073 = vunpack.c.0.s8 %v3072
        %v3074 = vlaneseq
        %v3075 = vshrl.u32 %v3074, 7
        %v3076 = vsub.s32 %v3073, %v3075
        %v3077 = vrot.slane %v3063, %v3076
        %v3078 = vcombine.low %v3070, %v3077
        %v3079 = vcombine.low %v871, %v878
        %v3080 = vcombine.low %v879, %v894
        %v3081 = vcombine.low %v901, %v902
        %v3082 = vcombine.low %v903, %v918
        %v3084 = vunpack.c.l.s4 1966171168
        %v3085 = vunpack.c.0.s8 %v3084
        %v3086 = vlaneseq
        %v3087 = vshrl.u32 %v3086, 7
        %v3088 = vsub.s32 %v3085, %v3087
        %v3089 = vrot.slane %v3079, %v3088
        %v3091 = vunpack.c.l.s4 1966171168
        %v3092 = vunpack.c.0.s8 %v3091
        %v3093 = vlaneseq
        %v3094 = vshrl.u32 %v3093, 7
        %v3095 = vsub.s32 %v3092, %v3094
        %v3096 = vrot.slane %v3080, %v3095
        %v3098 = vunpack.c.l.s4 1966171168
        %v3099 = vunpack.c.0.s8 %v3098
        %v3100 = vlaneseq
        %v3101 = vshrl.u32 %v3100, 7
        %v3102 = vsub.s32 %v3099, %v3101
        %v3103 = vrot.slane %v3081, %v3102
        %v3105 = vunpack.c.l.s4 1966171168
        %v3106 = vunpack.c.0.s8 %v3105
        %v3107 = vlaneseq
        %v3108 = vshrl.u32 %v3107, 7
        %v3109 = vsub.s32 %v3106, %v3108
        %v3110 = vrot.slane %v3082, %v3109
        %v3111 = vcombine.low %v3089, %v3096
        %v3112 = vcombine.low %v3103, %v3110
        %v3114 = vunpack.c.l.s4 1966171168
        %v3115 = vunpack.c.0.s8 %v3114
        %v3116 = vlaneseq
        %v3117 = vshrl.u32 %v3116, 7
        %v3118 = vsub.s32 %v3115, %v3117
        %v3119 = vrot.slane %v3111, %v3118
        %v3121 = vunpack.c.l.s4 1966171168
        %v3122 = vunpack.c.0.s8 %v3121
        %v3123 = vlaneseq
        %v3124 = vshrl.u32 %v3123, 7
        %v3125 = vsub.s32 %v3122, %v3124
        %v3126 = vrot.slane %v3112, %v3125
        %v3127 = vcombine.low %v3119, %v3126
        %v3128 = vcombine.low %v925, %v926
        %v3130 = vunpack.c.l.s4 1966171168
        %v3131 = vunpack.c.0.s8 %v3130
        %v3132 = vlaneseq
        %v3133 = vshrl.u32 %v3132, 7
        %v3134 = vsub.s32 %v3131, %v3133
        %v3135 = vrot.slane %v3128, %v3134
        %v3137 = vunpack.c.l.s4 1966171168
        %v3138 = vunpack.c.0.s8 %v3137
        %v3139 = vlaneseq
        %v3140 = vshrl.u32 %v3139, 7
        %v3141 = vsub.s32 %v3138, %v3140
        %v3142 = vrot.slane %v3135, %v3141
        %v3144 = vsel %vm2360, %v2588, 0
        %v3147 = vsel %vm2360, %v2637, 0
        %v3150 = vsel %vm2360, %v2686, 0
        %v3153 = vsel %vm2360, %v2735, 0
        %v3156 = vsel %vm2360, %v2784, 0
        %v3159 = vsel %vm2360, %v2833, 0
        %v3162 = vsel %vm2360, %v2882, 0
        %v3165 = vsel %vm2360, %v2931, 0
        %v3168 = vsel %vm2360, %v2980, 0
        %v3171 = vsel %vm2360, %v3029, 0
        %v3174 = vsel %vm2360, %v3078, 0
        %v3177 = vsel %vm2360, %v3127, 0
        %v3180 = vsel %vm2360, %v3142, 0
        %v3183 = vsel %vm2400, %v927, 0
        %3185 = vmatprep.subr.bf16.mxu0 0
        %3186 = vmatpush1.bf16.msra.mxu0 %v3183
        %3187 = vmatprep.subr.bf16.mxu0 0
        %3188 = vmatpush1.bf16.msra.mxu0 0
        %3189 = vmatprep.subr.bf16.mxu0 0
        %3190 = vmatpush1.bf16.msra.mxu0 0
        %3191 = vmatprep.subr.bf16.mxu0 0
        %3192 = vmatpush1.bf16.msra.mxu0 0
        %3193 = vmatprep.subr.bf16.mxu0 0
        %3194 = vmatpush1.bf16.msra.mxu0 0
        %3195 = vmatprep.subr.bf16.mxu0 0
        %3196 = vmatpush1.bf16.msra.mxu0 0
        %3197 = vmatprep.subr.bf16.mxu0 0
        %3198 = vmatpush1.bf16.msra.mxu0 0
        %3199 = vmatprep.subr.bf16.mxu0 0
        %3200 = vmatpush1.bf16.msra.mxu0 0
        %3201 = vmatprep.subr.bf16.mxu0 0
        %3202 = vmatpush1.bf16.msra.mxu0 0
        %3203 = vmatprep.subr.bf16.mxu0 0
        %3204 = vmatpush1.bf16.msra.mxu0 0
        %3205 = vmatprep.subr.bf16.mxu0 0
        %3206 = vmatpush1.bf16.msra.mxu0 0
        %3207 = vmatprep.subr.bf16.mxu0 0
        %3208 = vmatpush1.bf16.msra.mxu0 0
        %3209 = vmatprep.subr.bf16.mxu0 0
        %3210 = vmatpush1.bf16.msra.mxu0 0
        %3211 = vmatprep.subr.bf16.mxu0 0
        %3212 = vmatpush1.bf16.msra.mxu0 0
        %3213 = vmatprep.subr.bf16.mxu0 0
        %3214 = vmatpush1.bf16.msra.mxu0 0
        %3215 = vmatprep.subr.bf16.mxu0 0
        %3216 = vmatpush1.bf16.msra.mxu0 0
        %3217 = vmatprep.mubr.bf16.mxu0 0
        %3218 = vmatmul.mubr.bf16.gmra.mrb[0].mxu0 %v3144
        %v3219 = vpop.f32.mrb[0].mxu0
        %v3220 = vadd.f32 %v2439, %v3219
        %v3221 = vpop.f32.mrb[0].mxu0
        %v3222 = vpop.f32.mrb[0].mxu0
        %v3223 = vadd.f32 %v2442, %v3222
        %v3224 = vpop.f32.mrb[0].mxu0
        %3225 = vmatprep.mubr.bf16.mxu0 0
        %3226 = vmatmul.mubr.bf16.gmra.mrb[0].mxu0 %v3147
        %v3227 = vpop.f32.mrb[0].mxu0
        %v3228 = vadd.f32 %v2447, %v3227
        %v3229 = vpop.f32.mrb[0].mxu0
        %v3230 = vpop.f32.mrb[0].mxu0
        %v3231 = vadd.f32 %v2450, %v3230
        %v3232 = vpop.f32.mrb[0].mxu0
        %3233 = vmatprep.mubr.bf16.mxu0 0
        %3234 = vmatmul.mubr.bf16.gmra.mrb[0].mxu0 %v3150
        %v3235 = vpop.f32.mrb[0].mxu0
        %v3236 = vadd.f32 %v2455, %v3235
        %v3237 = vpop.f32.mrb[0].mxu0
        %v3238 = vpop.f32.mrb[0].mxu0
        %v3239 = vadd.f32 %v2458, %v3238
        %v3240 = vpop.f32.mrb[0].mxu0
        %3241 = vmatprep.mubr.bf16.mxu0 0
        %3242 = vmatmul.mubr.bf16.gmra.mrb[0].mxu0 %v3153
        %v3243 = vpop.f32.mrb[0].mxu0
        %v3244 = vadd.f32 %v2463, %v3243
        %v3245 = vpop.f32.mrb[0].mxu0
        %v3246 = vpop.f32.mrb[0].mxu0
        %v3247 = vadd.f32 %v2466, %v3246
        %v3248 = vpop.f32.mrb[0].mxu0
        %3249 = vmatprep.mubr.bf16.mxu0 0
        %3250 = vmatmul.mubr.bf16.gmra.mrb[0].mxu0 %v3156
        %v3251 = vpop.f32.mrb[0].mxu0
        %v3252 = vadd.f32 %v2471, %v3251
        %v3253 = vpop.f32.mrb[0].mxu0
        %v3254 = vpop.f32.mrb[0].mxu0
        %v3255 = vadd.f32 %v2474, %v3254
        %v3256 = vpop.f32.mrb[0].mxu0
        %3257 = vmatprep.mubr.bf16.mxu0 0
        %3258 = vmatmul.mubr.bf16.gmra.mrb[0].mxu0 %v3159
        %v3259 = vpop.f32.mrb[0].mxu0
        %v3260 = vadd.f32 %v2479, %v3259
        %v3261 = vpop.f32.mrb[0].mxu0
        %v3262 = vpop.f32.mrb[0].mxu0
        %v3263 = vadd.f32 %v2482, %v3262
        %v3264 = vpop.f32.mrb[0].mxu0
        %3265 = vmatprep.mubr.bf16.mxu0 0
        %3266 = vmatmul.mubr.bf16.gmra.mrb[0].mxu0 %v3162
        %v3267 = vpop.f32.mrb[0].mxu0
        %v3268 = vadd.f32 %v2487, %v3267
        %v3269 = vpop.f32.mrb[0].mxu0
        %v3270 = vpop.f32.mrb[0].mxu0
        %v3271 = vadd.f32 %v2490, %v3270
        %v3272 = vpop.f32.mrb[0].mxu0
        %3273 = vmatprep.mubr.bf16.mxu0 0
        %3274 = vmatmul.mubr.bf16.gmra.mrb[0].mxu0 %v3165
        %v3275 = vpop.f32.mrb[0].mxu0
        %v3276 = vadd.f32 %v2495, %v3275
        %v3277 = vpop.f32.mrb[0].mxu0
        %v3278 = vpop.f32.mrb[0].mxu0
        %v3279 = vadd.f32 %v2498, %v3278
        %v3280 = vpop.f32.mrb[0].mxu0
        %3281 = vmatprep.mubr.bf16.mxu0 0
        %3282 = vmatmul.mubr.bf16.gmra.mrb[0].mxu0 %v3168
        %v3283 = vpop.f32.mrb[0].mxu0
        %v3284 = vadd.f32 %v2503, %v3283
        %v3285 = vpop.f32.mrb[0].mxu0
        %v3286 = vpop.f32.mrb[0].mxu0
        %v3287 = vadd.f32 %v2506, %v3286
        %v3288 = vpop.f32.mrb[0].mxu0
        %3289 = vmatprep.mubr.bf16.mxu0 0
        %3290 = vmatmul.mubr.bf16.gmra.mrb[0].mxu0 %v3171
        %v3291 = vpop.f32.mrb[0].mxu0
        %v3292 = vadd.f32 %v2511, %v3291
        %v3293 = vpop.f32.mrb[0].mxu0
        %v3294 = vpop.f32.mrb[0].mxu0
        %v3295 = vadd.f32 %v2514, %v3294
        %v3296 = vpop.f32.mrb[0].mxu0
        %3297 = vmatprep.mubr.bf16.mxu0 0
        %3298 = vmatmul.mubr.bf16.gmra.mrb[0].mxu0 %v3174
        %v3299 = vpop.f32.mrb[0].mxu0
        %v3300 = vadd.f32 %v2519, %v3299
        %v3301 = vpop.f32.mrb[0].mxu0
        %v3302 = vpop.f32.mrb[0].mxu0
        %v3303 = vadd.f32 %v2522, %v3302
        %v3304 = vpop.f32.mrb[0].mxu0
        %3305 = vmatprep.mubr.bf16.mxu0 0
        %3306 = vmatmul.mubr.bf16.gmra.mrb[0].mxu0 %v3177
        %v3307 = vpop.f32.mrb[0].mxu0
        %v3308 = vadd.f32 %v2527, %v3307
        %v3309 = vpop.f32.mrb[0].mxu0
        %v3310 = vpop.f32.mrb[0].mxu0
        %v3311 = vadd.f32 %v2530, %v3310
        %v3312 = vpop.f32.mrb[0].mxu0
        %3313 = vmatprep.mubr.bf16.mxu0 0
        %3314 = vmatmul.mubr.bf16.gmra.mrb[0].mxu0 %v3180
        %v3315 = vpop.f32.mrb[0].mxu0
        %v3316 = vadd.f32 %v2535, %v3315
        %v3317 = vpop.f32.mrb[0].mxu0
        %v3318 = vpop.f32.mrb[0].mxu0
        %v3319 = vpop.f32.mrb[0].mxu0
        %3320 = vdwg.mxu0
        %s3321 = scalar_lea.vmem [#allocation5], 4
        %v3322 = vld [vmem:[%s3321] sm:$0x3]
        %v3323 = vcombine.low %v290, %v291
        %v3324 = vcombine.low %v292, %v307
        %v3325 = vcombine.low %v314, %v315
        %v3326 = vcombine.low %v928, %v337
        %v3328 = vunpack.c.l.s4 1966171168
        %v3329 = vunpack.c.0.s8 %v3328
        %v3330 = vlaneseq
        %v3331 = vshrl.u32 %v3330, 7
        %v3332 = vsub.s32 %v3329, %v3331
        %v3333 = vrot.slane %v3323, %v3332
        %v3335 = vunpack.c.l.s4 1966171168
        %v3336 = vunpack.c.0.s8 %v3335
        %v3337 = vlaneseq
        %v3338 = vshrl.u32 %v3337, 7
        %v3339 = vsub.s32 %v3336, %v3338
        %v3340 = vrot.slane %v3324, %v3339
        %v3342 = vunpack.c.l.s4 1966171168
        %v3343 = vunpack.c.0.s8 %v3342
        %v3344 = vlaneseq
        %v3345 = vshrl.u32 %v3344, 7
        %v3346 = vsub.s32 %v3343, %v3345
        %v3347 = vrot.slane %v3325, %v3346
        %v3349 = vunpack.c.l.s4 1966171168
        %v3350 = vunpack.c.0.s8 %v3349
        %v3351 = vlaneseq
        %v3352 = vshrl.u32 %v3351, 7
        %v3353 = vsub.s32 %v3350, %v3352
        %v3354 = vrot.slane %v3326, %v3353
        %v3355 = vcombine.low %v3333, %v3340
        %v3356 = vcombine.low %v3347, %v3354
        %v3358 = vunpack.c.l.s4 1966171168
        %v3359 = vunpack.c.0.s8 %v3358
        %v3360 = vlaneseq
        %v3361 = vshrl.u32 %v3360, 7
        %v3362 = vsub.s32 %v3359, %v3361
        %v3363 = vrot.slane %v3355, %v3362
        %v3365 = vunpack.c.l.s4 1966171168
        %v3366 = vunpack.c.0.s8 %v3365
        %v3367 = vlaneseq
        %v3368 = vshrl.u32 %v3367, 7
        %v3369 = vsub.s32 %v3366, %v3368
        %v3370 = vrot.slane %v3356, %v3369
        %v3371 = vcombine.low %v3363, %v3370
        %v3372 = vcombine.low %v338, %v339
        %v3373 = vcombine.low %v354, %v361
        %v3374 = vcombine.low %v362, %v929
        %v3375 = vcombine.low %v384, %v385
        %v3377 = vunpack.c.l.s4 1966171168
        %v3378 = vunpack.c.0.s8 %v3377
        %v3379 = vlaneseq
        %v3380 = vshrl.u32 %v3379, 7
        %v3381 = vsub.s32 %v3378, %v3380
        %v3382 = vrot.slane %v3372, %v3381
        %v3384 = vunpack.c.l.s4 1966171168
        %v3385 = vunpack.c.0.s8 %v3384
        %v3386 = vlaneseq
        %v3387 = vshrl.u32 %v3386, 7
        %v3388 = vsub.s32 %v3385, %v3387
        %v3389 = vrot.slane %v3373, %v3388
        %v3391 = vunpack.c.l.s4 1966171168
        %v3392 = vunpack.c.0.s8 %v3391
        %v3393 = vlaneseq
        %v3394 = vshrl.u32 %v3393, 7
        %v3395 = vsub.s32 %v3392, %v3394
        %v3396 = vrot.slane %v3374, %v3395
        %v3398 = vunpack.c.l.s4 1966171168
        %v3399 = vunpack.c.0.s8 %v3398
        %v3400 = vlaneseq
        %v3401 = vshrl.u32 %v3400, 7
        %v3402 = vsub.s32 %v3399, %v3401
        %v3403 = vrot.slane %v3375, %v3402
        %v3404 = vcombine.low %v3382, %v3389
        %v3405 = vcombine.low %v3396, %v3403
        %v3407 = vunpack.c.l.s4 1966171168
        %v3408 = vunpack.c.0.s8 %v3407
        %v3409 = vlaneseq
        %v3410 = vshrl.u32 %v3409, 7
        %v3411 = vsub.s32 %v3408, %v3410
        %v3412 = vrot.slane %v3404, %v3411
        %v3414 = vunpack.c.l.s4 1966171168
        %v3415 = vunpack.c.0.s8 %v3414
        %v3416 = vlaneseq
        %v3417 = vshrl.u32 %v3416, 7
        %v3418 = vsub.s32 %v3415, %v3417
        %v3419 = vrot.slane %v3405, %v3418
        %v3420 = vcombine.low %v3412, %v3419
        %v3421 = vcombine.low %v386, %v401
        %v3422 = vcombine.low %v408, %v409
        %v3423 = vcombine.low %v930, %v431
        %v3424 = vcombine.low %v432, %v433
        %v3426 = vunpack.c.l.s4 1966171168
        %v3427 = vunpack.c.0.s8 %v3426
        %v3428 = vlaneseq
        %v3429 = vshrl.u32 %v3428, 7
        %v3430 = vsub.s32 %v3427, %v3429
        %v3431 = vrot.slane %v3421, %v3430
        %v3433 = vunpack.c.l.s4 1966171168
        %v3434 = vunpack.c.0.s8 %v3433
        %v3435 = vlaneseq
        %v3436 = vshrl.u32 %v3435, 7
        %v3437 = vsub.s32 %v3434, %v3436
        %v3438 = vrot.slane %v3422, %v3437
        %v3440 = vunpack.c.l.s4 1966171168
        %v3441 = vunpack.c.0.s8 %v3440
        %v3442 = vlaneseq
        %v3443 = vshrl.u32 %v3442, 7
        %v3444 = vsub.s32 %v3441, %v3443
        %v3445 = vrot.slane %v3423, %v3444
        %v3447 = vunpack.c.l.s4 1966171168
        %v3448 = vunpack.c.0.s8 %v3447
        %v3449 = vlaneseq
        %v3450 = vshrl.u32 %v3449, 7
        %v3451 = vsub.s32 %v3448, %v3450
        %v3452 = vrot.slane %v3424, %v3451
        %v3453 = vcombine.low %v3431, %v3438
        %v3454 = vcombine.low %v3445, %v3452
        %v3456 = vunpack.c.l.s4 1966171168
        %v3457 = vunpack.c.0.s8 %v3456
        %v3458 = vlaneseq
        %v3459 = vshrl.u32 %v3458, 7
        %v3460 = vsub.s32 %v3457, %v3459
        %v3461 = vrot.slane %v3453, %v3460
        %v3463 = vunpack.c.l.s4 1966171168
        %v3464 = vunpack.c.0.s8 %v3463
        %v3465 = vlaneseq
        %v3466 = vshrl.u32 %v3465, 7
        %v3467 = vsub.s32 %v3464, %v3466
        %v3468 = vrot.slane %v3454, %v3467
        %v3469 = vcombine.low %v3461, %v3468
        %v3470 = vcombine.low %v448, %v455
        %v3471 = vcombine.low %v456, %v931
        %v3472 = vcombine.low %v478, %v479
        %v3473 = vcombine.low %v480, %v495
        %v3475 = vunpack.c.l.s4 1966171168
        %v3476 = vunpack.c.0.s8 %v3475
        %v3477 = vlaneseq
        %v3478 = vshrl.u32 %v3477, 7
        %v3479 = vsub.s32 %v3476, %v3478
        %v3480 = vrot.slane %v3470, %v3479
        %v3482 = vunpack.c.l.s4 1966171168
        %v3483 = vunpack.c.0.s8 %v3482
        %v3484 = vlaneseq
        %v3485 = vshrl.u32 %v3484, 7
        %v3486 = vsub.s32 %v3483, %v3485
        %v3487 = vrot.slane %v3471, %v3486
        %v3489 = vunpack.c.l.s4 1966171168
        %v3490 = vunpack.c.0.s8 %v3489
        %v3491 = vlaneseq
        %v3492 = vshrl.u32 %v3491, 7
        %v3493 = vsub.s32 %v3490, %v3492
        %v3494 = vrot.slane %v3472, %v3493
        %v3496 = vunpack.c.l.s4 1966171168
        %v3497 = vunpack.c.0.s8 %v3496
        %v3498 = vlaneseq
        %v3499 = vshrl.u32 %v3498, 7
        %v3500 = vsub.s32 %v3497, %v3499
        %v3501 = vrot.slane %v3473, %v3500
        %v3502 = vcombine.low %v3480, %v3487
        %v3503 = vcombine.low %v3494, %v3501
        %v3505 = vunpack.c.l.s4 1966171168
        %v3506 = vunpack.c.0.s8 %v3505
        %v3507 = vlaneseq
        %v3508 = vshrl.u32 %v3507, 7
        %v3509 = vsub.s32 %v3506, %v3508
        %v3510 = vrot.slane %v3502, %v3509
        %v3512 = vunpack.c.l.s4 1966171168
        %v3513 = vunpack.c.0.s8 %v3512
        %v3514 = vlaneseq
        %v3515 = vshrl.u32 %v3514, 7
        %v3516 = vsub.s32 %v3513, %v3515
        %v3517 = vrot.slane %v3503, %v3516
        %v3518 = vcombine.low %v3510, %v3517
        %v3519 = vcombine.low %v502, %v503
        %v3520 = vcombine.low %v932, %v525
        %v3521 = vcombine.low %v526, %v527
        %v3522 = vcombine.low %v542, %v549
        %v3524 = vunpack.c.l.s4 1966171168
        %v3525 = vunpack.c.0.s8 %v3524
        %v3526 = vlaneseq
        %v3527 = vshrl.u32 %v3526, 7
        %v3528 = vsub.s32 %v3525, %v3527
        %v3529 = vrot.slane %v3519, %v3528
        %v3531 = vunpack.c.l.s4 1966171168
        %v3532 = vunpack.c.0.s8 %v3531
        %v3533 = vlaneseq
        %v3534 = vshrl.u32 %v3533, 7
        %v3535 = vsub.s32 %v3532, %v3534
        %v3536 = vrot.slane %v3520, %v3535
        %v3538 = vunpack.c.l.s4 1966171168
        %v3539 = vunpack.c.0.s8 %v3538
        %v3540 = vlaneseq
        %v3541 = vshrl.u32 %v3540, 7
        %v3542 = vsub.s32 %v3539, %v3541
        %v3543 = vrot.slane %v3521, %v3542
        %v3545 = vunpack.c.l.s4 1966171168
        %v3546 = vunpack.c.0.s8 %v3545
        %v3547 = vlaneseq
        %v3548 = vshrl.u32 %v3547, 7
        %v3549 = vsub.s32 %v3546, %v3548
        %v3550 = vrot.slane %v3522, %v3549
        %v3551 = vcombine.low %v3529, %v3536
        %v3552 = vcombine.low %v3543, %v3550
        %v3554 = vunpack.c.l.s4 1966171168
        %v3555 = vunpack.c.0.s8 %v3554
        %v3556 = vlaneseq
        %v3557 = vshrl.u32 %v3556, 7
        %v3558 = vsub.s32 %v3555, %v3557
        %v3559 = vrot.slane %v3551, %v3558
        %v3561 = vunpack.c.l.s4 1966171168
        %v3562 = vunpack.c.0.s8 %v3561
        %v3563 = vlaneseq
        %v3564 = vshrl.u32 %v3563, 7
        %v3565 = vsub.s32 %v3562, %v3564
        %v3566 = vrot.slane %v3552, %v3565
        %v3567 = vcombine.low %v3559, %v3566
        %v3568 = vcombine.low %v550, %v933
        %v3569 = vcombine.low %v572, %v573
        %v3570 = vcombine.low %v574, %v589
        %v3571 = vcombine.low %v596, %v597
        %v3573 = vunpack.c.l.s4 1966171168
        %v3574 = vunpack.c.0.s8 %v3573
        %v3575 = vlaneseq
        %v3576 = vshrl.u32 %v3575, 7
        %v3577 = vsub.s32 %v3574, %v3576
        %v3578 = vrot.slane %v3568, %v3577
        %v3580 = vunpack.c.l.s4 1966171168
        %v3581 = vunpack.c.0.s8 %v3580
        %v3582 = vlaneseq
        %v3583 = vshrl.u32 %v3582, 7
        %v3584 = vsub.s32 %v3581, %v3583
        %v3585 = vrot.slane %v3569, %v3584
        %v3587 = vunpack.c.l.s4 1966171168
        %v3588 = vunpack.c.0.s8 %v3587
        %v3589 = vlaneseq
        %v3590 = vshrl.u32 %v3589, 7
        %v3591 = vsub.s32 %v3588, %v3590
        %v3592 = vrot.slane %v3570, %v3591
        %v3594 = vunpack.c.l.s4 1966171168
        %v3595 = vunpack.c.0.s8 %v3594
        %v3596 = vlaneseq
        %v3597 = vshrl.u32 %v3596, 7
        %v3598 = vsub.s32 %v3595, %v3597
        %v3599 = vrot.slane %v3571, %v3598
        %v3600 = vcombine.low %v3578, %v3585
        %v3601 = vcombine.low %v3592, %v3599
        %v3603 = vunpack.c.l.s4 1966171168
        %v3604 = vunpack.c.0.s8 %v3603
        %v3605 = vlaneseq
        %v3606 = vshrl.u32 %v3605, 7
        %v3607 = vsub.s32 %v3604, %v3606
        %v3608 = vrot.slane %v3600, %v3607
        %v3610 = vunpack.c.l.s4 1966171168
        %v3611 = vunpack.c.0.s8 %v3610
        %v3612 = vlaneseq
        %v3613 = vshrl.u32 %v3612, 7
        %v3614 = vsub.s32 %v3611, %v3613
        %v3615 = vrot.slane %v3601, %v3614
        %v3616 = vcombine.low %v3608, %v3615
        %v3617 = vcombine.low %v934, %v619
        %v3618 = vcombine.low %v620, %v621
        %v3619 = vcombine.low %v636, %v643
        %v3620 = vcombine.low %v644, %v935
        %v3622 = vunpack.c.l.s4 1966171168
        %v3623 = vunpack.c.0.s8 %v3622
        %v3624 = vlaneseq
        %v3625 = vshrl.u32 %v3624, 7
        %v3626 = vsub.s32 %v3623, %v3625
        %v3627 = vrot.slane %v3617, %v3626
        %v3629 = vunpack.c.l.s4 1966171168
        %v3630 = vunpack.c.0.s8 %v3629
        %v3631 = vlaneseq
        %v3632 = vshrl.u32 %v3631, 7
        %v3633 = vsub.s32 %v3630, %v3632
        %v3634 = vrot.slane %v3618, %v3633
        %v3636 = vunpack.c.l.s4 1966171168
        %v3637 = vunpack.c.0.s8 %v3636
        %v3638 = vlaneseq
        %v3639 = vshrl.u32 %v3638, 7
        %v3640 = vsub.s32 %v3637, %v3639
        %v3641 = vrot.slane %v3619, %v3640
        %v3643 = vunpack.c.l.s4 1966171168
        %v3644 = vunpack.c.0.s8 %v3643
        %v3645 = vlaneseq
        %v3646 = vshrl.u32 %v3645, 7
        %v3647 = vsub.s32 %v3644, %v3646
        %v3648 = vrot.slane %v3620, %v3647
        %v3649 = vcombine.low %v3627, %v3634
        %v3650 = vcombine.low %v3641, %v3648
        %v3652 = vunpack.c.l.s4 1966171168
        %v3653 = vunpack.c.0.s8 %v3652
        %v3654 = vlaneseq
        %v3655 = vshrl.u32 %v3654, 7
        %v3656 = vsub.s32 %v3653, %v3655
        %v3657 = vrot.slane %v3649, %v3656
        %v3659 = vunpack.c.l.s4 1966171168
        %v3660 = vunpack.c.0.s8 %v3659
        %v3661 = vlaneseq
        %v3662 = vshrl.u32 %v3661, 7
        %v3663 = vsub.s32 %v3660, %v3662
        %v3664 = vrot.slane %v3650, %v3663
        %v3665 = vcombine.low %v3657, %v3664
        %v3666 = vcombine.low %v666, %v667
        %v3667 = vcombine.low %v668, %v683
        %v3668 = vcombine.low %v690, %v691
        %v3669 = vcombine.low %v936, %v713
        %v3671 = vunpack.c.l.s4 1966171168
        %v3672 = vunpack.c.0.s8 %v3671
        %v3673 = vlaneseq
        %v3674 = vshrl.u32 %v3673, 7
        %v3675 = vsub.s32 %v3672, %v3674
        %v3676 = vrot.slane %v3666, %v3675
        %v3678 = vunpack.c.l.s4 1966171168
        %v3679 = vunpack.c.0.s8 %v3678
        %v3680 = vlaneseq
        %v3681 = vshrl.u32 %v3680, 7
        %v3682 = vsub.s32 %v3679, %v3681
        %v3683 = vrot.slane %v3667, %v3682
        %v3685 = vunpack.c.l.s4 1966171168
        %v3686 = vunpack.c.0.s8 %v3685
        %v3687 = vlaneseq
        %v3688 = vshrl.u32 %v3687, 7
        %v3689 = vsub.s32 %v3686, %v3688
        %v3690 = vrot.slane %v3668, %v3689
        %v3692 = vunpack.c.l.s4 1966171168
        %v3693 = vunpack.c.0.s8 %v3692
        %v3694 = vlaneseq
        %v3695 = vshrl.u32 %v3694, 7
        %v3696 = vsub.s32 %v3693, %v3695
        %v3697 = vrot.slane %v3669, %v3696
        %v3698 = vcombine.low %v3676, %v3683
        %v3699 = vcombine.low %v3690, %v3697
        %v3701 = vunpack.c.l.s4 1966171168
        %v3702 = vunpack.c.0.s8 %v3701
        %v3703 = vlaneseq
        %v3704 = vshrl.u32 %v3703, 7
        %v3705 = vsub.s32 %v3702, %v3704
        %v3706 = vrot.slane %v3698, %v3705
        %v3708 = vunpack.c.l.s4 1966171168
        %v3709 = vunpack.c.0.s8 %v3708
        %v3710 = vlaneseq
        %v3711 = vshrl.u32 %v3710, 7
        %v3712 = vsub.s32 %v3709, %v3711
        %v3713 = vrot.slane %v3699, %v3712
        %v3714 = vcombine.low %v3706, %v3713
        %v3715 = vcombine.low %v714, %v715
        %v3716 = vcombine.low %v730, %v737
        %v3717 = vcombine.low %v738, %v937
        %v3718 = vcombine.low %v760, %v761
        %v3720 = vunpack.c.l.s4 1966171168
        %v3721 = vunpack.c.0.s8 %v3720
        %v3722 = vlaneseq
        %v3723 = vshrl.u32 %v3722, 7
        %v3724 = vsub.s32 %v3721, %v3723
        %v3725 = vrot.slane %v3715, %v3724
        %v3727 = vunpack.c.l.s4 1966171168
        %v3728 = vunpack.c.0.s8 %v3727
        %v3729 = vlaneseq
        %v3730 = vshrl.u32 %v3729, 7
        %v3731 = vsub.s32 %v3728, %v3730
        %v3732 = vrot.slane %v3716, %v3731
        %v3734 = vunpack.c.l.s4 1966171168
        %v3735 = vunpack.c.0.s8 %v3734
        %v3736 = vlaneseq
        %v3737 = vshrl.u32 %v3736, 7
        %v3738 = vsub.s32 %v3735, %v3737
        %v3739 = vrot.slane %v3717, %v3738
        %v3741 = vunpack.c.l.s4 1966171168
        %v3742 = vunpack.c.0.s8 %v3741
        %v3743 = vlaneseq
        %v3744 = vshrl.u32 %v3743, 7
        %v3745 = vsub.s32 %v3742, %v3744
        %v3746 = vrot.slane %v3718, %v3745
        %v3747 = vcombine.low %v3725, %v3732
        %v3748 = vcombine.low %v3739, %v3746
        %v3750 = vunpack.c.l.s4 1966171168
        %v3751 = vunpack.c.0.s8 %v3750
        %v3752 = vlaneseq
        %v3753 = vshrl.u32 %v3752, 7
        %v3754 = vsub.s32 %v3751, %v3753
        %v3755 = vrot.slane %v3747, %v3754
        %v3757 = vunpack.c.l.s4 1966171168
        %v3758 = vunpack.c.0.s8 %v3757
        %v3759 = vlaneseq
        %v3760 = vshrl.u32 %v3759, 7
        %v3761 = vsub.s32 %v3758, %v3760
        %v3762 = vrot.slane %v3748, %v3761
        %v3763 = vcombine.low %v3755, %v3762
        %v3764 = vcombine.low %v762, %v777
        %v3765 = vcombine.low %v784, %v785
        %v3766 = vcombine.low %v938, %v807
        %v3767 = vcombine.low %v808, %v809
        %v3769 = vunpack.c.l.s4 1966171168
        %v3770 = vunpack.c.0.s8 %v3769
        %v3771 = vlaneseq
        %v3772 = vshrl.u32 %v3771, 7
        %v3773 = vsub.s32 %v3770, %v3772
        %v3774 = vrot.slane %v3764, %v3773
        %v3776 = vunpack.c.l.s4 1966171168
        %v3777 = vunpack.c.0.s8 %v3776
        %v3778 = vlaneseq
        %v3779 = vshrl.u32 %v3778, 7
        %v3780 = vsub.s32 %v3777, %v3779
        %v3781 = vrot.slane %v3765, %v3780
        %v3783 = vunpack.c.l.s4 1966171168
        %v3784 = vunpack.c.0.s8 %v3783
        %v3785 = vlaneseq
        %v3786 = vshrl.u32 %v3785, 7
        %v3787 = vsub.s32 %v3784, %v3786
        %v3788 = vrot.slane %v3766, %v3787
        %v3790 = vunpack.c.l.s4 1966171168
        %v3791 = vunpack.c.0.s8 %v3790
        %v3792 = vlaneseq
        %v3793 = vshrl.u32 %v3792, 7
        %v3794 = vsub.s32 %v3791, %v3793
        %v3795 = vrot.slane %v3767, %v3794
        %v3796 = vcombine.low %v3774, %v3781
        %v3797 = vcombine.low %v3788, %v3795
        %v3799 = vunpack.c.l.s4 1966171168
        %v3800 = vunpack.c.0.s8 %v3799
        %v3801 = vlaneseq
        %v3802 = vshrl.u32 %v3801, 7
        %v3803 = vsub.s32 %v3800, %v3802
        %v3804 = vrot.slane %v3796, %v3803
        %v3806 = vunpack.c.l.s4 1966171168
        %v3807 = vunpack.c.0.s8 %v3806
        %v3808 = vlaneseq
        %v3809 = vshrl.u32 %v3808, 7
        %v3810 = vsub.s32 %v3807, %v3809
        %v3811 = vrot.slane %v3797, %v3810
        %v3812 = vcombine.low %v3804, %v3811
        %v3813 = vcombine.low %v824, %v831
        %v3814 = vcombine.low %v832, %v939
        %v3815 = vcombine.low %v854, %v855
        %v3816 = vcombine.low %v856, %v871
        %v3818 = vunpack.c.l.s4 1966171168
        %v3819 = vunpack.c.0.s8 %v3818
        %v3820 = vlaneseq
        %v3821 = vshrl.u32 %v3820, 7
        %v3822 = vsub.s32 %v3819, %v3821
        %v3823 = vrot.slane %v3813, %v3822
        %v3825 = vunpack.c.l.s4 1966171168
        %v3826 = vunpack.c.0.s8 %v3825
        %v3827 = vlaneseq
        %v3828 = vshrl.u32 %v3827, 7
        %v3829 = vsub.s32 %v3826, %v3828
        %v3830 = vrot.slane %v3814, %v3829
        %v3832 = vunpack.c.l.s4 1966171168
        %v3833 = vunpack.c.0.s8 %v3832
        %v3834 = vlaneseq
        %v3835 = vshrl.u32 %v3834, 7
        %v3836 = vsub.s32 %v3833, %v3835
        %v3837 = vrot.slane %v3815, %v3836
        %v3839 = vunpack.c.l.s4 1966171168
        %v3840 = vunpack.c.0.s8 %v3839
        %v3841 = vlaneseq
        %v3842 = vshrl.u32 %v3841, 7
        %v3843 = vsub.s32 %v3840, %v3842
        %v3844 = vrot.slane %v3816, %v3843
        %v3845 = vcombine.low %v3823, %v3830
        %v3846 = vcombine.low %v3837, %v3844
        %v3848 = vunpack.c.l.s4 1966171168
        %v3849 = vunpack.c.0.s8 %v3848
        %v3850 = vlaneseq
        %v3851 = vshrl.u32 %v3850, 7
        %v3852 = vsub.s32 %v3849, %v3851
        %v3853 = vrot.slane %v3845, %v3852
        %v3855 = vunpack.c.l.s4 1966171168
        %v3856 = vunpack.c.0.s8 %v3855
        %v3857 = vlaneseq
        %v3858 = vshrl.u32 %v3857, 7
        %v3859 = vsub.s32 %v3856, %v3858
        %v3860 = vrot.slane %v3846, %v3859
        %v3861 = vcombine.low %v3853, %v3860
        %v3862 = vcombine.low %v878, %v879
        %v3863 = vcombine.low %v940, %v901
        %v3864 = vcombine.low %v902, %v903
        %v3865 = vcombine.low %v918, %v925
        %v3867 = vunpack.c.l.s4 1966171168
        %v3868 = vunpack.c.0.s8 %v3867
        %v3869 = vlaneseq
        %v3870 = vshrl.u32 %v3869, 7
        %v3871 = vsub.s32 %v3868, %v3870
        %v3872 = vrot.slane %v3862, %v3871
        %v3874 = vunpack.c.l.s4 1966171168
        %v3875 = vunpack.c.0.s8 %v3874
        %v3876 = vlaneseq
        %v3877 = vshrl.u32 %v3876, 7
        %v3878 = vsub.s32 %v3875, %v3877
        %v3879 = vrot.slane %v3863, %v3878
        %v3881 = vunpack.c.l.s4 1966171168
        %v3882 = vunpack.c.0.s8 %v3881
        %v3883 = vlaneseq
        %v3884 = vshrl.u32 %v3883, 7
        %v3885 = vsub.s32 %v3882, %v3884
        %v3886 = vrot.slane %v3864, %v3885
        %v3888 = vunpack.c.l.s4 1966171168
        %v3889 = vunpack.c.0.s8 %v3888
        %v3890 = vlaneseq
        %v3891 = vshrl.u32 %v3890, 7
        %v3892 = vsub.s32 %v3889, %v3891
        %v3893 = vrot.slane %v3865, %v3892
        %v3894 = vcombine.low %v3872, %v3879
        %v3895 = vcombine.low %v3886, %v3893
        %v3897 = vunpack.c.l.s4 1966171168
        %v3898 = vunpack.c.0.s8 %v3897
        %v3899 = vlaneseq
        %v3900 = vshrl.u32 %v3899, 7
        %v3901 = vsub.s32 %v3898, %v3900
        %v3902 = vrot.slane %v3894, %v3901
        %v3904 = vunpack.c.l.s4 1966171168
        %v3905 = vunpack.c.0.s8 %v3904
        %v3906 = vlaneseq
        %v3907 = vshrl.u32 %v3906, 7
        %v3908 = vsub.s32 %v3905, %v3907
        %v3909 = vrot.slane %v3895, %v3908
        %v3910 = vcombine.low %v3902, %v3909
        %v3911 = vcombine.low %v926, %v941
        %v3913 = vunpack.c.l.s4 1966171168
        %v3914 = vunpack.c.0.s8 %v3913
        %v3915 = vlaneseq
        %v3916 = vshrl.u32 %v3915, 7
        %v3917 = vsub.s32 %v3914, %v3916
        %v3918 = vrot.slane %v3911, %v3917
        %v3920 = vunpack.c.l.s4 1966171168
        %v3921 = vunpack.c.0.s8 %v3920
        %v3922 = vlaneseq
        %v3923 = vshrl.u32 %v3922, 7
        %v3924 = vsub.s32 %v3921, %v3923
        %v3925 = vrot.slane %v3918, %v3924
        %v3927 = vsel %vm2360, %v3371, 0
        %v3930 = vsel %vm2360, %v3420, 0
        %v3933 = vsel %vm2360, %v3469, 0
        %v3936 = vsel %vm2360, %v3518, 0
        %v3939 = vsel %vm2360, %v3567, 0
        %v3942 = vsel %vm2360, %v3616, 0
        %v3945 = vsel %vm2360, %v3665, 0
        %v3948 = vsel %vm2360, %v3714, 0
        %v3951 = vsel %vm2360, %v3763, 0
        %v3954 = vsel %vm2360, %v3812, 0
        %v3957 = vsel %vm2360, %v3861, 0
        %v3960 = vsel %vm2360, %v3910, 0
        %v3963 = vsel %vm2360, %v3925, 0
        %v3966 = vsel %vm2400, %v3322, 0
        %3968 = vmatprep.subr.bf16.mxu0 0
        %3969 = vmatpush1.bf16.msra.mxu0 %v3966
        %3970 = vmatprep.subr.bf16.mxu0 0
        %3971 = vmatpush1.bf16.msra.mxu0 0
        %3972 = vmatprep.subr.bf16.mxu0 0
        %3973 = vmatpush1.bf16.msra.mxu0 0
        %3974 = vmatprep.subr.bf16.mxu0 0
        %3975 = vmatpush1.bf16.msra.mxu0 0
        %3976 = vmatprep.subr.bf16.mxu0 0
        %3977 = vmatpush1.bf16.msra.mxu0 0
        %3978 = vmatprep.subr.bf16.mxu0 0
        %3979 = vmatpush1.bf16.msra.mxu0 0
        %3980 = vmatprep.subr.bf16.mxu0 0
        %3981 = vmatpush1.bf16.msra.mxu0 0
        %3982 = vmatprep.subr.bf16.mxu0 0
        %3983 = vmatpush1.bf16.msra.mxu0 0
        %3984 = vmatprep.subr.bf16.mxu0 0
        %3985 = vmatpush1.bf16.msra.mxu0 0
        %3986 = vmatprep.subr.bf16.mxu0 0
        %3987 = vmatpush1.bf16.msra.mxu0 0
        %3988 = vmatprep.subr.bf16.mxu0 0
        %3989 = vmatpush1.bf16.msra.mxu0 0
        %3990 = vmatprep.subr.bf16.mxu0 0
        %3991 = vmatpush1.bf16.msra.mxu0 0
        %3992 = vmatprep.subr.bf16.mxu0 0
        %3993 = vmatpush1.bf16.msra.mxu0 0
        %3994 = vmatprep.subr.bf16.mxu0 0
        %3995 = vmatpush1.bf16.msra.mxu0 0
        %3996 = vmatprep.subr.bf16.mxu0 0
        %3997 = vmatpush1.bf16.msra.mxu0 0
        %3998 = vmatprep.subr.bf16.mxu0 0
        %3999 = vmatpush1.bf16.msra.mxu0 0
        %4000 = vmatprep.mubr.bf16.mxu0 0
        %4001 = vmatmul.mubr.bf16.gmra.mrb[0].mxu0 %v3927
        %v4002 = vpop.f32.mrb[0].mxu0
        %v4003 = vadd.f32 0.0, %v4002
        %v4004 = vpop.f32.mrb[0].mxu0
        %v4005 = vpop.f32.mrb[0].mxu0
        %v4006 = vadd.f32 0.0, %v4005
        %v4007 = vpop.f32.mrb[0].mxu0
        %4008 = vmatprep.mubr.bf16.mxu0 0
        %4009 = vmatmul.mubr.bf16.gmra.mrb[0].mxu0 %v3930
        %v4010 = vpop.f32.mrb[0].mxu0
        %v4011 = vadd.f32 0.0, %v4010
        %v4012 = vpop.f32.mrb[0].mxu0
        %v4013 = vpop.f32.mrb[0].mxu0
        %v4014 = vadd.f32 0.0, %v4013
        %v4015 = vpop.f32.mrb[0].mxu0
        %4016 = vmatprep.mubr.bf16.mxu0 0
        %4017 = vmatmul.mubr.bf16.gmra.mrb[0].mxu0 %v3933
        %v4018 = vpop.f32.mrb[0].mxu0
        %v4019 = vadd.f32 0.0, %v4018
        %v4020 = vpop.f32.mrb[0].mxu0
        %v4021 = vpop.f32.mrb[0].mxu0
        %v4022 = vadd.f32 0.0, %v4021
        %v4023 = vpop.f32.mrb[0].mxu0
        %4024 = vmatprep.mubr.bf16.mxu0 0
        %4025 = vmatmul.mubr.bf16.gmra.mrb[0].mxu0 %v3936
        %v4026 = vpop.f32.mrb[0].mxu0
        %v4027 = vadd.f32 0.0, %v4026
        %v4028 = vpop.f32.mrb[0].mxu0
        %v4029 = vpop.f32.mrb[0].mxu0
        %v4030 = vadd.f32 0.0, %v4029
        %v4031 = vpop.f32.mrb[0].mxu0
        %4032 = vmatprep.mubr.bf16.mxu0 0
        %4033 = vmatmul.mubr.bf16.gmra.mrb[0].mxu0 %v3939
        %v4034 = vpop.f32.mrb[0].mxu0
        %v4035 = vadd.f32 0.0, %v4034
        %v4036 = vpop.f32.mrb[0].mxu0
        %v4037 = vpop.f32.mrb[0].mxu0
        %v4038 = vadd.f32 0.0, %v4037
        %v4039 = vpop.f32.mrb[0].mxu0
        %4040 = vmatprep.mubr.bf16.mxu0 0
        %4041 = vmatmul.mubr.bf16.gmra.mrb[0].mxu0 %v3942
        %v4042 = vpop.f32.mrb[0].mxu0
        %v4043 = vadd.f32 0.0, %v4042
        %v4044 = vpop.f32.mrb[0].mxu0
        %v4045 = vpop.f32.mrb[0].mxu0
        %v4046 = vadd.f32 0.0, %v4045
        %v4047 = vpop.f32.mrb[0].mxu0
        %4048 = vmatprep.mubr.bf16.mxu0 0
        %4049 = vmatmul.mubr.bf16.gmra.mrb[0].mxu0 %v3945
        %v4050 = vpop.f32.mrb[0].mxu0
        %v4051 = vadd.f32 0.0, %v4050
        %v4052 = vpop.f32.mrb[0].mxu0
        %v4053 = vpop.f32.mrb[0].mxu0
        %v4054 = vadd.f32 0.0, %v4053
        %v4055 = vpop.f32.mrb[0].mxu0
        %4056 = vmatprep.mubr.bf16.mxu0 0
        %4057 = vmatmul.mubr.bf16.gmra.mrb[0].mxu0 %v3948
        %v4058 = vpop.f32.mrb[0].mxu0
        %v4059 = vadd.f32 0.0, %v4058
        %v4060 = vpop.f32.mrb[0].mxu0
        %v4061 = vpop.f32.mrb[0].mxu0
        %v4062 = vadd.f32 0.0, %v4061
        %v4063 = vpop.f32.mrb[0].mxu0
        %4064 = vmatprep.mubr.bf16.mxu0 0
        %4065 = vmatmul.mubr.bf16.gmra.mrb[0].mxu0 %v3951
        %v4066 = vpop.f32.mrb[0].mxu0
        %v4067 = vadd.f32 0.0, %v4066
        %v4068 = vpop.f32.mrb[0].mxu0
        %v4069 = vpop.f32.mrb[0].mxu0
        %v4070 = vadd.f32 0.0, %v4069
        %v4071 = vpop.f32.mrb[0].mxu0
        %4072 = vmatprep.mubr.bf16.mxu0 0
        %4073 = vmatmul.mubr.bf16.gmra.mrb[0].mxu0 %v3954
        %v4074 = vpop.f32.mrb[0].mxu0
        %v4075 = vadd.f32 0.0, %v4074
        %v4076 = vpop.f32.mrb[0].mxu0
        %v4077 = vpop.f32.mrb[0].mxu0
        %v4078 = vadd.f32 0.0, %v4077
        %v4079 = vpop.f32.mrb[0].mxu0
        %4080 = vmatprep.mubr.bf16.mxu0 0
        %4081 = vmatmul.mubr.bf16.gmra.mrb[0].mxu0 %v3957
        %v4082 = vpop.f32.mrb[0].mxu0
        %v4083 = vadd.f32 0.0, %v4082
        %v4084 = vpop.f32.mrb[0].mxu0
        %v4085 = vpop.f32.mrb[0].mxu0
        %v4086 = vadd.f32 0.0, %v4085
        %v4087 = vpop.f32.mrb[0].mxu0
        %4088 = vmatprep.mubr.bf16.mxu0 0
        %4089 = vmatmul.mubr.bf16.gmra.mrb[0].mxu0 %v3960
        %v4090 = vpop.f32.mrb[0].mxu0
        %v4091 = vadd.f32 0.0, %v4090
        %v4092 = vpop.f32.mrb[0].mxu0
        %v4093 = vpop.f32.mrb[0].mxu0
        %v4094 = vadd.f32 0.0, %v4093
        %v4095 = vpop.f32.mrb[0].mxu0
        %4096 = vmatprep.mubr.bf16.mxu0 0
        %4097 = vmatmul.mubr.bf16.gmra.mrb[0].mxu0 %v3963
        %v4098 = vpop.f32.mrb[0].mxu0
        %v4099 = vadd.f32 0.0, %v4098
        %v4100 = vpop.f32.mrb[0].mxu0
        %v4101 = vpop.f32.mrb[0].mxu0
        %v4102 = vpop.f32.mrb[0].mxu0
        %4103 = vdwg.mxu0
        %v4104 = vadd.f32 %v3220, %v4003
        %v4105 = vadd.f32 %v3223, %v4006
        %v4106 = vadd.f32 %v3228, %v4011
        %v4107 = vadd.f32 %v3231, %v4014
        %v4108 = vadd.f32 %v3236, %v4019
        %v4109 = vadd.f32 %v3239, %v4022
        %v4110 = vadd.f32 %v3244, %v4027
        %v4111 = vadd.f32 %v3247, %v4030
        %v4112 = vadd.f32 %v3252, %v4035
        %v4113 = vadd.f32 %v3255, %v4038
        %v4114 = vadd.f32 %v3260, %v4043
        %v4115 = vadd.f32 %v3263, %v4046
        %v4116 = vadd.f32 %v3268, %v4051
        %v4117 = vadd.f32 %v3271, %v4054
        %v4118 = vadd.f32 %v3276, %v4059
        %v4119 = vadd.f32 %v3279, %v4062
        %v4120 = vadd.f32 %v3284, %v4067
        %v4121 = vadd.f32 %v3287, %v4070
        %v4122 = vadd.f32 %v3292, %v4075
        %v4123 = vadd.f32 %v3295, %v4078
        %v4124 = vadd.f32 %v3300, %v4083
        %v4125 = vadd.f32 %v3303, %v4086
        %v4126 = vadd.f32 %v3308, %v4091
        %v4127 = vadd.f32 %v3311, %v4094
        %v4128 = vadd.f32 %v3316, %v4099
        %v4132 = vunpack.c.l.s4 1966171168
        %v4133 = vunpack.c.0.s8 %v4132
        %v4134 = vlaneseq
        %v4135 = vshrl.u32 %v4134, 7
        %v4136 = vsub.s32 %v4133, %v4135
        %v4137 = vrot.slane %v237, %v4136
        %v4138 = vcombine.high %v4137, %v4137
        %v4140 = vunpack.c.l.s4 1966171168
        %v4141 = vunpack.c.0.s8 %v4140
        %v4142 = vlaneseq
        %v4143 = vshrl.u32 %v4142, 7
        %v4144 = vsub.s32 %v4141, %v4143
        %v4145 = vrot.slane %v4137, %v4144
        %v4147 = vunpack.c.l.s4 1966171168
        %v4148 = vunpack.c.0.s8 %v4147
        %v4149 = vlaneseq
        %v4150 = vshrl.u32 %v4149, 7
        %v4151 = vsub.s32 %v4148, %v4150
        %v4152 = vrot.slane %v4138, %v4151
        %v4153 = vcombine.high %v4145, %v4145
        %v4154 = vcombine.high %v4152, %v4152
        %v4156 = vunpack.c.l.s4 1966171168
        %v4157 = vunpack.c.0.s8 %v4156
        %v4158 = vlaneseq
        %v4159 = vshrl.u32 %v4158, 7
        %v4160 = vsub.s32 %v4157, %v4159
        %v4161 = vrot.slane %v238, %v4160
        %v4162 = vcombine.high %v4161, %v4161
        %v4164 = vunpack.c.l.s4 1966171168
        %v4165 = vunpack.c.0.s8 %v4164
        %v4166 = vlaneseq
        %v4167 = vshrl.u32 %v4166, 7
        %v4168 = vsub.s32 %v4165, %v4167
        %v4169 = vrot.slane %v4161, %v4168
        %v4171 = vunpack.c.l.s4 1966171168
        %v4172 = vunpack.c.0.s8 %v4171
        %v4173 = vlaneseq
        %v4174 = vshrl.u32 %v4173, 7
        %v4175 = vsub.s32 %v4172, %v4174
        %v4176 = vrot.slane %v4162, %v4175
        %v4177 = vcombine.high %v4169, %v4169
        %s4178 = scalar_lea.vmem [#allocation5], 6
        %v4179 = vld [vmem:[%s4178] sm:$0x3]
        %v4180 = vcombine.low %v330, %v337
        %v4181 = vcombine.low %v362, %v377
        %v4183 = vunpack.c.l.s4 1966171168
        %v4184 = vunpack.c.0.s8 %v4183
        %v4185 = vlaneseq
        %v4186 = vshrl.u32 %v4185, 7
        %v4187 = vsub.s32 %v4184, %v4186
        %v4188 = vrot.slane %v4180, %v4187
        %v4190 = vunpack.c.l.s4 1966171168
        %v4191 = vunpack.c.0.s8 %v4190
        %v4192 = vlaneseq
        %v4193 = vshrl.u32 %v4192, 7
        %v4194 = vsub.s32 %v4191, %v4193
        %v4195 = vrot.slane %v4181, %v4194
        %v4196 = vcombine.low %v4188, %v3382
        %v4197 = vcombine.low %v3389, %v4195
        %v4199 = vunpack.c.l.s4 1966171168
        %v4200 = vunpack.c.0.s8 %v4199
        %v4201 = vlaneseq
        %v4202 = vshrl.u32 %v4201, 7
        %v4203 = vsub.s32 %v4200, %v4202
        %v4204 = vrot.slane %v4196, %v4203
        %v4206 = vunpack.c.l.s4 1966171168
        %v4207 = vunpack.c.0.s8 %v4206
        %v4208 = vlaneseq
        %v4209 = vshrl.u32 %v4208, 7
        %v4210 = vsub.s32 %v4207, %v4209
        %v4211 = vrot.slane %v4197, %v4210
        %v4212 = vcombine.low %v4204, %v4211
        %v4213 = vcombine.low %v424, %v431
        %v4215 = vunpack.c.l.s4 1966171168
        %v4216 = vunpack.c.0.s8 %v4215
        %v4217 = vlaneseq
        %v4218 = vshrl.u32 %v4217, 7
        %v4219 = vsub.s32 %v4216, %v4218
        %v4220 = vrot.slane %v4213, %v4219
        %v4221 = vcombine.low %v3403, %v3431
        %v4222 = vcombine.low %v3438, %v4220
        %v4224 = vunpack.c.l.s4 1966171168
        %v4225 = vunpack.c.0.s8 %v4224
        %v4226 = vlaneseq
        %v4227 = vshrl.u32 %v4226, 7
        %v4228 = vsub.s32 %v4225, %v4227
        %v4229 = vrot.slane %v4221, %v4228
        %v4231 = vunpack.c.l.s4 1966171168
        %v4232 = vunpack.c.0.s8 %v4231
        %v4233 = vlaneseq
        %v4234 = vshrl.u32 %v4233, 7
        %v4235 = vsub.s32 %v4232, %v4234
        %v4236 = vrot.slane %v4222, %v4235
        %v4237 = vcombine.low %v4229, %v4236
        %v4238 = vcombine.low %v456, %v471
        %v4240 = vunpack.c.l.s4 1966171168
        %v4241 = vunpack.c.0.s8 %v4240
        %v4242 = vlaneseq
        %v4243 = vshrl.u32 %v4242, 7
        %v4244 = vsub.s32 %v4241, %v4243
        %v4245 = vrot.slane %v4238, %v4244
        %v4246 = vcombine.low %v3452, %v3480
        %v4247 = vcombine.low %v4245, %v3494
        %v4249 = vunpack.c.l.s4 1966171168
        %v4250 = vunpack.c.0.s8 %v4249
        %v4251 = vlaneseq
        %v4252 = vshrl.u32 %v4251, 7
        %v4253 = vsub.s32 %v4250, %v4252
        %v4254 = vrot.slane %v4246, %v4253
        %v4256 = vunpack.c.l.s4 1966171168
        %v4257 = vunpack.c.0.s8 %v4256
        %v4258 = vlaneseq
        %v4259 = vshrl.u32 %v4258, 7
        %v4260 = vsub.s32 %v4257, %v4259
        %v4261 = vrot.slane %v4247, %v4260
        %v4262 = vcombine.low %v4254, %v4261
        %v4263 = vcombine.low %v518, %v525
        %v4265 = vunpack.c.l.s4 1966171168
        %v4266 = vunpack.c.0.s8 %v4265
        %v4267 = vlaneseq
        %v4268 = vshrl.u32 %v4267, 7
        %v4269 = vsub.s32 %v4266, %v4268
        %v4270 = vrot.slane %v4263, %v4269
        %v4271 = vcombine.low %v3501, %v3529
        %v4272 = vcombine.low %v4270, %v3543
        %v4274 = vunpack.c.l.s4 1966171168
        %v4275 = vunpack.c.0.s8 %v4274
        %v4276 = vlaneseq
        %v4277 = vshrl.u32 %v4276, 7
        %v4278 = vsub.s32 %v4275, %v4277
        %v4279 = vrot.slane %v4271, %v4278
        %v4281 = vunpack.c.l.s4 1966171168
        %v4282 = vunpack.c.0.s8 %v4281
        %v4283 = vlaneseq
        %v4284 = vshrl.u32 %v4283, 7
        %v4285 = vsub.s32 %v4282, %v4284
        %v4286 = vrot.slane %v4272, %v4285
        %v4287 = vcombine.low %v4279, %v4286
        %v4288 = vcombine.low %v550, %v565
        %v4290 = vunpack.c.l.s4 1966171168
        %v4291 = vunpack.c.0.s8 %v4290
        %v4292 = vlaneseq
        %v4293 = vshrl.u32 %v4292, 7
        %v4294 = vsub.s32 %v4291, %v4293
        %v4295 = vrot.slane %v4288, %v4294
        %v4296 = vcombine.low %v3550, %v4295
        %v4297 = vcombine.low %v3585, %v3592
        %v4299 = vunpack.c.l.s4 1966171168
        %v4300 = vunpack.c.0.s8 %v4299
        %v4301 = vlaneseq
        %v4302 = vshrl.u32 %v4301, 7
        %v4303 = vsub.s32 %v4300, %v4302
        %v4304 = vrot.slane %v4296, %v4303
        %v4306 = vunpack.c.l.s4 1966171168
        %v4307 = vunpack.c.0.s8 %v4306
        %v4308 = vlaneseq
        %v4309 = vshrl.u32 %v4308, 7
        %v4310 = vsub.s32 %v4307, %v4309
        %v4311 = vrot.slane %v4297, %v4310
        %v4312 = vcombine.low %v4304, %v4311
        %v4313 = vcombine.low %v612, %v619
        %v4315 = vunpack.c.l.s4 1966171168
        %v4316 = vunpack.c.0.s8 %v4315
        %v4317 = vlaneseq
        %v4318 = vshrl.u32 %v4317, 7
        %v4319 = vsub.s32 %v4316, %v4318
        %v4320 = vrot.slane %v4313, %v4319
        %v4321 = vcombine.low %v3599, %v4320
        %v4322 = vcombine.low %v3634, %v3641
        %v4324 = vunpack.c.l.s4 1966171168
        %v4325 = vunpack.c.0.s8 %v4324
        %v4326 = vlaneseq
        %v4327 = vshrl.u32 %v4326, 7
        %v4328 = vsub.s32 %v4325, %v4327
        %v4329 = vrot.slane %v4321, %v4328
        %v4331 = vunpack.c.l.s4 1966171168
        %v4332 = vunpack.c.0.s8 %v4331
        %v4333 = vlaneseq
        %v4334 = vshrl.u32 %v4333, 7
        %v4335 = vsub.s32 %v4332, %v4334
        %v4336 = vrot.slane %v4322, %v4335
        %v4337 = vcombine.low %v4329, %v4336
        %v4338 = vcombine.low %v644, %v659
        %v4340 = vunpack.c.l.s4 1966171168
        %v4341 = vunpack.c.0.s8 %v4340
        %v4342 = vlaneseq
        %v4343 = vshrl.u32 %v4342, 7
        %v4344 = vsub.s32 %v4341, %v4343
        %v4345 = vrot.slane %v4338, %v4344
        %v4346 = vcombine.low %v4345, %v3676
        %v4347 = vcombine.low %v3683, %v3690
        %v4349 = vunpack.c.l.s4 1966171168
        %v4350 = vunpack.c.0.s8 %v4349
        %v4351 = vlaneseq
        %v4352 = vshrl.u32 %v4351, 7
        %v4353 = vsub.s32 %v4350, %v4352
        %v4354 = vrot.slane %v4346, %v4353
        %v4356 = vunpack.c.l.s4 1966171168
        %v4357 = vunpack.c.0.s8 %v4356
        %v4358 = vlaneseq
        %v4359 = vshrl.u32 %v4358, 7
        %v4360 = vsub.s32 %v4357, %v4359
        %v4361 = vrot.slane %v4347, %v4360
        %v4362 = vcombine.low %v4354, %v4361
        %v4363 = vcombine.low %v706, %v713
        %v4364 = vcombine.low %v738, %v753
        %v4366 = vunpack.c.l.s4 1966171168
        %v4367 = vunpack.c.0.s8 %v4366
        %v4368 = vlaneseq
        %v4369 = vshrl.u32 %v4368, 7
        %v4370 = vsub.s32 %v4367, %v4369
        %v4371 = vrot.slane %v4363, %v4370
        %v4373 = vunpack.c.l.s4 1966171168
        %v4374 = vunpack.c.0.s8 %v4373
        %v4375 = vlaneseq
        %v4376 = vshrl.u32 %v4375, 7
        %v4377 = vsub.s32 %v4374, %v4376
        %v4378 = vrot.slane %v4364, %v4377
        %v4379 = vcombine.low %v4371, %v3725
        %v4380 = vcombine.low %v3732, %v4378
        %v4382 = vunpack.c.l.s4 1966171168
        %v4383 = vunpack.c.0.s8 %v4382
        %v4384 = vlaneseq
        %v4385 = vshrl.u32 %v4384, 7
        %v4386 = vsub.s32 %v4383, %v4385
        %v4387 = vrot.slane %v4379, %v4386
        %v4389 = vunpack.c.l.s4 1966171168
        %v4390 = vunpack.c.0.s8 %v4389
        %v4391 = vlaneseq
        %v4392 = vshrl.u32 %v4391, 7
        %v4393 = vsub.s32 %v4390, %v4392
        %v4394 = vrot.slane %v4380, %v4393
        %v4395 = vcombine.low %v4387, %v4394
        %v4396 = vcombine.low %v800, %v807
        %v4398 = vunpack.c.l.s4 1966171168
        %v4399 = vunpack.c.0.s8 %v4398
        %v4400 = vlaneseq
        %v4401 = vshrl.u32 %v4400, 7
        %v4402 = vsub.s32 %v4399, %v4401
        %v4403 = vrot.slane %v4396, %v4402
        %v4404 = vcombine.low %v3746, %v3774
        %v4405 = vcombine.low %v3781, %v4403
        %v4407 = vunpack.c.l.s4 1966171168
        %v4408 = vunpack.c.0.s8 %v4407
        %v4409 = vlaneseq
        %v4410 = vshrl.u32 %v4409, 7
        %v4411 = vsub.s32 %v4408, %v4410
        %v4412 = vrot.slane %v4404, %v4411
        %v4414 = vunpack.c.l.s4 1966171168
        %v4415 = vunpack.c.0.s8 %v4414
        %v4416 = vlaneseq
        %v4417 = vshrl.u32 %v4416, 7
        %v4418 = vsub.s32 %v4415, %v4417
        %v4419 = vrot.slane %v4405, %v4418
        %v4420 = vcombine.low %v4412, %v4419
        %v4421 = vcombine.low %v832, %v847
        %v4423 = vunpack.c.l.s4 1966171168
        %v4424 = vunpack.c.0.s8 %v4423
        %v4425 = vlaneseq
        %v4426 = vshrl.u32 %v4425, 7
        %v4427 = vsub.s32 %v4424, %v4426
        %v4428 = vrot.slane %v4421, %v4427
        %v4429 = vcombine.low %v3795, %v3823
        %v4430 = vcombine.low %v4428, %v3837
        %v4432 = vunpack.c.l.s4 1966171168
        %v4433 = vunpack.c.0.s8 %v4432
        %v4434 = vlaneseq
        %v4435 = vshrl.u32 %v4434, 7
        %v4436 = vsub.s32 %v4433, %v4435
        %v4437 = vrot.slane %v4429, %v4436
        %v4439 = vunpack.c.l.s4 1966171168
        %v4440 = vunpack.c.0.s8 %v4439
        %v4441 = vlaneseq
        %v4442 = vshrl.u32 %v4441, 7
        %v4443 = vsub.s32 %v4440, %v4442
        %v4444 = vrot.slane %v4430, %v4443
        %v4445 = vcombine.low %v4437, %v4444
        %v4446 = vcombine.low %v894, %v901
        %v4448 = vunpack.c.l.s4 1966171168
        %v4449 = vunpack.c.0.s8 %v4448
        %v4450 = vlaneseq
        %v4451 = vshrl.u32 %v4450, 7
        %v4452 = vsub.s32 %v4449, %v4451
        %v4453 = vrot.slane %v4446, %v4452
        %v4454 = vcombine.low %v3844, %v3872
        %v4455 = vcombine.low %v4453, %v3886
        %v4457 = vunpack.c.l.s4 1966171168
        %v4458 = vunpack.c.0.s8 %v4457
        %v4459 = vlaneseq
        %v4460 = vshrl.u32 %v4459, 7
        %v4461 = vsub.s32 %v4458, %v4460
        %v4462 = vrot.slane %v4454, %v4461
        %v4464 = vunpack.c.l.s4 1966171168
        %v4465 = vunpack.c.0.s8 %v4464
        %v4466 = vlaneseq
        %v4467 = vshrl.u32 %v4466, 7
        %v4468 = vsub.s32 %v4465, %v4467
        %v4469 = vrot.slane %v4455, %v4468
        %v4470 = vcombine.low %v4462, %v4469
        %v4471 = vcombine.low %v926, %v4145
        %v4472 = vcombine.low %v4152, %v4153
        %v4473 = vcombine.low %v4154, %v4169
        %v4475 = vunpack.c.l.s4 1966171168
        %v4476 = vunpack.c.0.s8 %v4475
        %v4477 = vlaneseq
        %v4478 = vshrl.u32 %v4477, 7
        %v4479 = vsub.s32 %v4476, %v4478
        %v4480 = vrot.slane %v4471, %v4479
        %v4482 = vunpack.c.l.s4 1966171168
        %v4483 = vunpack.c.0.s8 %v4482
        %v4484 = vlaneseq
        %v4485 = vshrl.u32 %v4484, 7
        %v4486 = vsub.s32 %v4483, %v4485
        %v4487 = vrot.slane %v4472, %v4486
        %v4489 = vunpack.c.l.s4 1966171168
        %v4490 = vunpack.c.0.s8 %v4489
        %v4491 = vlaneseq
        %v4492 = vshrl.u32 %v4491, 7
        %v4493 = vsub.s32 %v4490, %v4492
        %v4494 = vrot.slane %v4473, %v4493
        %v4495 = vcombine.low %v3893, %v4480
        %v4496 = vcombine.low %v4487, %v4494
        %v4498 = vunpack.c.l.s4 1966171168
        %v4499 = vunpack.c.0.s8 %v4498
        %v4500 = vlaneseq
        %v4501 = vshrl.u32 %v4500, 7
        %v4502 = vsub.s32 %v4499, %v4501
        %v4503 = vrot.slane %v4495, %v4502
        %v4505 = vunpack.c.l.s4 1966171168
        %v4506 = vunpack.c.0.s8 %v4505
        %v4507 = vlaneseq
        %v4508 = vshrl.u32 %v4507, 7
        %v4509 = vsub.s32 %v4506, %v4508
        %v4510 = vrot.slane %v4496, %v4509
        %v4511 = vcombine.low %v4503, %v4510
        %v4512 = vcombine.low %v4176, %v4177
        %v4514 = vunpack.c.l.s4 1966171168
        %v4515 = vunpack.c.0.s8 %v4514
        %v4516 = vlaneseq
        %v4517 = vshrl.u32 %v4516, 7
        %v4518 = vsub.s32 %v4515, %v4517
        %v4519 = vrot.slane %v4512, %v4518
        %v4521 = vunpack.c.l.s4 1966171168
        %v4522 = vunpack.c.0.s8 %v4521
        %v4523 = vlaneseq
        %v4524 = vshrl.u32 %v4523, 7
        %v4525 = vsub.s32 %v4522, %v4524
        %v4526 = vrot.slane %v4519, %v4525
        %v4528 = vsel %vm2360, %v4212, 0
        %v4531 = vsel %vm2360, %v4237, 0
        %v4534 = vsel %vm2360, %v4262, 0
        %v4537 = vsel %vm2360, %v4287, 0
        %v4540 = vsel %vm2360, %v4312, 0
        %v4543 = vsel %vm2360, %v4337, 0
        %v4546 = vsel %vm2360, %v4362, 0
        %v4549 = vsel %vm2360, %v4395, 0
        %v4552 = vsel %vm2360, %v4420, 0
        %v4555 = vsel %vm2360, %v4445, 0
        %v4558 = vsel %vm2360, %v4470, 0
        %v4561 = vsel %vm2360, %v4511, 0
        %v4564 = vsel %vm2360, %v4526, 0
        %v4567 = vsel %vm2400, %v4179, 0
        %4569 = vmatprep.subr.bf16.mxu0 0
        %4570 = vmatpush1.bf16.msra.mxu0 %v4567
        %4571 = vmatprep.subr.bf16.mxu0 0
        %4572 = vmatpush1.bf16.msra.mxu0 0
        %4573 = vmatprep.subr.bf16.mxu0 0
        %4574 = vmatpush1.bf16.msra.mxu0 0
        %4575 = vmatprep.subr.bf16.mxu0 0
        %4576 = vmatpush1.bf16.msra.mxu0 0
        %4577 = vmatprep.subr.bf16.mxu0 0
        %4578 = vmatpush1.bf16.msra.mxu0 0
        %4579 = vmatprep.subr.bf16.mxu0 0
        %4580 = vmatpush1.bf16.msra.mxu0 0
        %4581 = vmatprep.subr.bf16.mxu0 0
        %4582 = vmatpush1.bf16.msra.mxu0 0
        %4583 = vmatprep.subr.bf16.mxu0 0
        %4584 = vmatpush1.bf16.msra.mxu0 0
        %4585 = vmatprep.subr.bf16.mxu0 0
        %4586 = vmatpush1.bf16.msra.mxu0 0
        %4587 = vmatprep.subr.bf16.mxu0 0
        %4588 = vmatpush1.bf16.msra.mxu0 0
        %4589 = vmatprep.subr.bf16.mxu0 0
        %4590 = vmatpush1.bf16.msra.mxu0 0
        %4591 = vmatprep.subr.bf16.mxu0 0
        %4592 = vmatpush1.bf16.msra.mxu0 0
        %4593 = vmatprep.subr.bf16.mxu0 0
        %4594 = vmatpush1.bf16.msra.mxu0 0
        %4595 = vmatprep.subr.bf16.mxu0 0
        %4596 = vmatpush1.bf16.msra.mxu0 0
        %4597 = vmatprep.subr.bf16.mxu0 0
        %4598 = vmatpush1.bf16.msra.mxu0 0
        %4599 = vmatprep.subr.bf16.mxu0 0
        %4600 = vmatpush1.bf16.msra.mxu0 0
        %4601 = vmatprep.mubr.bf16.mxu0 0
        %4602 = vmatmul.mubr.bf16.gmra.mrb[0].mxu0 %v4528
        %v4603 = vpop.f32.mrb[0].mxu0
        %v4604 = vadd.f32 0.0, %v4603
        %v4605 = vpop.f32.mrb[0].mxu0
        %v4606 = vpop.f32.mrb[0].mxu0
        %v4607 = vadd.f32 0.0, %v4606
        %v4608 = vpop.f32.mrb[0].mxu0
        %4609 = vmatprep.mubr.bf16.mxu0 0
        %4610 = vmatmul.mubr.bf16.gmra.mrb[0].mxu0 %v4531
        %v4611 = vpop.f32.mrb[0].mxu0
        %v4612 = vadd.f32 0.0, %v4611
        %v4613 = vpop.f32.mrb[0].mxu0
        %v4614 = vpop.f32.mrb[0].mxu0
        %v4615 = vadd.f32 0.0, %v4614
        %v4616 = vpop.f32.mrb[0].mxu0
        %4617 = vmatprep.mubr.bf16.mxu0 0
        %4618 = vmatmul.mubr.bf16.gmra.mrb[0].mxu0 %v4534
        %v4619 = vpop.f32.mrb[0].mxu0
        %v4620 = vadd.f32 0.0, %v4619
        %v4621 = vpop.f32.mrb[0].mxu0
        %v4622 = vpop.f32.mrb[0].mxu0
        %v4623 = vadd.f32 0.0, %v4622
        %v4624 = vpop.f32.mrb[0].mxu0
        %4625 = vmatprep.mubr.bf16.mxu0 0
        %4626 = vmatmul.mubr.bf16.gmra.mrb[0].mxu0 %v4537
        %v4627 = vpop.f32.mrb[0].mxu0
        %v4628 = vadd.f32 0.0, %v4627
        %v4629 = vpop.f32.mrb[0].mxu0
        %v4630 = vpop.f32.mrb[0].mxu0
        %v4631 = vadd.f32 0.0, %v4630
        %v4632 = vpop.f32.mrb[0].mxu0
        %4633 = vmatprep.mubr.bf16.mxu0 0
        %4634 = vmatmul.mubr.bf16.gmra.mrb[0].mxu0 %v4540
        %v4635 = vpop.f32.mrb[0].mxu0
        %v4636 = vadd.f32 0.0, %v4635
        %v4637 = vpop.f32.mrb[0].mxu0
        %v4638 = vpop.f32.mrb[0].mxu0
        %v4639 = vadd.f32 0.0, %v4638
        %v4640 = vpop.f32.mrb[0].mxu0
        %4641 = vmatprep.mubr.bf16.mxu0 0
        %4642 = vmatmul.mubr.bf16.gmra.mrb[0].mxu0 %v4543
        %v4643 = vpop.f32.mrb[0].mxu0
        %v4644 = vadd.f32 0.0, %v4643
        %v4645 = vpop.f32.mrb[0].mxu0
        %v4646 = vpop.f32.mrb[0].mxu0
        %v4647 = vadd.f32 0.0, %v4646
        %v4648 = vpop.f32.mrb[0].mxu0
        %4649 = vmatprep.mubr.bf16.mxu0 0
        %4650 = vmatmul.mubr.bf16.gmra.mrb[0].mxu0 %v4546
        %v4651 = vpop.f32.mrb[0].mxu0
        %v4652 = vadd.f32 0.0, %v4651
        %v4653 = vpop.f32.mrb[0].mxu0
        %v4654 = vpop.f32.mrb[0].mxu0
        %v4655 = vadd.f32 0.0, %v4654
        %v4656 = vpop.f32.mrb[0].mxu0
        %4657 = vmatprep.mubr.bf16.mxu0 0
        %4658 = vmatmul.mubr.bf16.gmra.mrb[0].mxu0 %v4549
        %v4659 = vpop.f32.mrb[0].mxu0
        %v4660 = vadd.f32 0.0, %v4659
        %v4661 = vpop.f32.mrb[0].mxu0
        %v4662 = vpop.f32.mrb[0].mxu0
        %v4663 = vadd.f32 0.0, %v4662
        %v4664 = vpop.f32.mrb[0].mxu0
        %4665 = vmatprep.mubr.bf16.mxu0 0
        %4666 = vmatmul.mubr.bf16.gmra.mrb[0].mxu0 %v4552
        %v4667 = vpop.f32.mrb[0].mxu0
        %v4668 = vadd.f32 0.0, %v4667
        %v4669 = vpop.f32.mrb[0].mxu0
        %v4670 = vpop.f32.mrb[0].mxu0
        %v4671 = vadd.f32 0.0, %v4670
        %v4672 = vpop.f32.mrb[0].mxu0
        %4673 = vmatprep.mubr.bf16.mxu0 0
        %4674 = vmatmul.mubr.bf16.gmra.mrb[0].mxu0 %v4555
        %v4675 = vpop.f32.mrb[0].mxu0
        %v4676 = vadd.f32 0.0, %v4675
        %v4677 = vpop.f32.mrb[0].mxu0
        %v4678 = vpop.f32.mrb[0].mxu0
        %v4679 = vadd.f32 0.0, %v4678
        %v4680 = vpop.f32.mrb[0].mxu0
        %4681 = vmatprep.mubr.bf16.mxu0 0
        %4682 = vmatmul.mubr.bf16.gmra.mrb[0].mxu0 %v4558
        %v4683 = vpop.f32.mrb[0].mxu0
        %v4684 = vadd.f32 0.0, %v4683
        %v4685 = vpop.f32.mrb[0].mxu0
        %v4686 = vpop.f32.mrb[0].mxu0
        %v4687 = vadd.f32 0.0, %v4686
        %v4688 = vpop.f32.mrb[0].mxu0
        %4689 = vmatprep.mubr.bf16.mxu0 0
        %4690 = vmatmul.mubr.bf16.gmra.mrb[0].mxu0 %v4561
        %v4691 = vpop.f32.mrb[0].mxu0
        %v4692 = vadd.f32 0.0, %v4691
        %v4693 = vpop.f32.mrb[0].mxu0
        %v4694 = vpop.f32.mrb[0].mxu0
        %v4695 = vadd.f32 0.0, %v4694
        %v4696 = vpop.f32.mrb[0].mxu0
        %4697 = vmatprep.mubr.bf16.mxu0 0
        %4698 = vmatmul.mubr.bf16.gmra.mrb[0].mxu0 %v4564
        %v4699 = vpop.f32.mrb[0].mxu0
        %v4700 = vadd.f32 0.0, %v4699
        %v4701 = vpop.f32.mrb[0].mxu0
        %v4702 = vpop.f32.mrb[0].mxu0
        %v4703 = vpop.f32.mrb[0].mxu0
        %4704 = vdwg.mxu0
        %v4705 = vadd.f32 %v4104, %v4604
        %v4706 = vadd.f32 %v4105, %v4607
        %v4707 = vadd.f32 %v4106, %v4612
        %v4708 = vadd.f32 %v4107, %v4615
        %v4709 = vadd.f32 %v4108, %v4620
        %v4710 = vadd.f32 %v4109, %v4623
        %v4711 = vadd.f32 %v4110, %v4628
        %v4712 = vadd.f32 %v4111, %v4631
        %v4713 = vadd.f32 %v4112, %v4636
        %v4714 = vadd.f32 %v4113, %v4639
        %v4715 = vadd.f32 %v4114, %v4644
        %v4716 = vadd.f32 %v4115, %v4647
        %v4717 = vadd.f32 %v4116, %v4652
        %v4718 = vadd.f32 %v4117, %v4655
        %v4719 = vadd.f32 %v4118, %v4660
        %v4720 = vadd.f32 %v4119, %v4663
        %v4721 = vadd.f32 %v4120, %v4668
        %v4722 = vadd.f32 %v4121, %v4671
        %v4723 = vadd.f32 %v4122, %v4676
        %v4724 = vadd.f32 %v4123, %v4679
        %v4725 = vadd.f32 %v4124, %v4684
        %v4726 = vadd.f32 %v4125, %v4687
        %v4727 = vadd.f32 %v4126, %v4692
        %v4728 = vadd.f32 %v4127, %v4695
        %v4729 = vadd.f32 %v4128, %v4700
        %v4730 = vcombine.high %v4176, %v4176
        %v4732 = vshrl.u32 %v4145, 16
        %v4734 = vrot.slane %v4732, 7
        %v4735 = vrot.slane %v4734, 1
        %v4737 = vshll.u32 %v4152, 16
        %v4739 = vsel %vm956, %v4735, %v4737
        %v4740 = vshrl.u32 %v4152, 16
        %v4742 = vrot.slane %v4740, 7
        %v4743 = vrot.slane %v4742, 1
        %v4745 = vshll.u32 %v4153, 16
        %v4747 = vsel %vm956, %v4743, %v4745
        %v4748 = vshrl.u32 %v4153, 16
        %v4750 = vrot.slane %v4748, 7
        %v4751 = vrot.slane %v4750, 1
        %v4753 = vshll.u32 %v4154, 16
        %v4755 = vsel %vm956, %v4751, %v4753
        %v4756 = vshrl.u32 %v4154, 16
        %v4758 = vrot.slane %v4756, 7
        %v4759 = vrot.slane %v4758, 1
        %v4761 = vshll.u32 %v4169, 16
        %v4763 = vsel %vm956, %v4759, %v4761
        %v4764 = vshrl.u32 %v4169, 16
        %v4766 = vrot.slane %v4764, 7
        %v4767 = vrot.slane %v4766, 1
        %v4769 = vshll.u32 %v4176, 16
        %v4771 = vsel %vm956, %v4767, %v4769
        %v4772 = vshrl.u32 %v4176, 16
        %v4774 = vrot.slane %v4772, 7
        %v4775 = vrot.slane %v4774, 1
        %v4777 = vshll.u32 %v4177, 16
        %v4779 = vsel %vm956, %v4775, %v4777
        %v4780 = vshrl.u32 %v4177, 16
        %v4782 = vrot.slane %v4780, 7
        %v4783 = vrot.slane %v4782, 1
        %v4785 = vshll.u32 %v4730, 16
        %v4787 = vsel %vm956, %v4783, %v4785
        %s4788 = scalar_lea.vmem [#allocation5], 8
        %v4789 = vld [vmem:[%s4788] sm:$0x3]
        %v4790 = vcombine.low %v1022, %v1030
        %v4791 = vcombine.low %v1038, %v1046
        %v4792 = vcombine.low %v1054, %v1062
        %v4793 = vcombine.low %v1070, %v1079
        %v4795 = vunpack.c.l.s4 1966171168
        %v4796 = vunpack.c.0.s8 %v4795
        %v4797 = vlaneseq
        %v4798 = vshrl.u32 %v4797, 7
        %v4799 = vsub.s32 %v4796, %v4798
        %v4800 = vrot.slane %v4790, %v4799
        %v4802 = vunpack.c.l.s4 1966171168
        %v4803 = vunpack.c.0.s8 %v4802
        %v4804 = vlaneseq
        %v4805 = vshrl.u32 %v4804, 7
        %v4806 = vsub.s32 %v4803, %v4805
        %v4807 = vrot.slane %v4791, %v4806
        %v4809 = vunpack.c.l.s4 1966171168
        %v4810 = vunpack.c.0.s8 %v4809
        %v4811 = vlaneseq
        %v4812 = vshrl.u32 %v4811, 7
        %v4813 = vsub.s32 %v4810, %v4812
        %v4814 = vrot.slane %v4792, %v4813
        %v4816 = vunpack.c.l.s4 1966171168
        %v4817 = vunpack.c.0.s8 %v4816
        %v4818 = vlaneseq
        %v4819 = vshrl.u32 %v4818, 7
        %v4820 = vsub.s32 %v4817, %v4819
        %v4821 = vrot.slane %v4793, %v4820
        %v4822 = vcombine.low %v4800, %v4807
        %v4823 = vcombine.low %v4814, %v4821
        %v4825 = vunpack.c.l.s4 1966171168
        %v4826 = vunpack.c.0.s8 %v4825
        %v4827 = vlaneseq
        %v4828 = vshrl.u32 %v4827, 7
        %v4829 = vsub.s32 %v4826, %v4828
        %v4830 = vrot.slane %v4822, %v4829
        %v4832 = vunpack.c.l.s4 1966171168
        %v4833 = vunpack.c.0.s8 %v4832
        %v4834 = vlaneseq
        %v4835 = vshrl.u32 %v4834, 7
        %v4836 = vsub.s32 %v4833, %v4835
        %v4837 = vrot.slane %v4823, %v4836
        %v4838 = vcombine.low %v4830, %v4837
        %v4839 = vcombine.low %v1087, %v1095
        %v4840 = vcombine.low %v1103, %v1111
        %v4841 = vcombine.low %v1119, %v1127
        %v4842 = vcombine.low %v1136, %v1144
        %v4844 = vunpack.c.l.s4 1966171168
        %v4845 = vunpack.c.0.s8 %v4844
        %v4846 = vlaneseq
        %v4847 = vshrl.u32 %v4846, 7
        %v4848 = vsub.s32 %v4845, %v4847
        %v4849 = vrot.slane %v4839, %v4848
        %v4851 = vunpack.c.l.s4 1966171168
        %v4852 = vunpack.c.0.s8 %v4851
        %v4853 = vlaneseq
        %v4854 = vshrl.u32 %v4853, 7
        %v4855 = vsub.s32 %v4852, %v4854
        %v4856 = vrot.slane %v4840, %v4855
        %v4858 = vunpack.c.l.s4 1966171168
        %v4859 = vunpack.c.0.s8 %v4858
        %v4860 = vlaneseq
        %v4861 = vshrl.u32 %v4860, 7
        %v4862 = vsub.s32 %v4859, %v4861
        %v4863 = vrot.slane %v4841, %v4862
        %v4865 = vunpack.c.l.s4 1966171168
        %v4866 = vunpack.c.0.s8 %v4865
        %v4867 = vlaneseq
        %v4868 = vshrl.u32 %v4867, 7
        %v4869 = vsub.s32 %v4866, %v4868
        %v4870 = vrot.slane %v4842, %v4869
        %v4871 = vcombine.low %v4849, %v4856
        %v4872 = vcombine.low %v4863, %v4870
        %v4874 = vunpack.c.l.s4 1966171168
        %v4875 = vunpack.c.0.s8 %v4874
        %v4876 = vlaneseq
        %v4877 = vshrl.u32 %v4876, 7
        %v4878 = vsub.s32 %v4875, %v4877
        %v4879 = vrot.slane %v4871, %v4878
        %v4881 = vunpack.c.l.s4 1966171168
        %v4882 = vunpack.c.0.s8 %v4881
        %v4883 = vlaneseq
        %v4884 = vshrl.u32 %v4883, 7
        %v4885 = vsub.s32 %v4882, %v4884
        %v4886 = vrot.slane %v4872, %v4885
        %v4887 = vcombine.low %v4879, %v4886
        %v4888 = vcombine.low %v1152, %v1160
        %v4889 = vcombine.low %v1168, %v1176
        %v4890 = vcombine.low %v1184, %v1193
        %v4891 = vcombine.low %v1201, %v1209
        %v4893 = vunpack.c.l.s4 1966171168
        %v4894 = vunpack.c.0.s8 %v4893
        %v4895 = vlaneseq
        %v4896 = vshrl.u32 %v4895, 7
        %v4897 = vsub.s32 %v4894, %v4896
        %v4898 = vrot.slane %v4888, %v4897
        %v4900 = vunpack.c.l.s4 1966171168
        %v4901 = vunpack.c.0.s8 %v4900
        %v4902 = vlaneseq
        %v4903 = vshrl.u32 %v4902, 7
        %v4904 = vsub.s32 %v4901, %v4903
        %v4905 = vrot.slane %v4889, %v4904
        %v4907 = vunpack.c.l.s4 1966171168
        %v4908 = vunpack.c.0.s8 %v4907
        %v4909 = vlaneseq
        %v4910 = vshrl.u32 %v4909, 7
        %v4911 = vsub.s32 %v4908, %v4910
        %v4912 = vrot.slane %v4890, %v4911
        %v4914 = vunpack.c.l.s4 1966171168
        %v4915 = vunpack.c.0.s8 %v4914
        %v4916 = vlaneseq
        %v4917 = vshrl.u32 %v4916, 7
        %v4918 = vsub.s32 %v4915, %v4917
        %v4919 = vrot.slane %v4891, %v4918
        %v4920 = vcombine.low %v4898, %v4905
        %v4921 = vcombine.low %v4912, %v4919
        %v4923 = vunpack.c.l.s4 1966171168
        %v4924 = vunpack.c.0.s8 %v4923
        %v4925 = vlaneseq
        %v4926 = vshrl.u32 %v4925, 7
        %v4927 = vsub.s32 %v4924, %v4926
        %v4928 = vrot.slane %v4920, %v4927
        %v4930 = vunpack.c.l.s4 1966171168
        %v4931 = vunpack.c.0.s8 %v4930
        %v4932 = vlaneseq
        %v4933 = vshrl.u32 %v4932, 7
        %v4934 = vsub.s32 %v4931, %v4933
        %v4935 = vrot.slane %v4921, %v4934
        %v4936 = vcombine.low %v4928, %v4935
        %v4937 = vcombine.low %v1217, %v1225
        %v4938 = vcombine.low %v1233, %v1241
        %v4939 = vcombine.low %v1250, %v1258
        %v4940 = vcombine.low %v1266, %v1274
        %v4942 = vunpack.c.l.s4 1966171168
        %v4943 = vunpack.c.0.s8 %v4942
        %v4944 = vlaneseq
        %v4945 = vshrl.u32 %v4944, 7
        %v4946 = vsub.s32 %v4943, %v4945
        %v4947 = vrot.slane %v4937, %v4946
        %v4949 = vunpack.c.l.s4 1966171168
        %v4950 = vunpack.c.0.s8 %v4949
        %v4951 = vlaneseq
        %v4952 = vshrl.u32 %v4951, 7
        %v4953 = vsub.s32 %v4950, %v4952
        %v4954 = vrot.slane %v4938, %v4953
        %v4956 = vunpack.c.l.s4 1966171168
        %v4957 = vunpack.c.0.s8 %v4956
        %v4958 = vlaneseq
        %v4959 = vshrl.u32 %v4958, 7
        %v4960 = vsub.s32 %v4957, %v4959
        %v4961 = vrot.slane %v4939, %v4960
        %v4963 = vunpack.c.l.s4 1966171168
        %v4964 = vunpack.c.0.s8 %v4963
        %v4965 = vlaneseq
        %v4966 = vshrl.u32 %v4965, 7
        %v4967 = vsub.s32 %v4964, %v4966
        %v4968 = vrot.slane %v4940, %v4967
        %v4969 = vcombine.low %v4947, %v4954
        %v4970 = vcombine.low %v4961, %v4968
        %v4972 = vunpack.c.l.s4 1966171168
        %v4973 = vunpack.c.0.s8 %v4972
        %v4974 = vlaneseq
        %v4975 = vshrl.u32 %v4974, 7
        %v4976 = vsub.s32 %v4973, %v4975
        %v4977 = vrot.slane %v4969, %v4976
        %v4979 = vunpack.c.l.s4 1966171168
        %v4980 = vunpack.c.0.s8 %v4979
        %v4981 = vlaneseq
        %v4982 = vshrl.u32 %v4981, 7
        %v4983 = vsub.s32 %v4980, %v4982
        %v4984 = vrot.slane %v4970, %v4983
        %v4985 = vcombine.low %v4977, %v4984
        %v4986 = vcombine.low %v1282, %v1290
        %v4987 = vcombine.low %v1298, %v1307
        %v4988 = vcombine.low %v1315, %v1323
        %v4989 = vcombine.low %v1331, %v1339
        %v4991 = vunpack.c.l.s4 1966171168
        %v4992 = vunpack.c.0.s8 %v4991
        %v4993 = vlaneseq
        %v4994 = vshrl.u32 %v4993, 7
        %v4995 = vsub.s32 %v4992, %v4994
        %v4996 = vrot.slane %v4986, %v4995
        %v4998 = vunpack.c.l.s4 1966171168
        %v4999 = vunpack.c.0.s8 %v4998
        %v5000 = vlaneseq
        %v5001 = vshrl.u32 %v5000, 7
        %v5002 = vsub.s32 %v4999, %v5001
        %v5003 = vrot.slane %v4987, %v5002
        %v5005 = vunpack.c.l.s4 1966171168
        %v5006 = vunpack.c.0.s8 %v5005
        %v5007 = vlaneseq
        %v5008 = vshrl.u32 %v5007, 7
        %v5009 = vsub.s32 %v5006, %v5008
        %v5010 = vrot.slane %v4988, %v5009
        %v5012 = vunpack.c.l.s4 1966171168
        %v5013 = vunpack.c.0.s8 %v5012
        %v5014 = vlaneseq
        %v5015 = vshrl.u32 %v5014, 7
        %v5016 = vsub.s32 %v5013, %v5015
        %v5017 = vrot.slane %v4989, %v5016
        %v5018 = vcombine.low %v4996, %v5003
        %v5019 = vcombine.low %v5010, %v5017
        %v5021 = vunpack.c.l.s4 1966171168
        %v5022 = vunpack.c.0.s8 %v5021
        %v5023 = vlaneseq
        %v5024 = vshrl.u32 %v5023, 7
        %v5025 = vsub.s32 %v5022, %v5024
        %v5026 = vrot.slane %v5018, %v5025
        %v5028 = vunpack.c.l.s4 1966171168
        %v5029 = vunpack.c.0.s8 %v5028
        %v5030 = vlaneseq
        %v5031 = vshrl.u32 %v5030, 7
        %v5032 = vsub.s32 %v5029, %v5031
        %v5033 = vrot.slane %v5019, %v5032
        %v5034 = vcombine.low %v5026, %v5033
        %v5035 = vcombine.low %v1347, %v1355
        %v5036 = vcombine.low %v1364, %v1372
        %v5037 = vcombine.low %v1380, %v1388
        %v5038 = vcombine.low %v1396, %v1404
        %v5040 = vunpack.c.l.s4 1966171168
        %v5041 = vunpack.c.0.s8 %v5040
        %v5042 = vlaneseq
        %v5043 = vshrl.u32 %v5042, 7
        %v5044 = vsub.s32 %v5041, %v5043
        %v5045 = vrot.slane %v5035, %v5044
        %v5047 = vunpack.c.l.s4 1966171168
        %v5048 = vunpack.c.0.s8 %v5047
        %v5049 = vlaneseq
        %v5050 = vshrl.u32 %v5049, 7
        %v5051 = vsub.s32 %v5048, %v5050
        %v5052 = vrot.slane %v5036, %v5051
        %v5054 = vunpack.c.l.s4 1966171168
        %v5055 = vunpack.c.0.s8 %v5054
        %v5056 = vlaneseq
        %v5057 = vshrl.u32 %v5056, 7
        %v5058 = vsub.s32 %v5055, %v5057
        %v5059 = vrot.slane %v5037, %v5058
        %v5061 = vunpack.c.l.s4 1966171168
        %v5062 = vunpack.c.0.s8 %v5061
        %v5063 = vlaneseq
        %v5064 = vshrl.u32 %v5063, 7
        %v5065 = vsub.s32 %v5062, %v5064
        %v5066 = vrot.slane %v5038, %v5065
        %v5067 = vcombine.low %v5045, %v5052
        %v5068 = vcombine.low %v5059, %v5066
        %v5070 = vunpack.c.l.s4 1966171168
        %v5071 = vunpack.c.0.s8 %v5070
        %v5072 = vlaneseq
        %v5073 = vshrl.u32 %v5072, 7
        %v5074 = vsub.s32 %v5071, %v5073
        %v5075 = vrot.slane %v5067, %v5074
        %v5077 = vunpack.c.l.s4 1966171168
        %v5078 = vunpack.c.0.s8 %v5077
        %v5079 = vlaneseq
        %v5080 = vshrl.u32 %v5079, 7
        %v5081 = vsub.s32 %v5078, %v5080
        %v5082 = vrot.slane %v5068, %v5081
        %v5083 = vcombine.low %v5075, %v5082
        %v5084 = vcombine.low %v1412, %v1421
        %v5085 = vcombine.low %v1429, %v1437
        %v5086 = vcombine.low %v1445, %v1453
        %v5087 = vcombine.low %v1461, %v1469
        %v5089 = vunpack.c.l.s4 1966171168
        %v5090 = vunpack.c.0.s8 %v5089
        %v5091 = vlaneseq
        %v5092 = vshrl.u32 %v5091, 7
        %v5093 = vsub.s32 %v5090, %v5092
        %v5094 = vrot.slane %v5084, %v5093
        %v5096 = vunpack.c.l.s4 1966171168
        %v5097 = vunpack.c.0.s8 %v5096
        %v5098 = vlaneseq
        %v5099 = vshrl.u32 %v5098, 7
        %v5100 = vsub.s32 %v5097, %v5099
        %v5101 = vrot.slane %v5085, %v5100
        %v5103 = vunpack.c.l.s4 1966171168
        %v5104 = vunpack.c.0.s8 %v5103
        %v5105 = vlaneseq
        %v5106 = vshrl.u32 %v5105, 7
        %v5107 = vsub.s32 %v5104, %v5106
        %v5108 = vrot.slane %v5086, %v5107
        %v5110 = vunpack.c.l.s4 1966171168
        %v5111 = vunpack.c.0.s8 %v5110
        %v5112 = vlaneseq
        %v5113 = vshrl.u32 %v5112, 7
        %v5114 = vsub.s32 %v5111, %v5113
        %v5115 = vrot.slane %v5087, %v5114
        %v5116 = vcombine.low %v5094, %v5101
        %v5117 = vcombine.low %v5108, %v5115
        %v5119 = vunpack.c.l.s4 1966171168
        %v5120 = vunpack.c.0.s8 %v5119
        %v5121 = vlaneseq
        %v5122 = vshrl.u32 %v5121, 7
        %v5123 = vsub.s32 %v5120, %v5122
        %v5124 = vrot.slane %v5116, %v5123
        %v5126 = vunpack.c.l.s4 1966171168
        %v5127 = vunpack.c.0.s8 %v5126
        %v5128 = vlaneseq
        %v5129 = vshrl.u32 %v5128, 7
        %v5130 = vsub.s32 %v5127, %v5129
        %v5131 = vrot.slane %v5117, %v5130
        %v5132 = vcombine.low %v5124, %v5131
        %v5133 = vcombine.low %v1478, %v1486
        %v5134 = vcombine.low %v1494, %v1502
        %v5135 = vcombine.low %v1510, %v1518
        %v5136 = vcombine.low %v1526, %v1535
        %v5138 = vunpack.c.l.s4 1966171168
        %v5139 = vunpack.c.0.s8 %v5138
        %v5140 = vlaneseq
        %v5141 = vshrl.u32 %v5140, 7
        %v5142 = vsub.s32 %v5139, %v5141
        %v5143 = vrot.slane %v5133, %v5142
        %v5145 = vunpack.c.l.s4 1966171168
        %v5146 = vunpack.c.0.s8 %v5145
        %v5147 = vlaneseq
        %v5148 = vshrl.u32 %v5147, 7
        %v5149 = vsub.s32 %v5146, %v5148
        %v5150 = vrot.slane %v5134, %v5149
        %v5152 = vunpack.c.l.s4 1966171168
        %v5153 = vunpack.c.0.s8 %v5152
        %v5154 = vlaneseq
        %v5155 = vshrl.u32 %v5154, 7
        %v5156 = vsub.s32 %v5153, %v5155
        %v5157 = vrot.slane %v5135, %v5156
        %v5159 = vunpack.c.l.s4 1966171168
        %v5160 = vunpack.c.0.s8 %v5159
        %v5161 = vlaneseq
        %v5162 = vshrl.u32 %v5161, 7
        %v5163 = vsub.s32 %v5160, %v5162
        %v5164 = vrot.slane %v5136, %v5163
        %v5165 = vcombine.low %v5143, %v5150
        %v5166 = vcombine.low %v5157, %v5164
        %v5168 = vunpack.c.l.s4 1966171168
        %v5169 = vunpack.c.0.s8 %v5168
        %v5170 = vlaneseq
        %v5171 = vshrl.u32 %v5170, 7
        %v5172 = vsub.s32 %v5169, %v5171
        %v5173 = vrot.slane %v5165, %v5172
        %v5175 = vunpack.c.l.s4 1966171168
        %v5176 = vunpack.c.0.s8 %v5175
        %v5177 = vlaneseq
        %v5178 = vshrl.u32 %v5177, 7
        %v5179 = vsub.s32 %v5176, %v5178
        %v5180 = vrot.slane %v5166, %v5179
        %v5181 = vcombine.low %v5173, %v5180
        %v5182 = vcombine.low %v1543, %v1551
        %v5183 = vcombine.low %v1559, %v1567
        %v5184 = vcombine.low %v1575, %v1583
        %v5185 = vcombine.low %v1592, %v1600
        %v5187 = vunpack.c.l.s4 1966171168
        %v5188 = vunpack.c.0.s8 %v5187
        %v5189 = vlaneseq
        %v5190 = vshrl.u32 %v5189, 7
        %v5191 = vsub.s32 %v5188, %v5190
        %v5192 = vrot.slane %v5182, %v5191
        %v5194 = vunpack.c.l.s4 1966171168
        %v5195 = vunpack.c.0.s8 %v5194
        %v5196 = vlaneseq
        %v5197 = vshrl.u32 %v5196, 7
        %v5198 = vsub.s32 %v5195, %v5197
        %v5199 = vrot.slane %v5183, %v5198
        %v5201 = vunpack.c.l.s4 1966171168
        %v5202 = vunpack.c.0.s8 %v5201
        %v5203 = vlaneseq
        %v5204 = vshrl.u32 %v5203, 7
        %v5205 = vsub.s32 %v5202, %v5204
        %v5206 = vrot.slane %v5184, %v5205
        %v5208 = vunpack.c.l.s4 1966171168
        %v5209 = vunpack.c.0.s8 %v5208
        %v5210 = vlaneseq
        %v5211 = vshrl.u32 %v5210, 7
        %v5212 = vsub.s32 %v5209, %v5211
        %v5213 = vrot.slane %v5185, %v5212
        %v5214 = vcombine.low %v5192, %v5199
        %v5215 = vcombine.low %v5206, %v5213
        %v5217 = vunpack.c.l.s4 1966171168
        %v5218 = vunpack.c.0.s8 %v5217
        %v5219 = vlaneseq
        %v5220 = vshrl.u32 %v5219, 7
        %v5221 = vsub.s32 %v5218, %v5220
        %v5222 = vrot.slane %v5214, %v5221
        %v5224 = vunpack.c.l.s4 1966171168
        %v5225 = vunpack.c.0.s8 %v5224
        %v5226 = vlaneseq
        %v5227 = vshrl.u32 %v5226, 7
        %v5228 = vsub.s32 %v5225, %v5227
        %v5229 = vrot.slane %v5215, %v5228
        %v5230 = vcombine.low %v5222, %v5229
        %v5231 = vcombine.low %v1608, %v1616
        %v5232 = vcombine.low %v1624, %v1632
        %v5233 = vcombine.low %v1640, %v1649
        %v5234 = vcombine.low %v1657, %v1665
        %v5236 = vunpack.c.l.s4 1966171168
        %v5237 = vunpack.c.0.s8 %v5236
        %v5238 = vlaneseq
        %v5239 = vshrl.u32 %v5238, 7
        %v5240 = vsub.s32 %v5237, %v5239
        %v5241 = vrot.slane %v5231, %v5240
        %v5243 = vunpack.c.l.s4 1966171168
        %v5244 = vunpack.c.0.s8 %v5243
        %v5245 = vlaneseq
        %v5246 = vshrl.u32 %v5245, 7
        %v5247 = vsub.s32 %v5244, %v5246
        %v5248 = vrot.slane %v5232, %v5247
        %v5250 = vunpack.c.l.s4 1966171168
        %v5251 = vunpack.c.0.s8 %v5250
        %v5252 = vlaneseq
        %v5253 = vshrl.u32 %v5252, 7
        %v5254 = vsub.s32 %v5251, %v5253
        %v5255 = vrot.slane %v5233, %v5254
        %v5257 = vunpack.c.l.s4 1966171168
        %v5258 = vunpack.c.0.s8 %v5257
        %v5259 = vlaneseq
        %v5260 = vshrl.u32 %v5259, 7
        %v5261 = vsub.s32 %v5258, %v5260
        %v5262 = vrot.slane %v5234, %v5261
        %v5263 = vcombine.low %v5241, %v5248
        %v5264 = vcombine.low %v5255, %v5262
        %v5266 = vunpack.c.l.s4 1966171168
        %v5267 = vunpack.c.0.s8 %v5266
        %v5268 = vlaneseq
        %v5269 = vshrl.u32 %v5268, 7
        %v5270 = vsub.s32 %v5267, %v5269
        %v5271 = vrot.slane %v5263, %v5270
        %v5273 = vunpack.c.l.s4 1966171168
        %v5274 = vunpack.c.0.s8 %v5273
        %v5275 = vlaneseq
        %v5276 = vshrl.u32 %v5275, 7
        %v5277 = vsub.s32 %v5274, %v5276
        %v5278 = vrot.slane %v5264, %v5277
        %v5279 = vcombine.low %v5271, %v5278
        %v5280 = vcombine.low %v1673, %v1681
        %v5281 = vcombine.low %v1689, %v1697
        %v5282 = vcombine.low %v1706, %v1714
        %v5283 = vcombine.low %v1722, %v1730
        %v5285 = vunpack.c.l.s4 1966171168
        %v5286 = vunpack.c.0.s8 %v5285
        %v5287 = vlaneseq
        %v5288 = vshrl.u32 %v5287, 7
        %v5289 = vsub.s32 %v5286, %v5288
        %v5290 = vrot.slane %v5280, %v5289
        %v5292 = vunpack.c.l.s4 1966171168
        %v5293 = vunpack.c.0.s8 %v5292
        %v5294 = vlaneseq
        %v5295 = vshrl.u32 %v5294, 7
        %v5296 = vsub.s32 %v5293, %v5295
        %v5297 = vrot.slane %v5281, %v5296
        %v5299 = vunpack.c.l.s4 1966171168
        %v5300 = vunpack.c.0.s8 %v5299
        %v5301 = vlaneseq
        %v5302 = vshrl.u32 %v5301, 7
        %v5303 = vsub.s32 %v5300, %v5302
        %v5304 = vrot.slane %v5282, %v5303
        %v5306 = vunpack.c.l.s4 1966171168
        %v5307 = vunpack.c.0.s8 %v5306
        %v5308 = vlaneseq
        %v5309 = vshrl.u32 %v5308, 7
        %v5310 = vsub.s32 %v5307, %v5309
        %v5311 = vrot.slane %v5283, %v5310
        %v5312 = vcombine.low %v5290, %v5297
        %v5313 = vcombine.low %v5304, %v5311
        %v5315 = vunpack.c.l.s4 1966171168
        %v5316 = vunpack.c.0.s8 %v5315
        %v5317 = vlaneseq
        %v5318 = vshrl.u32 %v5317, 7
        %v5319 = vsub.s32 %v5316, %v5318
        %v5320 = vrot.slane %v5312, %v5319
        %v5322 = vunpack.c.l.s4 1966171168
        %v5323 = vunpack.c.0.s8 %v5322
        %v5324 = vlaneseq
        %v5325 = vshrl.u32 %v5324, 7
        %v5326 = vsub.s32 %v5323, %v5325
        %v5327 = vrot.slane %v5313, %v5326
        %v5328 = vcombine.low %v5320, %v5327
        %v5329 = vcombine.low %v1738, %v1746
        %v5330 = vcombine.low %v1754, %v4739
        %v5331 = vcombine.low %v4747, %v4755
        %v5332 = vcombine.low %v4763, %v4771
        %v5334 = vunpack.c.l.s4 1966171168
        %v5335 = vunpack.c.0.s8 %v5334
        %v5336 = vlaneseq
        %v5337 = vshrl.u32 %v5336, 7
        %v5338 = vsub.s32 %v5335, %v5337
        %v5339 = vrot.slane %v5329, %v5338
        %v5341 = vunpack.c.l.s4 1966171168
        %v5342 = vunpack.c.0.s8 %v5341
        %v5343 = vlaneseq
        %v5344 = vshrl.u32 %v5343, 7
        %v5345 = vsub.s32 %v5342, %v5344
        %v5346 = vrot.slane %v5330, %v5345
        %v5348 = vunpack.c.l.s4 1966171168
        %v5349 = vunpack.c.0.s8 %v5348
        %v5350 = vlaneseq
        %v5351 = vshrl.u32 %v5350, 7
        %v5352 = vsub.s32 %v5349, %v5351
        %v5353 = vrot.slane %v5331, %v5352
        %v5355 = vunpack.c.l.s4 1966171168
        %v5356 = vunpack.c.0.s8 %v5355
        %v5357 = vlaneseq
        %v5358 = vshrl.u32 %v5357, 7
        %v5359 = vsub.s32 %v5356, %v5358
        %v5360 = vrot.slane %v5332, %v5359
        %v5361 = vcombine.low %v5339, %v5346
        %v5362 = vcombine.low %v5353, %v5360
        %v5364 = vunpack.c.l.s4 1966171168
        %v5365 = vunpack.c.0.s8 %v5364
        %v5366 = vlaneseq
        %v5367 = vshrl.u32 %v5366, 7
        %v5368 = vsub.s32 %v5365, %v5367
        %v5369 = vrot.slane %v5361, %v5368
        %v5371 = vunpack.c.l.s4 1966171168
        %v5372 = vunpack.c.0.s8 %v5371
        %v5373 = vlaneseq
        %v5374 = vshrl.u32 %v5373, 7
        %v5375 = vsub.s32 %v5372, %v5374
        %v5376 = vrot.slane %v5362, %v5375
        %v5377 = vcombine.low %v5369, %v5376
        %v5378 = vcombine.low %v4779, %v4787
        %v5380 = vunpack.c.l.s4 1966171168
        %v5381 = vunpack.c.0.s8 %v5380
        %v5382 = vlaneseq
        %v5383 = vshrl.u32 %v5382, 7
        %v5384 = vsub.s32 %v5381, %v5383
        %v5385 = vrot.slane %v5378, %v5384
        %v5387 = vunpack.c.l.s4 1966171168
        %v5388 = vunpack.c.0.s8 %v5387
        %v5389 = vlaneseq
        %v5390 = vshrl.u32 %v5389, 7
        %v5391 = vsub.s32 %v5388, %v5390
        %v5392 = vrot.slane %v5385, %v5391
        %v5394 = vsel %vm2360, %v4838, 0
        %v5397 = vsel %vm2360, %v4887, 0
        %v5400 = vsel %vm2360, %v4936, 0
        %v5403 = vsel %vm2360, %v4985, 0
        %v5406 = vsel %vm2360, %v5034, 0
        %v5409 = vsel %vm2360, %v5083, 0
        %v5412 = vsel %vm2360, %v5132, 0
        %v5415 = vsel %vm2360, %v5181, 0
        %v5418 = vsel %vm2360, %v5230, 0
        %v5421 = vsel %vm2360, %v5279, 0
        %v5424 = vsel %vm2360, %v5328, 0
        %v5427 = vsel %vm2360, %v5377, 0
        %v5430 = vsel %vm2360, %v5392, 0
        %v5433 = vsel %vm2400, %v4789, 0
        %5435 = vmatprep.subr.bf16.mxu0 0
        %5436 = vmatpush1.bf16.msra.mxu0 %v5433
        %5437 = vmatprep.subr.bf16.mxu0 0
        %5438 = vmatpush1.bf16.msra.mxu0 0
        %5439 = vmatprep.subr.bf16.mxu0 0
        %5440 = vmatpush1.bf16.msra.mxu0 0
        %5441 = vmatprep.subr.bf16.mxu0 0
        %5442 = vmatpush1.bf16.msra.mxu0 0
        %5443 = vmatprep.subr.bf16.mxu0 0
        %5444 = vmatpush1.bf16.msra.mxu0 0
        %5445 = vmatprep.subr.bf16.mxu0 0
        %5446 = vmatpush1.bf16.msra.mxu0 0
        %5447 = vmatprep.subr.bf16.mxu0 0
        %5448 = vmatpush1.bf16.msra.mxu0 0
        %5449 = vmatprep.subr.bf16.mxu0 0
        %5450 = vmatpush1.bf16.msra.mxu0 0
        %5451 = vmatprep.subr.bf16.mxu0 0
        %5452 = vmatpush1.bf16.msra.mxu0 0
        %5453 = vmatprep.subr.bf16.mxu0 0
        %5454 = vmatpush1.bf16.msra.mxu0 0
        %5455 = vmatprep.subr.bf16.mxu0 0
        %5456 = vmatpush1.bf16.msra.mxu0 0
        %5457 = vmatprep.subr.bf16.mxu0 0
        %5458 = vmatpush1.bf16.msra.mxu0 0
        %5459 = vmatprep.subr.bf16.mxu0 0
        %5460 = vmatpush1.bf16.msra.mxu0 0
        %5461 = vmatprep.subr.bf16.mxu0 0
        %5462 = vmatpush1.bf16.msra.mxu0 0
        %5463 = vmatprep.subr.bf16.mxu0 0
        %5464 = vmatpush1.bf16.msra.mxu0 0
        %5465 = vmatprep.subr.bf16.mxu0 0
        %5466 = vmatpush1.bf16.msra.mxu0 0
        %5467 = vmatprep.mubr.bf16.mxu0 0
        %5468 = vmatmul.mubr.bf16.gmra.mrb[0].mxu0 %v5394
        %v5469 = vpop.f32.mrb[0].mxu0
        %v5470 = vadd.f32 0.0, %v5469
        %v5471 = vpop.f32.mrb[0].mxu0
        %v5472 = vpop.f32.mrb[0].mxu0
        %v5473 = vadd.f32 0.0, %v5472
        %v5474 = vpop.f32.mrb[0].mxu0
        %5475 = vmatprep.mubr.bf16.mxu0 0
        %5476 = vmatmul.mubr.bf16.gmra.mrb[0].mxu0 %v5397
        %v5477 = vpop.f32.mrb[0].mxu0
        %v5478 = vadd.f32 0.0, %v5477
        %v5479 = vpop.f32.mrb[0].mxu0
        %v5480 = vpop.f32.mrb[0].mxu0
        %v5481 = vadd.f32 0.0, %v5480
        %v5482 = vpop.f32.mrb[0].mxu0
        %5483 = vmatprep.mubr.bf16.mxu0 0
        %5484 = vmatmul.mubr.bf16.gmra.mrb[0].mxu0 %v5400
        %v5485 = vpop.f32.mrb[0].mxu0
        %v5486 = vadd.f32 0.0, %v5485
        %v5487 = vpop.f32.mrb[0].mxu0
        %v5488 = vpop.f32.mrb[0].mxu0
        %v5489 = vadd.f32 0.0, %v5488
        %v5490 = vpop.f32.mrb[0].mxu0
        %5491 = vmatprep.mubr.bf16.mxu0 0
        %5492 = vmatmul.mubr.bf16.gmra.mrb[0].mxu0 %v5403
        %v5493 = vpop.f32.mrb[0].mxu0
        %v5494 = vadd.f32 0.0, %v5493
        %v5495 = vpop.f32.mrb[0].mxu0
        %v5496 = vpop.f32.mrb[0].mxu0
        %v5497 = vadd.f32 0.0, %v5496
        %v5498 = vpop.f32.mrb[0].mxu0
        %5499 = vmatprep.mubr.bf16.mxu0 0
        %5500 = vmatmul.mubr.bf16.gmra.mrb[0].mxu0 %v5406
        %v5501 = vpop.f32.mrb[0].mxu0
        %v5502 = vadd.f32 0.0, %v5501
        %v5503 = vpop.f32.mrb[0].mxu0
        %v5504 = vpop.f32.mrb[0].mxu0
        %v5505 = vadd.f32 0.0, %v5504
        %v5506 = vpop.f32.mrb[0].mxu0
        %5507 = vmatprep.mubr.bf16.mxu0 0
        %5508 = vmatmul.mubr.bf16.gmra.mrb[0].mxu0 %v5409
        %v5509 = vpop.f32.mrb[0].mxu0
        %v5510 = vadd.f32 0.0, %v5509
        %v5511 = vpop.f32.mrb[0].mxu0
        %v5512 = vpop.f32.mrb[0].mxu0
        %v5513 = vadd.f32 0.0, %v5512
        %v5514 = vpop.f32.mrb[0].mxu0
        %5515 = vmatprep.mubr.bf16.mxu0 0
        %5516 = vmatmul.mubr.bf16.gmra.mrb[0].mxu0 %v5412
        %v5517 = vpop.f32.mrb[0].mxu0
        %v5518 = vadd.f32 0.0, %v5517
        %v5519 = vpop.f32.mrb[0].mxu0
        %v5520 = vpop.f32.mrb[0].mxu0
        %v5521 = vadd.f32 0.0, %v5520
        %v5522 = vpop.f32.mrb[0].mxu0
        %5523 = vmatprep.mubr.bf16.mxu0 0
        %5524 = vmatmul.mubr.bf16.gmra.mrb[0].mxu0 %v5415
        %v5525 = vpop.f32.mrb[0].mxu0
        %v5526 = vadd.f32 0.0, %v5525
        %v5527 = vpop.f32.mrb[0].mxu0
        %v5528 = vpop.f32.mrb[0].mxu0
        %v5529 = vadd.f32 0.0, %v5528
        %v5530 = vpop.f32.mrb[0].mxu0
        %5531 = vmatprep.mubr.bf16.mxu0 0
        %5532 = vmatmul.mubr.bf16.gmra.mrb[0].mxu0 %v5418
        %v5533 = vpop.f32.mrb[0].mxu0
        %v5534 = vadd.f32 0.0, %v5533
        %v5535 = vpop.f32.mrb[0].mxu0
        %v5536 = vpop.f32.mrb[0].mxu0
        %v5537 = vadd.f32 0.0, %v5536
        %v5538 = vpop.f32.mrb[0].mxu0
        %5539 = vmatprep.mubr.bf16.mxu0 0
        %5540 = vmatmul.mubr.bf16.gmra.mrb[0].mxu0 %v5421
        %v5541 = vpop.f32.mrb[0].mxu0
        %v5542 = vadd.f32 0.0, %v5541
        %v5543 = vpop.f32.mrb[0].mxu0
        %v5544 = vpop.f32.mrb[0].mxu0
        %v5545 = vadd.f32 0.0, %v5544
        %v5546 = vpop.f32.mrb[0].mxu0
        %5547 = vmatprep.mubr.bf16.mxu0 0
        %5548 = vmatmul.mubr.bf16.gmra.mrb[0].mxu0 %v5424
        %v5549 = vpop.f32.mrb[0].mxu0
        %v5550 = vadd.f32 0.0, %v5549
        %v5551 = vpop.f32.mrb[0].mxu0
        %v5552 = vpop.f32.mrb[0].mxu0
        %v5553 = vadd.f32 0.0, %v5552
        %v5554 = vpop.f32.mrb[0].mxu0
        %5555 = vmatprep.mubr.bf16.mxu0 0
        %5556 = vmatmul.mubr.bf16.gmra.mrb[0].mxu0 %v5427
        %v5557 = vpop.f32.mrb[0].mxu0
        %v5558 = vadd.f32 0.0, %v5557
        %v5559 = vpop.f32.mrb[0].mxu0
        %v5560 = vpop.f32.mrb[0].mxu0
        %v5561 = vadd.f32 0.0, %v5560
        %v5562 = vpop.f32.mrb[0].mxu0
        %5563 = vmatprep.mubr.bf16.mxu0 0
        %5564 = vmatmul.mubr.bf16.gmra.mrb[0].mxu0 %v5430
        %v5565 = vpop.f32.mrb[0].mxu0
        %v5566 = vadd.f32 0.0, %v5565
        %v5567 = vpop.f32.mrb[0].mxu0
        %v5568 = vpop.f32.mrb[0].mxu0
        %v5569 = vpop.f32.mrb[0].mxu0
        %5570 = vdwg.mxu0
        %v5571 = vadd.f32 %v4705, %v5470
        %v5572 = vadd.f32 %v4706, %v5473
        %v5573 = vadd.f32 %v4707, %v5478
        %v5574 = vadd.f32 %v4708, %v5481
        %v5575 = vadd.f32 %v4709, %v5486
        %v5576 = vadd.f32 %v4710, %v5489
        %v5577 = vadd.f32 %v4711, %v5494
        %v5578 = vadd.f32 %v4712, %v5497
        %v5579 = vadd.f32 %v4713, %v5502
        %v5580 = vadd.f32 %v4714, %v5505
        %v5581 = vadd.f32 %v4715, %v5510
        %v5582 = vadd.f32 %v4716, %v5513
        %v5583 = vadd.f32 %v4717, %v5518
        %v5584 = vadd.f32 %v4718, %v5521
        %v5585 = vadd.f32 %v4719, %v5526
        %v5586 = vadd.f32 %v4720, %v5529
        %v5587 = vadd.f32 %v4721, %v5534
        %v5588 = vadd.f32 %v4722, %v5537
        %v5589 = vadd.f32 %v4723, %v5542
        %v5590 = vadd.f32 %v4724, %v5545
        %v5591 = vadd.f32 %v4725, %v5550
        %v5592 = vadd.f32 %v4726, %v5553
        %v5593 = vadd.f32 %v4727, %v5558
        %v5594 = vadd.f32 %v4728, %v5561
        %v5595 = vadd.f32 %v4729, %v5566
        %s5596 = scalar_lea.vmem [#allocation5], 10
        %v5597 = vld [vmem:[%s5596] sm:$0x3]
        %v5598 = vcombine.low %v929, %v384
        %v5600 = vunpack.c.l.s4 1966171168
        %v5601 = vunpack.c.0.s8 %v5600
        %v5602 = vlaneseq
        %v5603 = vshrl.u32 %v5602, 7
        %v5604 = vsub.s32 %v5601, %v5603
        %v5605 = vrot.slane %v5598, %v5604
        %v5606 = vcombine.low %v2613, %v5605
        %v5608 = vunpack.c.l.s4 1966171168
        %v5609 = vunpack.c.0.s8 %v5608
        %v5610 = vlaneseq
        %v5611 = vshrl.u32 %v5610, 7
        %v5612 = vsub.s32 %v5609, %v5611
        %v5613 = vrot.slane %v5606, %v5612
        %v5614 = vcombine.low %v2629, %v5613
        %v5615 = vcombine.low %v409, %v930
        %v5617 = vunpack.c.l.s4 1966171168
        %v5618 = vunpack.c.0.s8 %v5617
        %v5619 = vlaneseq
        %v5620 = vshrl.u32 %v5619, 7
        %v5621 = vsub.s32 %v5618, %v5620
        %v5622 = vrot.slane %v5615, %v5621
        %v5623 = vcombine.low %v5622, %v2669
        %v5625 = vunpack.c.l.s4 1966171168
        %v5626 = vunpack.c.0.s8 %v5625
        %v5627 = vlaneseq
        %v5628 = vshrl.u32 %v5627, 7
        %v5629 = vsub.s32 %v5626, %v5628
        %v5630 = vrot.slane %v5623, %v5629
        %v5631 = vcombine.low %v2678, %v5630
        %v5632 = vcombine.low %v931, %v478
        %v5634 = vunpack.c.l.s4 1966171168
        %v5635 = vunpack.c.0.s8 %v5634
        %v5636 = vlaneseq
        %v5637 = vshrl.u32 %v5636, 7
        %v5638 = vsub.s32 %v5635, %v5637
        %v5639 = vrot.slane %v5632, %v5638
        %v5640 = vcombine.low %v5639, %v2718
        %v5642 = vunpack.c.l.s4 1966171168
        %v5643 = vunpack.c.0.s8 %v5642
        %v5644 = vlaneseq
        %v5645 = vshrl.u32 %v5644, 7
        %v5646 = vsub.s32 %v5643, %v5645
        %v5647 = vrot.slane %v5640, %v5646
        %v5648 = vcombine.low %v2727, %v5647
        %v5649 = vcombine.low %v503, %v932
        %v5651 = vunpack.c.l.s4 1966171168
        %v5652 = vunpack.c.0.s8 %v5651
        %v5653 = vlaneseq
        %v5654 = vshrl.u32 %v5653, 7
        %v5655 = vsub.s32 %v5652, %v5654
        %v5656 = vrot.slane %v5649, %v5655
        %v5657 = vcombine.low %v2746, %v5656
        %v5659 = vunpack.c.l.s4 1966171168
        %v5660 = vunpack.c.0.s8 %v5659
        %v5661 = vlaneseq
        %v5662 = vshrl.u32 %v5661, 7
        %v5663 = vsub.s32 %v5660, %v5662
        %v5664 = vrot.slane %v5657, %v5663
        %v5665 = vcombine.low %v5664, %v2783
        %v5666 = vcombine.low %v933, %v572
        %v5668 = vunpack.c.l.s4 1966171168
        %v5669 = vunpack.c.0.s8 %v5668
        %v5670 = vlaneseq
        %v5671 = vshrl.u32 %v5670, 7
        %v5672 = vsub.s32 %v5669, %v5671
        %v5673 = vrot.slane %v5666, %v5672
        %v5674 = vcombine.low %v2795, %v5673
        %v5676 = vunpack.c.l.s4 1966171168
        %v5677 = vunpack.c.0.s8 %v5676
        %v5678 = vlaneseq
        %v5679 = vshrl.u32 %v5678, 7
        %v5680 = vsub.s32 %v5677, %v5679
        %v5681 = vrot.slane %v5674, %v5680
        %v5682 = vcombine.low %v5681, %v2832
        %v5683 = vcombine.low %v597, %v934
        %v5685 = vunpack.c.l.s4 1966171168
        %v5686 = vunpack.c.0.s8 %v5685
        %v5687 = vlaneseq
        %v5688 = vshrl.u32 %v5687, 7
        %v5689 = vsub.s32 %v5686, %v5688
        %v5690 = vrot.slane %v5683, %v5689
        %v5691 = vcombine.low %v5690, %v2851
        %v5693 = vunpack.c.l.s4 1966171168
        %v5694 = vunpack.c.0.s8 %v5693
        %v5695 = vlaneseq
        %v5696 = vshrl.u32 %v5695, 7
        %v5697 = vsub.s32 %v5694, %v5696
        %v5698 = vrot.slane %v5691, %v5697
        %v5699 = vcombine.low %v5698, %v2881
        %v5700 = vcombine.low %v935, %v666
        %v5701 = vcombine.low %v691, %v936
        %v5703 = vunpack.c.l.s4 1966171168
        %v5704 = vunpack.c.0.s8 %v5703
        %v5705 = vlaneseq
        %v5706 = vshrl.u32 %v5705, 7
        %v5707 = vsub.s32 %v5704, %v5706
        %v5708 = vrot.slane %v5700, %v5707
        %v5710 = vunpack.c.l.s4 1966171168
        %v5711 = vunpack.c.0.s8 %v5710
        %v5712 = vlaneseq
        %v5713 = vshrl.u32 %v5712, 7
        %v5714 = vsub.s32 %v5711, %v5713
        %v5715 = vrot.slane %v5701, %v5714
        %v5716 = vcombine.low %v5708, %v2900
        %v5717 = vcombine.low %v2907, %v5715
        %v5719 = vunpack.c.l.s4 1966171168
        %v5720 = vunpack.c.0.s8 %v5719
        %v5721 = vlaneseq
        %v5722 = vshrl.u32 %v5721, 7
        %v5723 = vsub.s32 %v5720, %v5722
        %v5724 = vrot.slane %v5716, %v5723
        %v5726 = vunpack.c.l.s4 1966171168
        %v5727 = vunpack.c.0.s8 %v5726
        %v5728 = vlaneseq
        %v5729 = vshrl.u32 %v5728, 7
        %v5730 = vsub.s32 %v5727, %v5729
        %v5731 = vrot.slane %v5717, %v5730
        %v5732 = vcombine.low %v5724, %v5731
        %v5733 = vcombine.low %v937, %v760
        %v5735 = vunpack.c.l.s4 1966171168
        %v5736 = vunpack.c.0.s8 %v5735
        %v5737 = vlaneseq
        %v5738 = vshrl.u32 %v5737, 7
        %v5739 = vsub.s32 %v5736, %v5738
        %v5740 = vrot.slane %v5733, %v5739
        %v5741 = vcombine.low %v2956, %v5740
        %v5743 = vunpack.c.l.s4 1966171168
        %v5744 = vunpack.c.0.s8 %v5743
        %v5745 = vlaneseq
        %v5746 = vshrl.u32 %v5745, 7
        %v5747 = vsub.s32 %v5744, %v5746
        %v5748 = vrot.slane %v5741, %v5747
        %v5749 = vcombine.low %v2972, %v5748
        %v5750 = vcombine.low %v785, %v938
        %v5752 = vunpack.c.l.s4 1966171168
        %v5753 = vunpack.c.0.s8 %v5752
        %v5754 = vlaneseq
        %v5755 = vshrl.u32 %v5754, 7
        %v5756 = vsub.s32 %v5753, %v5755
        %v5757 = vrot.slane %v5750, %v5756
        %v5758 = vcombine.low %v5757, %v3012
        %v5760 = vunpack.c.l.s4 1966171168
        %v5761 = vunpack.c.0.s8 %v5760
        %v5762 = vlaneseq
        %v5763 = vshrl.u32 %v5762, 7
        %v5764 = vsub.s32 %v5761, %v5763
        %v5765 = vrot.slane %v5758, %v5764
        %v5766 = vcombine.low %v3021, %v5765
        %v5767 = vcombine.low %v939, %v854
        %v5769 = vunpack.c.l.s4 1966171168
        %v5770 = vunpack.c.0.s8 %v5769
        %v5771 = vlaneseq
        %v5772 = vshrl.u32 %v5771, 7
        %v5773 = vsub.s32 %v5770, %v5772
        %v5774 = vrot.slane %v5767, %v5773
        %v5775 = vcombine.low %v5774, %v3061
        %v5777 = vunpack.c.l.s4 1966171168
        %v5778 = vunpack.c.0.s8 %v5777
        %v5779 = vlaneseq
        %v5780 = vshrl.u32 %v5779, 7
        %v5781 = vsub.s32 %v5778, %v5780
        %v5782 = vrot.slane %v5775, %v5781
        %v5783 = vcombine.low %v3070, %v5782
        %v5784 = vcombine.low %v879, %v940
        %v5786 = vunpack.c.l.s4 1966171168
        %v5787 = vunpack.c.0.s8 %v5786
        %v5788 = vlaneseq
        %v5789 = vshrl.u32 %v5788, 7
        %v5790 = vsub.s32 %v5787, %v5789
        %v5791 = vrot.slane %v5784, %v5790
        %v5792 = vcombine.low %v3089, %v5791
        %v5794 = vunpack.c.l.s4 1966171168
        %v5795 = vunpack.c.0.s8 %v5794
        %v5796 = vlaneseq
        %v5797 = vshrl.u32 %v5796, 7
        %v5798 = vsub.s32 %v5795, %v5797
        %v5799 = vrot.slane %v5792, %v5798
        %v5800 = vcombine.low %v5799, %v3126
        %v5801 = vcombine.low %v941, %v4152
        %v5802 = vcombine.low %v4153, %v4154
        %v5803 = vcombine.low %v4169, %v4176
        %v5805 = vunpack.c.l.s4 1966171168
        %v5806 = vunpack.c.0.s8 %v5805
        %v5807 = vlaneseq
        %v5808 = vshrl.u32 %v5807, 7
        %v5809 = vsub.s32 %v5806, %v5808
        %v5810 = vrot.slane %v5801, %v5809
        %v5812 = vunpack.c.l.s4 1966171168
        %v5813 = vunpack.c.0.s8 %v5812
        %v5814 = vlaneseq
        %v5815 = vshrl.u32 %v5814, 7
        %v5816 = vsub.s32 %v5813, %v5815
        %v5817 = vrot.slane %v5802, %v5816
        %v5819 = vunpack.c.l.s4 1966171168
        %v5820 = vunpack.c.0.s8 %v5819
        %v5821 = vlaneseq
        %v5822 = vshrl.u32 %v5821, 7
        %v5823 = vsub.s32 %v5820, %v5822
        %v5824 = vrot.slane %v5803, %v5823
        %v5825 = vcombine.low %v3135, %v5810
        %v5826 = vcombine.low %v5817, %v5824
        %v5828 = vunpack.c.l.s4 1966171168
        %v5829 = vunpack.c.0.s8 %v5828
        %v5830 = vlaneseq
        %v5831 = vshrl.u32 %v5830, 7
        %v5832 = vsub.s32 %v5829, %v5831
        %v5833 = vrot.slane %v5825, %v5832
        %v5835 = vunpack.c.l.s4 1966171168
        %v5836 = vunpack.c.0.s8 %v5835
        %v5837 = vlaneseq
        %v5838 = vshrl.u32 %v5837, 7
        %v5839 = vsub.s32 %v5836, %v5838
        %v5840 = vrot.slane %v5826, %v5839
        %v5841 = vcombine.low %v5833, %v5840
        %v5842 = vcombine.low %v4177, %v4730
        %v5844 = vunpack.c.l.s4 1966171168
        %v5845 = vunpack.c.0.s8 %v5844
        %v5846 = vlaneseq
        %v5847 = vshrl.u32 %v5846, 7
        %v5848 = vsub.s32 %v5845, %v5847
        %v5849 = vrot.slane %v5842, %v5848
        %v5851 = vunpack.c.l.s4 1966171168
        %v5852 = vunpack.c.0.s8 %v5851
        %v5853 = vlaneseq
        %v5854 = vshrl.u32 %v5853, 7
        %v5855 = vsub.s32 %v5852, %v5854
        %v5856 = vrot.slane %v5849, %v5855
        %v5858 = vsel %vm2360, %v5614, 0
        %v5861 = vsel %vm2360, %v5631, 0
        %v5864 = vsel %vm2360, %v5648, 0
        %v5867 = vsel %vm2360, %v5665, 0
        %v5870 = vsel %vm2360, %v5682, 0
        %v5873 = vsel %vm2360, %v5699, 0
        %v5876 = vsel %vm2360, %v5732, 0
        %v5879 = vsel %vm2360, %v5749, 0
        %v5882 = vsel %vm2360, %v5766, 0
        %v5885 = vsel %vm2360, %v5783, 0
        %v5888 = vsel %vm2360, %v5800, 0
        %v5891 = vsel %vm2360, %v5841, 0
        %v5894 = vsel %vm2360, %v5856, 0
        %v5897 = vsel %vm2400, %v5597, 0
        %5899 = vmatprep.subr.bf16.mxu0 0
        %5900 = vmatpush1.bf16.msra.mxu0 %v5897
        %5901 = vmatprep.subr.bf16.mxu0 0
        %5902 = vmatpush1.bf16.msra.mxu0 0
        %5903 = vmatprep.subr.bf16.mxu0 0
        %5904 = vmatpush1.bf16.msra.mxu0 0
        %5905 = vmatprep.subr.bf16.mxu0 0
        %5906 = vmatpush1.bf16.msra.mxu0 0
        %5907 = vmatprep.subr.bf16.mxu0 0
        %5908 = vmatpush1.bf16.msra.mxu0 0
        %5909 = vmatprep.subr.bf16.mxu0 0
        %5910 = vmatpush1.bf16.msra.mxu0 0
        %5911 = vmatprep.subr.bf16.mxu0 0
        %5912 = vmatpush1.bf16.msra.mxu0 0
        %5913 = vmatprep.subr.bf16.mxu0 0
        %5914 = vmatpush1.bf16.msra.mxu0 0
        %5915 = vmatprep.subr.bf16.mxu0 0
        %5916 = vmatpush1.bf16.msra.mxu0 0
        %5917 = vmatprep.subr.bf16.mxu0 0
        %5918 = vmatpush1.bf16.msra.mxu0 0
        %5919 = vmatprep.subr.bf16.mxu0 0
        %5920 = vmatpush1.bf16.msra.mxu0 0
        %5921 = vmatprep.subr.bf16.mxu0 0
        %5922 = vmatpush1.bf16.msra.mxu0 0
        %5923 = vmatprep.subr.bf16.mxu0 0
        %5924 = vmatpush1.bf16.msra.mxu0 0
        %5925 = vmatprep.subr.bf16.mxu0 0
        %5926 = vmatpush1.bf16.msra.mxu0 0
        %5927 = vmatprep.subr.bf16.mxu0 0
        %5928 = vmatpush1.bf16.msra.mxu0 0
        %5929 = vmatprep.subr.bf16.mxu0 0
        %5930 = vmatpush1.bf16.msra.mxu0 0
        %5931 = vmatprep.mubr.bf16.mxu0 0
        %5932 = vmatmul.mubr.bf16.gmra.mrb[0].mxu0 %v5858
        %v5933 = vpop.f32.mrb[0].mxu0
        %v5934 = vadd.f32 0.0, %v5933
        %v5935 = vpop.f32.mrb[0].mxu0
        %v5936 = vpop.f32.mrb[0].mxu0
        %v5937 = vadd.f32 0.0, %v5936
        %v5938 = vpop.f32.mrb[0].mxu0
        %5939 = vmatprep.mubr.bf16.mxu0 0
        %5940 = vmatmul.mubr.bf16.gmra.mrb[0].mxu0 %v5861
        %v5941 = vpop.f32.mrb[0].mxu0
        %v5942 = vadd.f32 0.0, %v5941
        %v5943 = vpop.f32.mrb[0].mxu0
        %v5944 = vpop.f32.mrb[0].mxu0
        %v5945 = vadd.f32 0.0, %v5944
        %v5946 = vpop.f32.mrb[0].mxu0
        %5947 = vmatprep.mubr.bf16.mxu0 0
        %5948 = vmatmul.mubr.bf16.gmra.mrb[0].mxu0 %v5864
        %v5949 = vpop.f32.mrb[0].mxu0
        %v5950 = vadd.f32 0.0, %v5949
        %v5951 = vpop.f32.mrb[0].mxu0
        %v5952 = vpop.f32.mrb[0].mxu0
        %v5953 = vadd.f32 0.0, %v5952
        %v5954 = vpop.f32.mrb[0].mxu0
        %5955 = vmatprep.mubr.bf16.mxu0 0
        %5956 = vmatmul.mubr.bf16.gmra.mrb[0].mxu0 %v5867
        %v5957 = vpop.f32.mrb[0].mxu0
        %v5958 = vadd.f32 0.0, %v5957
        %v5959 = vpop.f32.mrb[0].mxu0
        %v5960 = vpop.f32.mrb[0].mxu0
        %v5961 = vadd.f32 0.0, %v5960
        %v5962 = vpop.f32.mrb[0].mxu0
        %5963 = vmatprep.mubr.bf16.mxu0 0
        %5964 = vmatmul.mubr.bf16.gmra.mrb[0].mxu0 %v5870
        %v5965 = vpop.f32.mrb[0].mxu0
        %v5966 = vadd.f32 0.0, %v5965
        %v5967 = vpop.f32.mrb[0].mxu0
        %v5968 = vpop.f32.mrb[0].mxu0
        %v5969 = vadd.f32 0.0, %v5968
        %v5970 = vpop.f32.mrb[0].mxu0
        %5971 = vmatprep.mubr.bf16.mxu0 0
        %5972 = vmatmul.mubr.bf16.gmra.mrb[0].mxu0 %v5873
        %v5973 = vpop.f32.mrb[0].mxu0
        %v5974 = vadd.f32 0.0, %v5973
        %v5975 = vpop.f32.mrb[0].mxu0
        %v5976 = vpop.f32.mrb[0].mxu0
        %v5977 = vadd.f32 0.0, %v5976
        %v5978 = vpop.f32.mrb[0].mxu0
        %5979 = vmatprep.mubr.bf16.mxu0 0
        %5980 = vmatmul.mubr.bf16.gmra.mrb[0].mxu0 %v5876
        %v5981 = vpop.f32.mrb[0].mxu0
        %v5982 = vadd.f32 0.0, %v5981
        %v5983 = vpop.f32.mrb[0].mxu0
        %v5984 = vpop.f32.mrb[0].mxu0
        %v5985 = vadd.f32 0.0, %v5984
        %v5986 = vpop.f32.mrb[0].mxu0
        %5987 = vmatprep.mubr.bf16.mxu0 0
        %5988 = vmatmul.mubr.bf16.gmra.mrb[0].mxu0 %v5879
        %v5989 = vpop.f32.mrb[0].mxu0
        %v5990 = vadd.f32 0.0, %v5989
        %v5991 = vpop.f32.mrb[0].mxu0
        %v5992 = vpop.f32.mrb[0].mxu0
        %v5993 = vadd.f32 0.0, %v5992
        %v5994 = vpop.f32.mrb[0].mxu0
        %5995 = vmatprep.mubr.bf16.mxu0 0
        %5996 = vmatmul.mubr.bf16.gmra.mrb[0].mxu0 %v5882
        %v5997 = vpop.f32.mrb[0].mxu0
        %v5998 = vadd.f32 0.0, %v5997
        %v5999 = vpop.f32.mrb[0].mxu0
        %v6000 = vpop.f32.mrb[0].mxu0
        %v6001 = vadd.f32 0.0, %v6000
        %v6002 = vpop.f32.mrb[0].mxu0
        %6003 = vmatprep.mubr.bf16.mxu0 0
        %6004 = vmatmul.mubr.bf16.gmra.mrb[0].mxu0 %v5885
        %v6005 = vpop.f32.mrb[0].mxu0
        %v6006 = vadd.f32 0.0, %v6005
        %v6007 = vpop.f32.mrb[0].mxu0
        %v6008 = vpop.f32.mrb[0].mxu0
        %v6009 = vadd.f32 0.0, %v6008
        %v6010 = vpop.f32.mrb[0].mxu0
        %6011 = vmatprep.mubr.bf16.mxu0 0
        %6012 = vmatmul.mubr.bf16.gmra.mrb[0].mxu0 %v5888
        %v6013 = vpop.f32.mrb[0].mxu0
        %v6014 = vadd.f32 0.0, %v6013
        %v6015 = vpop.f32.mrb[0].mxu0
        %v6016 = vpop.f32.mrb[0].mxu0
        %v6017 = vadd.f32 0.0, %v6016
        %v6018 = vpop.f32.mrb[0].mxu0
        %6019 = vmatprep.mubr.bf16.mxu0 0
        %6020 = vmatmul.mubr.bf16.gmra.mrb[0].mxu0 %v5891
        %v6021 = vpop.f32.mrb[0].mxu0
        %v6022 = vadd.f32 0.0, %v6021
        %v6023 = vpop.f32.mrb[0].mxu0
        %v6024 = vpop.f32.mrb[0].mxu0
        %v6025 = vadd.f32 0.0, %v6024
        %v6026 = vpop.f32.mrb[0].mxu0
        %6027 = vmatprep.mubr.bf16.mxu0 0
        %6028 = vmatmul.mubr.bf16.gmra.mrb[0].mxu0 %v5894
        %v6029 = vpop.f32.mrb[0].mxu0
        %v6030 = vadd.f32 0.0, %v6029
        %v6031 = vpop.f32.mrb[0].mxu0
        %v6032 = vpop.f32.mrb[0].mxu0
        %v6033 = vpop.f32.mrb[0].mxu0
        %6034 = vdwg.mxu0
        %v6035 = vadd.f32 %v5571, %v5934
        %v6036 = vadd.f32 %v5572, %v5937
        %v6037 = vadd.f32 %v5573, %v5942
        %v6038 = vadd.f32 %v5574, %v5945
        %v6039 = vadd.f32 %v5575, %v5950
        %v6040 = vadd.f32 %v5576, %v5953
        %v6041 = vadd.f32 %v5577, %v5958
        %v6042 = vadd.f32 %v5578, %v5961
        %v6043 = vadd.f32 %v5579, %v5966
        %v6044 = vadd.f32 %v5580, %v5969
        %v6045 = vadd.f32 %v5581, %v5974
        %v6046 = vadd.f32 %v5582, %v5977
        %v6047 = vadd.f32 %v5583, %v5982
        %v6048 = vadd.f32 %v5584, %v5985
        %v6049 = vadd.f32 %v5585, %v5990
        %v6050 = vadd.f32 %v5586, %v5993
        %v6051 = vadd.f32 %v5587, %v5998
        %v6052 = vadd.f32 %v5588, %v6001
        %v6053 = vadd.f32 %v5589, %v6006
        %v6054 = vadd.f32 %v5590, %v6009
        %v6055 = vadd.f32 %v5591, %v6014
        %v6056 = vadd.f32 %v5592, %v6017
        %v6057 = vadd.f32 %v5593, %v6022
        %v6058 = vadd.f32 %v5594, %v6025
        %v6059 = vadd.f32 %v5595, %v6030
        %v6063 = vunpack.c.l.s4 1966171168
        %v6064 = vunpack.c.0.s8 %v6063
        %v6065 = vlaneseq
        %v6066 = vshrl.u32 %v6065, 7
        %v6067 = vsub.s32 %v6064, %v6066
        %v6068 = vrot.slane %v239, %v6067
        %v6069 = vcombine.high %v6068, %v6068
        %v6071 = vunpack.c.l.s4 1966171168
        %v6072 = vunpack.c.0.s8 %v6071
        %v6073 = vlaneseq
        %v6074 = vshrl.u32 %v6073, 7
        %v6075 = vsub.s32 %v6072, %v6074
        %v6076 = vrot.slane %v6068, %v6075
        %v6078 = vunpack.c.l.s4 1966171168
        %v6079 = vunpack.c.0.s8 %v6078
        %v6080 = vlaneseq
        %v6081 = vshrl.u32 %v6080, 7
        %v6082 = vsub.s32 %v6079, %v6081
        %v6083 = vrot.slane %v6069, %v6082
        %v6084 = vcombine.high %v6076, %v6076
        %v6085 = vcombine.high %v6083, %v6083
        %v6087 = vunpack.c.l.s4 1966171168
        %v6088 = vunpack.c.0.s8 %v6087
        %v6089 = vlaneseq
        %v6090 = vshrl.u32 %v6089, 7
        %v6091 = vsub.s32 %v6088, %v6090
        %v6092 = vrot.slane %v240, %v6091
        %v6093 = vcombine.high %v6092, %v6092
        %v6095 = vunpack.c.l.s4 1966171168
        %v6096 = vunpack.c.0.s8 %v6095
        %v6097 = vlaneseq
        %v6098 = vshrl.u32 %v6097, 7
        %v6099 = vsub.s32 %v6096, %v6098
        %v6100 = vrot.slane %v6092, %v6099
        %v6102 = vunpack.c.l.s4 1966171168
        %v6103 = vunpack.c.0.s8 %v6102
        %v6104 = vlaneseq
        %v6105 = vshrl.u32 %v6104, 7
        %v6106 = vsub.s32 %v6103, %v6105
        %v6107 = vrot.slane %v6093, %v6106
        %v6108 = vcombine.high %v6100, %v6100
        %s6109 = scalar_lea.vmem [#allocation5], 12
        %v6110 = vld [vmem:[%s6109] sm:$0x3]
        %v6111 = vcombine.low %v2620, %v2648
        %v6112 = vcombine.low %v2655, %v2662
        %v6114 = vunpack.c.l.s4 1966171168
        %v6115 = vunpack.c.0.s8 %v6114
        %v6116 = vlaneseq
        %v6117 = vshrl.u32 %v6116, 7
        %v6118 = vsub.s32 %v6115, %v6117
        %v6119 = vrot.slane %v6111, %v6118
        %v6121 = vunpack.c.l.s4 1966171168
        %v6122 = vunpack.c.0.s8 %v6121
        %v6123 = vlaneseq
        %v6124 = vshrl.u32 %v6123, 7
        %v6125 = vsub.s32 %v6122, %v6124
        %v6126 = vrot.slane %v6112, %v6125
        %v6127 = vcombine.low %v6119, %v6126
        %v6128 = vcombine.low %v2669, %v2697
        %v6129 = vcombine.low %v2704, %v2711
        %v6131 = vunpack.c.l.s4 1966171168
        %v6132 = vunpack.c.0.s8 %v6131
        %v6133 = vlaneseq
        %v6134 = vshrl.u32 %v6133, 7
        %v6135 = vsub.s32 %v6132, %v6134
        %v6136 = vrot.slane %v6128, %v6135
        %v6138 = vunpack.c.l.s4 1966171168
        %v6139 = vunpack.c.0.s8 %v6138
        %v6140 = vlaneseq
        %v6141 = vshrl.u32 %v6140, 7
        %v6142 = vsub.s32 %v6139, %v6141
        %v6143 = vrot.slane %v6129, %v6142
        %v6144 = vcombine.low %v6136, %v6143
        %v6145 = vcombine.low %v2718, %v2746
        %v6146 = vcombine.low %v2753, %v2760
        %v6148 = vunpack.c.l.s4 1966171168
        %v6149 = vunpack.c.0.s8 %v6148
        %v6150 = vlaneseq
        %v6151 = vshrl.u32 %v6150, 7
        %v6152 = vsub.s32 %v6149, %v6151
        %v6153 = vrot.slane %v6145, %v6152
        %v6155 = vunpack.c.l.s4 1966171168
        %v6156 = vunpack.c.0.s8 %v6155
        %v6157 = vlaneseq
        %v6158 = vshrl.u32 %v6157, 7
        %v6159 = vsub.s32 %v6156, %v6158
        %v6160 = vrot.slane %v6146, %v6159
        %v6161 = vcombine.low %v6153, %v6160
        %v6162 = vcombine.low %v2767, %v2795
        %v6163 = vcombine.low %v2802, %v2809
        %v6165 = vunpack.c.l.s4 1966171168
        %v6166 = vunpack.c.0.s8 %v6165
        %v6167 = vlaneseq
        %v6168 = vshrl.u32 %v6167, 7
        %v6169 = vsub.s32 %v6166, %v6168
        %v6170 = vrot.slane %v6162, %v6169
        %v6172 = vunpack.c.l.s4 1966171168
        %v6173 = vunpack.c.0.s8 %v6172
        %v6174 = vlaneseq
        %v6175 = vshrl.u32 %v6174, 7
        %v6176 = vsub.s32 %v6173, %v6175
        %v6177 = vrot.slane %v6163, %v6176
        %v6178 = vcombine.low %v6170, %v6177
        %v6179 = vcombine.low %v2816, %v2844
        %v6180 = vcombine.low %v2851, %v2858
        %v6182 = vunpack.c.l.s4 1966171168
        %v6183 = vunpack.c.0.s8 %v6182
        %v6184 = vlaneseq
        %v6185 = vshrl.u32 %v6184, 7
        %v6186 = vsub.s32 %v6183, %v6185
        %v6187 = vrot.slane %v6179, %v6186
        %v6189 = vunpack.c.l.s4 1966171168
        %v6190 = vunpack.c.0.s8 %v6189
        %v6191 = vlaneseq
        %v6192 = vshrl.u32 %v6191, 7
        %v6193 = vsub.s32 %v6190, %v6192
        %v6194 = vrot.slane %v6180, %v6193
        %v6195 = vcombine.low %v6187, %v6194
        %v6196 = vcombine.low %v2865, %v2893
        %v6197 = vcombine.low %v2900, %v2907
        %v6199 = vunpack.c.l.s4 1966171168
        %v6200 = vunpack.c.0.s8 %v6199
        %v6201 = vlaneseq
        %v6202 = vshrl.u32 %v6201, 7
        %v6203 = vsub.s32 %v6200, %v6202
        %v6204 = vrot.slane %v6196, %v6203
        %v6206 = vunpack.c.l.s4 1966171168
        %v6207 = vunpack.c.0.s8 %v6206
        %v6208 = vlaneseq
        %v6209 = vshrl.u32 %v6208, 7
        %v6210 = vsub.s32 %v6207, %v6209
        %v6211 = vrot.slane %v6197, %v6210
        %v6212 = vcombine.low %v6204, %v6211
        %v6213 = vcombine.low %v2914, %v2942
        %v6214 = vcombine.low %v2949, %v2956
        %v6216 = vunpack.c.l.s4 1966171168
        %v6217 = vunpack.c.0.s8 %v6216
        %v6218 = vlaneseq
        %v6219 = vshrl.u32 %v6218, 7
        %v6220 = vsub.s32 %v6217, %v6219
        %v6221 = vrot.slane %v6213, %v6220
        %v6223 = vunpack.c.l.s4 1966171168
        %v6224 = vunpack.c.0.s8 %v6223
        %v6225 = vlaneseq
        %v6226 = vshrl.u32 %v6225, 7
        %v6227 = vsub.s32 %v6224, %v6226
        %v6228 = vrot.slane %v6214, %v6227
        %v6229 = vcombine.low %v6221, %v6228
        %v6230 = vcombine.low %v2963, %v2991
        %v6231 = vcombine.low %v2998, %v3005
        %v6233 = vunpack.c.l.s4 1966171168
        %v6234 = vunpack.c.0.s8 %v6233
        %v6235 = vlaneseq
        %v6236 = vshrl.u32 %v6235, 7
        %v6237 = vsub.s32 %v6234, %v6236
        %v6238 = vrot.slane %v6230, %v6237
        %v6240 = vunpack.c.l.s4 1966171168
        %v6241 = vunpack.c.0.s8 %v6240
        %v6242 = vlaneseq
        %v6243 = vshrl.u32 %v6242, 7
        %v6244 = vsub.s32 %v6241, %v6243
        %v6245 = vrot.slane %v6231, %v6244
        %v6246 = vcombine.low %v6238, %v6245
        %v6247 = vcombine.low %v3012, %v3040
        %v6248 = vcombine.low %v3047, %v3054
        %v6250 = vunpack.c.l.s4 1966171168
        %v6251 = vunpack.c.0.s8 %v6250
        %v6252 = vlaneseq
        %v6253 = vshrl.u32 %v6252, 7
        %v6254 = vsub.s32 %v6251, %v6253
        %v6255 = vrot.slane %v6247, %v6254
        %v6257 = vunpack.c.l.s4 1966171168
        %v6258 = vunpack.c.0.s8 %v6257
        %v6259 = vlaneseq
        %v6260 = vshrl.u32 %v6259, 7
        %v6261 = vsub.s32 %v6258, %v6260
        %v6262 = vrot.slane %v6248, %v6261
        %v6263 = vcombine.low %v6255, %v6262
        %v6264 = vcombine.low %v3061, %v3089
        %v6265 = vcombine.low %v3096, %v3103
        %v6267 = vunpack.c.l.s4 1966171168
        %v6268 = vunpack.c.0.s8 %v6267
        %v6269 = vlaneseq
        %v6270 = vshrl.u32 %v6269, 7
        %v6271 = vsub.s32 %v6268, %v6270
        %v6272 = vrot.slane %v6264, %v6271
        %v6274 = vunpack.c.l.s4 1966171168
        %v6275 = vunpack.c.0.s8 %v6274
        %v6276 = vlaneseq
        %v6277 = vshrl.u32 %v6276, 7
        %v6278 = vsub.s32 %v6275, %v6277
        %v6279 = vrot.slane %v6265, %v6278
        %v6280 = vcombine.low %v6272, %v6279
        %v6281 = vcombine.low %v4145, %v4152
        %v6283 = vunpack.c.l.s4 1966171168
        %v6284 = vunpack.c.0.s8 %v6283
        %v6285 = vlaneseq
        %v6286 = vshrl.u32 %v6285, 7
        %v6287 = vsub.s32 %v6284, %v6286
        %v6288 = vrot.slane %v6281, %v6287
        %v6289 = vcombine.low %v3110, %v3135
        %v6290 = vcombine.low %v6288, %v5817
        %v6292 = vunpack.c.l.s4 1966171168
        %v6293 = vunpack.c.0.s8 %v6292
        %v6294 = vlaneseq
        %v6295 = vshrl.u32 %v6294, 7
        %v6296 = vsub.s32 %v6293, %v6295
        %v6297 = vrot.slane %v6289, %v6296
        %v6299 = vunpack.c.l.s4 1966171168
        %v6300 = vunpack.c.0.s8 %v6299
        %v6301 = vlaneseq
        %v6302 = vshrl.u32 %v6301, 7
        %v6303 = vsub.s32 %v6300, %v6302
        %v6304 = vrot.slane %v6290, %v6303
        %v6305 = vcombine.low %v6297, %v6304
        %v6306 = vcombine.low %v4177, %v6076
        %v6307 = vcombine.low %v6083, %v6084
        %v6308 = vcombine.low %v6085, %v6100
        %v6310 = vunpack.c.l.s4 1966171168
        %v6311 = vunpack.c.0.s8 %v6310
        %v6312 = vlaneseq
        %v6313 = vshrl.u32 %v6312, 7
        %v6314 = vsub.s32 %v6311, %v6313
        %v6315 = vrot.slane %v6306, %v6314
        %v6317 = vunpack.c.l.s4 1966171168
        %v6318 = vunpack.c.0.s8 %v6317
        %v6319 = vlaneseq
        %v6320 = vshrl.u32 %v6319, 7
        %v6321 = vsub.s32 %v6318, %v6320
        %v6322 = vrot.slane %v6307, %v6321
        %v6324 = vunpack.c.l.s4 1966171168
        %v6325 = vunpack.c.0.s8 %v6324
        %v6326 = vlaneseq
        %v6327 = vshrl.u32 %v6326, 7
        %v6328 = vsub.s32 %v6325, %v6327
        %v6329 = vrot.slane %v6308, %v6328
        %v6330 = vcombine.low %v5824, %v6315
        %v6331 = vcombine.low %v6322, %v6329
        %v6333 = vunpack.c.l.s4 1966171168
        %v6334 = vunpack.c.0.s8 %v6333
        %v6335 = vlaneseq
        %v6336 = vshrl.u32 %v6335, 7
        %v6337 = vsub.s32 %v6334, %v6336
        %v6338 = vrot.slane %v6330, %v6337
        %v6340 = vunpack.c.l.s4 1966171168
        %v6341 = vunpack.c.0.s8 %v6340
        %v6342 = vlaneseq
        %v6343 = vshrl.u32 %v6342, 7
        %v6344 = vsub.s32 %v6341, %v6343
        %v6345 = vrot.slane %v6331, %v6344
        %v6346 = vcombine.low %v6338, %v6345
        %v6347 = vcombine.low %v6107, %v6108
        %v6349 = vunpack.c.l.s4 1966171168
        %v6350 = vunpack.c.0.s8 %v6349
        %v6351 = vlaneseq
        %v6352 = vshrl.u32 %v6351, 7
        %v6353 = vsub.s32 %v6350, %v6352
        %v6354 = vrot.slane %v6347, %v6353
        %v6356 = vunpack.c.l.s4 1966171168
        %v6357 = vunpack.c.0.s8 %v6356
        %v6358 = vlaneseq
        %v6359 = vshrl.u32 %v6358, 7
        %v6360 = vsub.s32 %v6357, %v6359
        %v6361 = vrot.slane %v6354, %v6360
        %v6363 = vsel %vm2360, %v6127, 0
        %v6366 = vsel %vm2360, %v6144, 0
        %v6369 = vsel %vm2360, %v6161, 0
        %v6372 = vsel %vm2360, %v6178, 0
        %v6375 = vsel %vm2360, %v6195, 0
        %v6378 = vsel %vm2360, %v6212, 0
        %v6381 = vsel %vm2360, %v6229, 0
        %v6384 = vsel %vm2360, %v6246, 0
        %v6387 = vsel %vm2360, %v6263, 0
        %v6390 = vsel %vm2360, %v6280, 0
        %v6393 = vsel %vm2360, %v6305, 0
        %v6396 = vsel %vm2360, %v6346, 0
        %v6399 = vsel %vm2360, %v6361, 0
        %v6402 = vsel %vm2400, %v6110, 0
        %6404 = vmatprep.subr.bf16.mxu0 0
        %6405 = vmatpush1.bf16.msra.mxu0 %v6402
        %6406 = vmatprep.subr.bf16.mxu0 0
        %6407 = vmatpush1.bf16.msra.mxu0 0
        %6408 = vmatprep.subr.bf16.mxu0 0
        %6409 = vmatpush1.bf16.msra.mxu0 0
        %6410 = vmatprep.subr.bf16.mxu0 0
        %6411 = vmatpush1.bf16.msra.mxu0 0
        %6412 = vmatprep.subr.bf16.mxu0 0
        %6413 = vmatpush1.bf16.msra.mxu0 0
        %6414 = vmatprep.subr.bf16.mxu0 0
        %6415 = vmatpush1.bf16.msra.mxu0 0
        %6416 = vmatprep.subr.bf16.mxu0 0
        %6417 = vmatpush1.bf16.msra.mxu0 0
        %6418 = vmatprep.subr.bf16.mxu0 0
        %6419 = vmatpush1.bf16.msra.mxu0 0
        %6420 = vmatprep.subr.bf16.mxu0 0
        %6421 = vmatpush1.bf16.msra.mxu0 0
        %6422 = vmatprep.subr.bf16.mxu0 0
        %6423 = vmatpush1.bf16.msra.mxu0 0
        %6424 = vmatprep.subr.bf16.mxu0 0
        %6425 = vmatpush1.bf16.msra.mxu0 0
        %6426 = vmatprep.subr.bf16.mxu0 0
        %6427 = vmatpush1.bf16.msra.mxu0 0
        %6428 = vmatprep.subr.bf16.mxu0 0
        %6429 = vmatpush1.bf16.msra.mxu0 0
        %6430 = vmatprep.subr.bf16.mxu0 0
        %6431 = vmatpush1.bf16.msra.mxu0 0
        %6432 = vmatprep.subr.bf16.mxu0 0
        %6433 = vmatpush1.bf16.msra.mxu0 0
        %6434 = vmatprep.subr.bf16.mxu0 0
        %6435 = vmatpush1.bf16.msra.mxu0 0
        %6436 = vmatprep.mubr.bf16.mxu0 0
        %6437 = vmatmul.mubr.bf16.gmra.mrb[0].mxu0 %v6363
        %v6438 = vpop.f32.mrb[0].mxu0
        %v6439 = vadd.f32 0.0, %v6438
        %v6440 = vpop.f32.mrb[0].mxu0
        %v6441 = vpop.f32.mrb[0].mxu0
        %v6442 = vadd.f32 0.0, %v6441
        %v6443 = vpop.f32.mrb[0].mxu0
        %6444 = vmatprep.mubr.bf16.mxu0 0
        %6445 = vmatmul.mubr.bf16.gmra.mrb[0].mxu0 %v6366
        %v6446 = vpop.f32.mrb[0].mxu0
        %v6447 = vadd.f32 0.0, %v6446
        %v6448 = vpop.f32.mrb[0].mxu0
        %v6449 = vpop.f32.mrb[0].mxu0
        %v6450 = vadd.f32 0.0, %v6449
        %v6451 = vpop.f32.mrb[0].mxu0
        %6452 = vmatprep.mubr.bf16.mxu0 0
        %6453 = vmatmul.mubr.bf16.gmra.mrb[0].mxu0 %v6369
        %v6454 = vpop.f32.mrb[0].mxu0
        %v6455 = vadd.f32 0.0, %v6454
        %v6456 = vpop.f32.mrb[0].mxu0
        %v6457 = vpop.f32.mrb[0].mxu0
        %v6458 = vadd.f32 0.0, %v6457
        %v6459 = vpop.f32.mrb[0].mxu0
        %6460 = vmatprep.mubr.bf16.mxu0 0
        %6461 = vmatmul.mubr.bf16.gmra.mrb[0].mxu0 %v6372
        %v6462 = vpop.f32.mrb[0].mxu0
        %v6463 = vadd.f32 0.0, %v6462
        %v6464 = vpop.f32.mrb[0].mxu0
        %v6465 = vpop.f32.mrb[0].mxu0
        %v6466 = vadd.f32 0.0, %v6465
        %v6467 = vpop.f32.mrb[0].mxu0
        %6468 = vmatprep.mubr.bf16.mxu0 0
        %6469 = vmatmul.mubr.bf16.gmra.mrb[0].mxu0 %v6375
        %v6470 = vpop.f32.mrb[0].mxu0
        %v6471 = vadd.f32 0.0, %v6470
        %v6472 = vpop.f32.mrb[0].mxu0
        %v6473 = vpop.f32.mrb[0].mxu0
        %v6474 = vadd.f32 0.0, %v6473
        %v6475 = vpop.f32.mrb[0].mxu0
        %6476 = vmatprep.mubr.bf16.mxu0 0
        %6477 = vmatmul.mubr.bf16.gmra.mrb[0].mxu0 %v6378
        %v6478 = vpop.f32.mrb[0].mxu0
        %v6479 = vadd.f32 0.0, %v6478
        %v6480 = vpop.f32.mrb[0].mxu0
        %v6481 = vpop.f32.mrb[0].mxu0
        %v6482 = vadd.f32 0.0, %v6481
        %v6483 = vpop.f32.mrb[0].mxu0
        %6484 = vmatprep.mubr.bf16.mxu0 0
        %6485 = vmatmul.mubr.bf16.gmra.mrb[0].mxu0 %v6381
        %v6486 = vpop.f32.mrb[0].mxu0
        %v6487 = vadd.f32 0.0, %v6486
        %v6488 = vpop.f32.mrb[0].mxu0
        %v6489 = vpop.f32.mrb[0].mxu0
        %v6490 = vadd.f32 0.0, %v6489
        %v6491 = vpop.f32.mrb[0].mxu0
        %6492 = vmatprep.mubr.bf16.mxu0 0
        %6493 = vmatmul.mubr.bf16.gmra.mrb[0].mxu0 %v6384
        %v6494 = vpop.f32.mrb[0].mxu0
        %v6495 = vadd.f32 0.0, %v6494
        %v6496 = vpop.f32.mrb[0].mxu0
        %v6497 = vpop.f32.mrb[0].mxu0
        %v6498 = vadd.f32 0.0, %v6497
        %v6499 = vpop.f32.mrb[0].mxu0
        %6500 = vmatprep.mubr.bf16.mxu0 0
        %6501 = vmatmul.mubr.bf16.gmra.mrb[0].mxu0 %v6387
        %v6502 = vpop.f32.mrb[0].mxu0
        %v6503 = vadd.f32 0.0, %v6502
        %v6504 = vpop.f32.mrb[0].mxu0
        %v6505 = vpop.f32.mrb[0].mxu0
        %v6506 = vadd.f32 0.0, %v6505
        %v6507 = vpop.f32.mrb[0].mxu0
        %6508 = vmatprep.mubr.bf16.mxu0 0
        %6509 = vmatmul.mubr.bf16.gmra.mrb[0].mxu0 %v6390
        %v6510 = vpop.f32.mrb[0].mxu0
        %v6511 = vadd.f32 0.0, %v6510
        %v6512 = vpop.f32.mrb[0].mxu0
        %v6513 = vpop.f32.mrb[0].mxu0
        %v6514 = vadd.f32 0.0, %v6513
        %v6515 = vpop.f32.mrb[0].mxu0
        %6516 = vmatprep.mubr.bf16.mxu0 0
        %6517 = vmatmul.mubr.bf16.gmra.mrb[0].mxu0 %v6393
        %v6518 = vpop.f32.mrb[0].mxu0
        %v6519 = vadd.f32 0.0, %v6518
        %v6520 = vpop.f32.mrb[0].mxu0
        %v6521 = vpop.f32.mrb[0].mxu0
        %v6522 = vadd.f32 0.0, %v6521
        %v6523 = vpop.f32.mrb[0].mxu0
        %6524 = vmatprep.mubr.bf16.mxu0 0
        %6525 = vmatmul.mubr.bf16.gmra.mrb[0].mxu0 %v6396
        %v6526 = vpop.f32.mrb[0].mxu0
        %v6527 = vadd.f32 0.0, %v6526
        %v6528 = vpop.f32.mrb[0].mxu0
        %v6529 = vpop.f32.mrb[0].mxu0
        %v6530 = vadd.f32 0.0, %v6529
        %v6531 = vpop.f32.mrb[0].mxu0
        %6532 = vmatprep.mubr.bf16.mxu0 0
        %6533 = vmatmul.mubr.bf16.gmra.mrb[0].mxu0 %v6399
        %v6534 = vpop.f32.mrb[0].mxu0
        %v6535 = vadd.f32 0.0, %v6534
        %v6536 = vpop.f32.mrb[0].mxu0
        %v6537 = vpop.f32.mrb[0].mxu0
        %v6538 = vpop.f32.mrb[0].mxu0
        %6539 = vdwg.mxu0
        %v6540 = vadd.f32 %v6035, %v6439
        %v6541 = vadd.f32 %v6036, %v6442
        %v6542 = vadd.f32 %v6037, %v6447
        %v6543 = vadd.f32 %v6038, %v6450
        %v6544 = vadd.f32 %v6039, %v6455
        %v6545 = vadd.f32 %v6040, %v6458
        %v6546 = vadd.f32 %v6041, %v6463
        %v6547 = vadd.f32 %v6042, %v6466
        %v6548 = vadd.f32 %v6043, %v6471
        %v6549 = vadd.f32 %v6044, %v6474
        %v6550 = vadd.f32 %v6045, %v6479
        %v6551 = vadd.f32 %v6046, %v6482
        %v6552 = vadd.f32 %v6047, %v6487
        %v6553 = vadd.f32 %v6048, %v6490
        %v6554 = vadd.f32 %v6049, %v6495
        %v6555 = vadd.f32 %v6050, %v6498
        %v6556 = vadd.f32 %v6051, %v6503
        %v6557 = vadd.f32 %v6052, %v6506
        %v6558 = vadd.f32 %v6053, %v6511
        %v6559 = vadd.f32 %v6054, %v6514
        %v6560 = vadd.f32 %v6055, %v6519
        %v6561 = vadd.f32 %v6056, %v6522
        %v6562 = vadd.f32 %v6057, %v6527
        %v6563 = vadd.f32 %v6058, %v6530
        %v6564 = vadd.f32 %v6059, %v6535
        %v6565 = vcombine.high %v6107, %v6107
        %v6567 = vshrl.u32 %v6076, 16
        %v6569 = vrot.slane %v6567, 7
        %v6570 = vrot.slane %v6569, 1
        %v6572 = vshll.u32 %v6083, 16
        %v6574 = vsel %vm956, %v6570, %v6572
        %v6575 = vshrl.u32 %v6083, 16
        %v6577 = vrot.slane %v6575, 7
        %v6578 = vrot.slane %v6577, 1
        %v6580 = vshll.u32 %v6084, 16
        %v6582 = vsel %vm956, %v6578, %v6580
        %v6583 = vshrl.u32 %v6084, 16
        %v6585 = vrot.slane %v6583, 7
        %v6586 = vrot.slane %v6585, 1
        %v6588 = vshll.u32 %v6085, 16
        %v6590 = vsel %vm956, %v6586, %v6588
        %v6591 = vshrl.u32 %v6085, 16
        %v6593 = vrot.slane %v6591, 7
        %v6594 = vrot.slane %v6593, 1
        %v6596 = vshll.u32 %v6100, 16
        %v6598 = vsel %vm956, %v6594, %v6596
        %v6599 = vshrl.u32 %v6100, 16
        %v6601 = vrot.slane %v6599, 7
        %v6602 = vrot.slane %v6601, 1
        %v6604 = vshll.u32 %v6107, 16
        %v6606 = vsel %vm956, %v6602, %v6604
        %v6607 = vshrl.u32 %v6107, 16
        %v6609 = vrot.slane %v6607, 7
        %v6610 = vrot.slane %v6609, 1
        %v6612 = vshll.u32 %v6108, 16
        %v6614 = vsel %vm956, %v6610, %v6612
        %v6615 = vshrl.u32 %v6108, 16
        %v6617 = vrot.slane %v6615, 7
        %v6618 = vrot.slane %v6617, 1
        %v6620 = vshll.u32 %v6565, 16
        %v6622 = vsel %vm956, %v6618, %v6620
        %s6623 = scalar_lea.vmem [#allocation5], 14
        %v6624 = vld [vmem:[%s6623] sm:$0x3]
        %v6625 = vcombine.low %v1837, %v1865
        %v6626 = vcombine.low %v1872, %v1879
        %v6628 = vunpack.c.l.s4 1966171168
        %v6629 = vunpack.c.0.s8 %v6628
        %v6630 = vlaneseq
        %v6631 = vshrl.u32 %v6630, 7
        %v6632 = vsub.s32 %v6629, %v6631
        %v6633 = vrot.slane %v6625, %v6632
        %v6635 = vunpack.c.l.s4 1966171168
        %v6636 = vunpack.c.0.s8 %v6635
        %v6637 = vlaneseq
        %v6638 = vshrl.u32 %v6637, 7
        %v6639 = vsub.s32 %v6636, %v6638
        %v6640 = vrot.slane %v6626, %v6639
        %v6641 = vcombine.low %v6633, %v6640
        %v6642 = vcombine.low %v1886, %v1914
        %v6643 = vcombine.low %v1921, %v1928
        %v6645 = vunpack.c.l.s4 1966171168
        %v6646 = vunpack.c.0.s8 %v6645
        %v6647 = vlaneseq
        %v6648 = vshrl.u32 %v6647, 7
        %v6649 = vsub.s32 %v6646, %v6648
        %v6650 = vrot.slane %v6642, %v6649
        %v6652 = vunpack.c.l.s4 1966171168
        %v6653 = vunpack.c.0.s8 %v6652
        %v6654 = vlaneseq
        %v6655 = vshrl.u32 %v6654, 7
        %v6656 = vsub.s32 %v6653, %v6655
        %v6657 = vrot.slane %v6643, %v6656
        %v6658 = vcombine.low %v6650, %v6657
        %v6659 = vcombine.low %v1935, %v1963
        %v6660 = vcombine.low %v1970, %v1977
        %v6662 = vunpack.c.l.s4 1966171168
        %v6663 = vunpack.c.0.s8 %v6662
        %v6664 = vlaneseq
        %v6665 = vshrl.u32 %v6664, 7
        %v6666 = vsub.s32 %v6663, %v6665
        %v6667 = vrot.slane %v6659, %v6666
        %v6669 = vunpack.c.l.s4 1966171168
        %v6670 = vunpack.c.0.s8 %v6669
        %v6671 = vlaneseq
        %v6672 = vshrl.u32 %v6671, 7
        %v6673 = vsub.s32 %v6670, %v6672
        %v6674 = vrot.slane %v6660, %v6673
        %v6675 = vcombine.low %v6667, %v6674
        %v6676 = vcombine.low %v1984, %v2012
        %v6677 = vcombine.low %v2019, %v2026
        %v6679 = vunpack.c.l.s4 1966171168
        %v6680 = vunpack.c.0.s8 %v6679
        %v6681 = vlaneseq
        %v6682 = vshrl.u32 %v6681, 7
        %v6683 = vsub.s32 %v6680, %v6682
        %v6684 = vrot.slane %v6676, %v6683
        %v6686 = vunpack.c.l.s4 1966171168
        %v6687 = vunpack.c.0.s8 %v6686
        %v6688 = vlaneseq
        %v6689 = vshrl.u32 %v6688, 7
        %v6690 = vsub.s32 %v6687, %v6689
        %v6691 = vrot.slane %v6677, %v6690
        %v6692 = vcombine.low %v6684, %v6691
        %v6693 = vcombine.low %v2033, %v2061
        %v6694 = vcombine.low %v2068, %v2075
        %v6696 = vunpack.c.l.s4 1966171168
        %v6697 = vunpack.c.0.s8 %v6696
        %v6698 = vlaneseq
        %v6699 = vshrl.u32 %v6698, 7
        %v6700 = vsub.s32 %v6697, %v6699
        %v6701 = vrot.slane %v6693, %v6700
        %v6703 = vunpack.c.l.s4 1966171168
        %v6704 = vunpack.c.0.s8 %v6703
        %v6705 = vlaneseq
        %v6706 = vshrl.u32 %v6705, 7
        %v6707 = vsub.s32 %v6704, %v6706
        %v6708 = vrot.slane %v6694, %v6707
        %v6709 = vcombine.low %v6701, %v6708
        %v6710 = vcombine.low %v2082, %v2110
        %v6711 = vcombine.low %v2117, %v2124
        %v6713 = vunpack.c.l.s4 1966171168
        %v6714 = vunpack.c.0.s8 %v6713
        %v6715 = vlaneseq
        %v6716 = vshrl.u32 %v6715, 7
        %v6717 = vsub.s32 %v6714, %v6716
        %v6718 = vrot.slane %v6710, %v6717
        %v6720 = vunpack.c.l.s4 1966171168
        %v6721 = vunpack.c.0.s8 %v6720
        %v6722 = vlaneseq
        %v6723 = vshrl.u32 %v6722, 7
        %v6724 = vsub.s32 %v6721, %v6723
        %v6725 = vrot.slane %v6711, %v6724
        %v6726 = vcombine.low %v6718, %v6725
        %v6727 = vcombine.low %v2131, %v2159
        %v6728 = vcombine.low %v2166, %v2173
        %v6730 = vunpack.c.l.s4 1966171168
        %v6731 = vunpack.c.0.s8 %v6730
        %v6732 = vlaneseq
        %v6733 = vshrl.u32 %v6732, 7
        %v6734 = vsub.s32 %v6731, %v6733
        %v6735 = vrot.slane %v6727, %v6734
        %v6737 = vunpack.c.l.s4 1966171168
        %v6738 = vunpack.c.0.s8 %v6737
        %v6739 = vlaneseq
        %v6740 = vshrl.u32 %v6739, 7
        %v6741 = vsub.s32 %v6738, %v6740
        %v6742 = vrot.slane %v6728, %v6741
        %v6743 = vcombine.low %v6735, %v6742
        %v6744 = vcombine.low %v2180, %v2208
        %v6745 = vcombine.low %v2215, %v2222
        %v6747 = vunpack.c.l.s4 1966171168
        %v6748 = vunpack.c.0.s8 %v6747
        %v6749 = vlaneseq
        %v6750 = vshrl.u32 %v6749, 7
        %v6751 = vsub.s32 %v6748, %v6750
        %v6752 = vrot.slane %v6744, %v6751
        %v6754 = vunpack.c.l.s4 1966171168
        %v6755 = vunpack.c.0.s8 %v6754
        %v6756 = vlaneseq
        %v6757 = vshrl.u32 %v6756, 7
        %v6758 = vsub.s32 %v6755, %v6757
        %v6759 = vrot.slane %v6745, %v6758
        %v6760 = vcombine.low %v6752, %v6759
        %v6761 = vcombine.low %v2229, %v2257
        %v6762 = vcombine.low %v2264, %v2271
        %v6764 = vunpack.c.l.s4 1966171168
        %v6765 = vunpack.c.0.s8 %v6764
        %v6766 = vlaneseq
        %v6767 = vshrl.u32 %v6766, 7
        %v6768 = vsub.s32 %v6765, %v6767
        %v6769 = vrot.slane %v6761, %v6768
        %v6771 = vunpack.c.l.s4 1966171168
        %v6772 = vunpack.c.0.s8 %v6771
        %v6773 = vlaneseq
        %v6774 = vshrl.u32 %v6773, 7
        %v6775 = vsub.s32 %v6772, %v6774
        %v6776 = vrot.slane %v6762, %v6775
        %v6777 = vcombine.low %v6769, %v6776
        %v6778 = vcombine.low %v2278, %v2306
        %v6779 = vcombine.low %v2313, %v2320
        %v6781 = vunpack.c.l.s4 1966171168
        %v6782 = vunpack.c.0.s8 %v6781
        %v6783 = vlaneseq
        %v6784 = vshrl.u32 %v6783, 7
        %v6785 = vsub.s32 %v6782, %v6784
        %v6786 = vrot.slane %v6778, %v6785
        %v6788 = vunpack.c.l.s4 1966171168
        %v6789 = vunpack.c.0.s8 %v6788
        %v6790 = vlaneseq
        %v6791 = vshrl.u32 %v6790, 7
        %v6792 = vsub.s32 %v6789, %v6791
        %v6793 = vrot.slane %v6779, %v6792
        %v6794 = vcombine.low %v6786, %v6793
        %v6795 = vcombine.low %v4739, %v4747
        %v6796 = vcombine.low %v4755, %v4763
        %v6798 = vunpack.c.l.s4 1966171168
        %v6799 = vunpack.c.0.s8 %v6798
        %v6800 = vlaneseq
        %v6801 = vshrl.u32 %v6800, 7
        %v6802 = vsub.s32 %v6799, %v6801
        %v6803 = vrot.slane %v6795, %v6802
        %v6805 = vunpack.c.l.s4 1966171168
        %v6806 = vunpack.c.0.s8 %v6805
        %v6807 = vlaneseq
        %v6808 = vshrl.u32 %v6807, 7
        %v6809 = vsub.s32 %v6806, %v6808
        %v6810 = vrot.slane %v6796, %v6809
        %v6811 = vcombine.low %v2327, %v2352
        %v6812 = vcombine.low %v6803, %v6810
        %v6814 = vunpack.c.l.s4 1966171168
        %v6815 = vunpack.c.0.s8 %v6814
        %v6816 = vlaneseq
        %v6817 = vshrl.u32 %v6816, 7
        %v6818 = vsub.s32 %v6815, %v6817
        %v6819 = vrot.slane %v6811, %v6818
        %v6821 = vunpack.c.l.s4 1966171168
        %v6822 = vunpack.c.0.s8 %v6821
        %v6823 = vlaneseq
        %v6824 = vshrl.u32 %v6823, 7
        %v6825 = vsub.s32 %v6822, %v6824
        %v6826 = vrot.slane %v6812, %v6825
        %v6827 = vcombine.low %v6819, %v6826
        %v6828 = vcombine.low %v4771, %v4779
        %v6829 = vcombine.low %v4787, %v6574
        %v6830 = vcombine.low %v6582, %v6590
        %v6831 = vcombine.low %v6598, %v6606
        %v6833 = vunpack.c.l.s4 1966171168
        %v6834 = vunpack.c.0.s8 %v6833
        %v6835 = vlaneseq
        %v6836 = vshrl.u32 %v6835, 7
        %v6837 = vsub.s32 %v6834, %v6836
        %v6838 = vrot.slane %v6828, %v6837
        %v6840 = vunpack.c.l.s4 1966171168
        %v6841 = vunpack.c.0.s8 %v6840
        %v6842 = vlaneseq
        %v6843 = vshrl.u32 %v6842, 7
        %v6844 = vsub.s32 %v6841, %v6843
        %v6845 = vrot.slane %v6829, %v6844
        %v6847 = vunpack.c.l.s4 1966171168
        %v6848 = vunpack.c.0.s8 %v6847
        %v6849 = vlaneseq
        %v6850 = vshrl.u32 %v6849, 7
        %v6851 = vsub.s32 %v6848, %v6850
        %v6852 = vrot.slane %v6830, %v6851
        %v6854 = vunpack.c.l.s4 1966171168
        %v6855 = vunpack.c.0.s8 %v6854
        %v6856 = vlaneseq
        %v6857 = vshrl.u32 %v6856, 7
        %v6858 = vsub.s32 %v6855, %v6857
        %v6859 = vrot.slane %v6831, %v6858
        %v6860 = vcombine.low %v6838, %v6845
        %v6861 = vcombine.low %v6852, %v6859
        %v6863 = vunpack.c.l.s4 1966171168
        %v6864 = vunpack.c.0.s8 %v6863
        %v6865 = vlaneseq
        %v6866 = vshrl.u32 %v6865, 7
        %v6867 = vsub.s32 %v6864, %v6866
        %v6868 = vrot.slane %v6860, %v6867
        %v6870 = vunpack.c.l.s4 1966171168
        %v6871 = vunpack.c.0.s8 %v6870
        %v6872 = vlaneseq
        %v6873 = vshrl.u32 %v6872, 7
        %v6874 = vsub.s32 %v6871, %v6873
        %v6875 = vrot.slane %v6861, %v6874
        %v6876 = vcombine.low %v6868, %v6875
        %v6877 = vcombine.low %v6614, %v6622
        %v6879 = vunpack.c.l.s4 1966171168
        %v6880 = vunpack.c.0.s8 %v6879
        %v6881 = vlaneseq
        %v6882 = vshrl.u32 %v6881, 7
        %v6883 = vsub.s32 %v6880, %v6882
        %v6884 = vrot.slane %v6877, %v6883
        %v6886 = vunpack.c.l.s4 1966171168
        %v6887 = vunpack.c.0.s8 %v6886
        %v6888 = vlaneseq
        %v6889 = vshrl.u32 %v6888, 7
        %v6890 = vsub.s32 %v6887, %v6889
        %v6891 = vrot.slane %v6884, %v6890
        %v6893 = vsel %vm2360, %v6641, 0
        %v6896 = vsel %vm2360, %v6658, 0
        %v6899 = vsel %vm2360, %v6675, 0
        %v6902 = vsel %vm2360, %v6692, 0
        %v6905 = vsel %vm2360, %v6709, 0
        %v6908 = vsel %vm2360, %v6726, 0
        %v6911 = vsel %vm2360, %v6743, 0
        %v6914 = vsel %vm2360, %v6760, 0
        %v6917 = vsel %vm2360, %v6777, 0
        %v6920 = vsel %vm2360, %v6794, 0
        %v6923 = vsel %vm2360, %v6827, 0
        %v6926 = vsel %vm2360, %v6876, 0
        %v6929 = vsel %vm2360, %v6891, 0
        %v6932 = vsel %vm2400, %v6624, 0
        %6934 = vmatprep.subr.bf16.mxu0 0
        %6935 = vmatpush1.bf16.msra.mxu0 %v6932
        %6936 = vmatprep.subr.bf16.mxu0 0
        %6937 = vmatpush1.bf16.msra.mxu0 0
        %6938 = vmatprep.subr.bf16.mxu0 0
        %6939 = vmatpush1.bf16.msra.mxu0 0
        %6940 = vmatprep.subr.bf16.mxu0 0
        %6941 = vmatpush1.bf16.msra.mxu0 0
        %6942 = vmatprep.subr.bf16.mxu0 0
        %6943 = vmatpush1.bf16.msra.mxu0 0
        %6944 = vmatprep.subr.bf16.mxu0 0
        %6945 = vmatpush1.bf16.msra.mxu0 0
        %6946 = vmatprep.subr.bf16.mxu0 0
        %6947 = vmatpush1.bf16.msra.mxu0 0
        %6948 = vmatprep.subr.bf16.mxu0 0
        %6949 = vmatpush1.bf16.msra.mxu0 0
        %6950 = vmatprep.subr.bf16.mxu0 0
        %6951 = vmatpush1.bf16.msra.mxu0 0
        %6952 = vmatprep.subr.bf16.mxu0 0
        %6953 = vmatpush1.bf16.msra.mxu0 0
        %6954 = vmatprep.subr.bf16.mxu0 0
        %6955 = vmatpush1.bf16.msra.mxu0 0
        %6956 = vmatprep.subr.bf16.mxu0 0
        %6957 = vmatpush1.bf16.msra.mxu0 0
        %6958 = vmatprep.subr.bf16.mxu0 0
        %6959 = vmatpush1.bf16.msra.mxu0 0
        %6960 = vmatprep.subr.bf16.mxu0 0
        %6961 = vmatpush1.bf16.msra.mxu0 0
        %6962 = vmatprep.subr.bf16.mxu0 0
        %6963 = vmatpush1.bf16.msra.mxu0 0
        %6964 = vmatprep.subr.bf16.mxu0 0
        %6965 = vmatpush1.bf16.msra.mxu0 0
        %6966 = vmatprep.mubr.bf16.mxu0 0
        %6967 = vmatmul.mubr.bf16.gmra.mrb[0].mxu0 %v6893
        %v6968 = vpop.f32.mrb[0].mxu0
        %v6969 = vadd.f32 0.0, %v6968
        %v6970 = vpop.f32.mrb[0].mxu0
        %v6971 = vpop.f32.mrb[0].mxu0
        %v6972 = vadd.f32 0.0, %v6971
        %v6973 = vpop.f32.mrb[0].mxu0
        %6974 = vmatprep.mubr.bf16.mxu0 0
        %6975 = vmatmul.mubr.bf16.gmra.mrb[0].mxu0 %v6896
        %v6976 = vpop.f32.mrb[0].mxu0
        %v6977 = vadd.f32 0.0, %v6976
        %v6978 = vpop.f32.mrb[0].mxu0
        %v6979 = vpop.f32.mrb[0].mxu0
        %v6980 = vadd.f32 0.0, %v6979
        %v6981 = vpop.f32.mrb[0].mxu0
        %6982 = vmatprep.mubr.bf16.mxu0 0
        %6983 = vmatmul.mubr.bf16.gmra.mrb[0].mxu0 %v6899
        %v6984 = vpop.f32.mrb[0].mxu0
        %v6985 = vadd.f32 0.0, %v6984
        %v6986 = vpop.f32.mrb[0].mxu0
        %v6987 = vpop.f32.mrb[0].mxu0
        %v6988 = vadd.f32 0.0, %v6987
        %v6989 = vpop.f32.mrb[0].mxu0
        %6990 = vmatprep.mubr.bf16.mxu0 0
        %6991 = vmatmul.mubr.bf16.gmra.mrb[0].mxu0 %v6902
        %v6992 = vpop.f32.mrb[0].mxu0
        %v6993 = vadd.f32 0.0, %v6992
        %v6994 = vpop.f32.mrb[0].mxu0
        %v6995 = vpop.f32.mrb[0].mxu0
        %v6996 = vadd.f32 0.0, %v6995
        %v6997 = vpop.f32.mrb[0].mxu0
        %6998 = vmatprep.mubr.bf16.mxu0 0
        %6999 = vmatmul.mubr.bf16.gmra.mrb[0].mxu0 %v6905
        %v7000 = vpop.f32.mrb[0].mxu0
        %v7001 = vadd.f32 0.0, %v7000
        %v7002 = vpop.f32.mrb[0].mxu0
        %v7003 = vpop.f32.mrb[0].mxu0
        %v7004 = vadd.f32 0.0, %v7003
        %v7005 = vpop.f32.mrb[0].mxu0
        %7006 = vmatprep.mubr.bf16.mxu0 0
        %7007 = vmatmul.mubr.bf16.gmra.mrb[0].mxu0 %v6908
        %v7008 = vpop.f32.mrb[0].mxu0
        %v7009 = vadd.f32 0.0, %v7008
        %v7010 = vpop.f32.mrb[0].mxu0
        %v7011 = vpop.f32.mrb[0].mxu0
        %v7012 = vadd.f32 0.0, %v7011
        %v7013 = vpop.f32.mrb[0].mxu0
        %7014 = vmatprep.mubr.bf16.mxu0 0
        %7015 = vmatmul.mubr.bf16.gmra.mrb[0].mxu0 %v6911
        %v7016 = vpop.f32.mrb[0].mxu0
        %v7017 = vadd.f32 0.0, %v7016
        %v7018 = vpop.f32.mrb[0].mxu0
        %v7019 = vpop.f32.mrb[0].mxu0
        %v7020 = vadd.f32 0.0, %v7019
        %v7021 = vpop.f32.mrb[0].mxu0
        %7022 = vmatprep.mubr.bf16.mxu0 0
        %7023 = vmatmul.mubr.bf16.gmra.mrb[0].mxu0 %v6914
        %v7024 = vpop.f32.mrb[0].mxu0
        %v7025 = vadd.f32 0.0, %v7024
        %v7026 = vpop.f32.mrb[0].mxu0
        %v7027 = vpop.f32.mrb[0].mxu0
        %v7028 = vadd.f32 0.0, %v7027
        %v7029 = vpop.f32.mrb[0].mxu0
        %7030 = vmatprep.mubr.bf16.mxu0 0
        %7031 = vmatmul.mubr.bf16.gmra.mrb[0].mxu0 %v6917
        %v7032 = vpop.f32.mrb[0].mxu0
        %v7033 = vadd.f32 0.0, %v7032
        %v7034 = vpop.f32.mrb[0].mxu0
        %v7035 = vpop.f32.mrb[0].mxu0
        %v7036 = vadd.f32 0.0, %v7035
        %v7037 = vpop.f32.mrb[0].mxu0
        %7038 = vmatprep.mubr.bf16.mxu0 0
        %7039 = vmatmul.mubr.bf16.gmra.mrb[0].mxu0 %v6920
        %v7040 = vpop.f32.mrb[0].mxu0
        %v7041 = vadd.f32 0.0, %v7040
        %v7042 = vpop.f32.mrb[0].mxu0
        %v7043 = vpop.f32.mrb[0].mxu0
        %v7044 = vadd.f32 0.0, %v7043
        %v7045 = vpop.f32.mrb[0].mxu0
        %7046 = vmatprep.mubr.bf16.mxu0 0
        %7047 = vmatmul.mubr.bf16.gmra.mrb[0].mxu0 %v6923
        %v7048 = vpop.f32.mrb[0].mxu0
        %v7049 = vadd.f32 0.0, %v7048
        %v7050 = vpop.f32.mrb[0].mxu0
        %v7051 = vpop.f32.mrb[0].mxu0
        %v7052 = vadd.f32 0.0, %v7051
        %v7053 = vpop.f32.mrb[0].mxu0
        %7054 = vmatprep.mubr.bf16.mxu0 0
        %7055 = vmatmul.mubr.bf16.gmra.mrb[0].mxu0 %v6926
        %v7056 = vpop.f32.mrb[0].mxu0
        %v7057 = vadd.f32 0.0, %v7056
        %v7058 = vpop.f32.mrb[0].mxu0
        %v7059 = vpop.f32.mrb[0].mxu0
        %v7060 = vadd.f32 0.0, %v7059
        %v7061 = vpop.f32.mrb[0].mxu0
        %7062 = vmatprep.mubr.bf16.mxu0 0
        %7063 = vmatmul.mubr.bf16.gmra.mrb[0].mxu0 %v6929
        %v7064 = vpop.f32.mrb[0].mxu0
        %v7065 = vadd.f32 0.0, %v7064
        %v7066 = vpop.f32.mrb[0].mxu0
        %v7067 = vpop.f32.mrb[0].mxu0
        %v7068 = vpop.f32.mrb[0].mxu0
        %7069 = vdwg.mxu0
        %v7070 = vadd.f32 %v6540, %v6969
        %v7071 = vadd.f32 %v6541, %v6972
        %v7072 = vadd.f32 %v6542, %v6977
        %v7073 = vadd.f32 %v6543, %v6980
        %v7074 = vadd.f32 %v6544, %v6985
        %v7075 = vadd.f32 %v6545, %v6988
        %v7076 = vadd.f32 %v6546, %v6993
        %v7077 = vadd.f32 %v6547, %v6996
        %v7078 = vadd.f32 %v6548, %v7001
        %v7079 = vadd.f32 %v6549, %v7004
        %v7080 = vadd.f32 %v6550, %v7009
        %v7081 = vadd.f32 %v6551, %v7012
        %v7082 = vadd.f32 %v6552, %v7017
        %v7083 = vadd.f32 %v6553, %v7020
        %v7084 = vadd.f32 %v6554, %v7025
        %v7085 = vadd.f32 %v6555, %v7028
        %v7086 = vadd.f32 %v6556, %v7033
        %v7087 = vadd.f32 %v6557, %v7036
        %v7088 = vadd.f32 %v6558, %v7041
        %v7089 = vadd.f32 %v6559, %v7044
        %v7090 = vadd.f32 %v6560, %v7049
        %v7091 = vadd.f32 %v6561, %v7052
        %v7092 = vadd.f32 %v6562, %v7057
        %v7093 = vadd.f32 %v6563, %v7060
        %v7094 = vadd.f32 %v6564, %v7065
        %s7095 = scalar_lea.vmem [#allocation5], 16
        %v7096 = vld [vmem:[%s7095] sm:$0x3]
        %v7097 = vcombine.low %v3438, %v3445
        %v7099 = vunpack.c.l.s4 1966171168
        %v7100 = vunpack.c.0.s8 %v7099
        %v7101 = vlaneseq
        %v7102 = vshrl.u32 %v7101, 7
        %v7103 = vsub.s32 %v7100, %v7102
        %v7104 = vrot.slane %v7097, %v7103
        %v7105 = vcombine.low %v4229, %v7104
        %v7106 = vcombine.low %v3487, %v3494
        %v7108 = vunpack.c.l.s4 1966171168
        %v7109 = vunpack.c.0.s8 %v7108
        %v7110 = vlaneseq
        %v7111 = vshrl.u32 %v7110, 7
        %v7112 = vsub.s32 %v7109, %v7111
        %v7113 = vrot.slane %v7106, %v7112
        %v7114 = vcombine.low %v4254, %v7113
        %v7115 = vcombine.low %v3536, %v3543
        %v7117 = vunpack.c.l.s4 1966171168
        %v7118 = vunpack.c.0.s8 %v7117
        %v7119 = vlaneseq
        %v7120 = vshrl.u32 %v7119, 7
        %v7121 = vsub.s32 %v7118, %v7120
        %v7122 = vrot.slane %v7115, %v7121
        %v7123 = vcombine.low %v4279, %v7122
        %v7124 = vcombine.low %v3550, %v3578
        %v7126 = vunpack.c.l.s4 1966171168
        %v7127 = vunpack.c.0.s8 %v7126
        %v7128 = vlaneseq
        %v7129 = vshrl.u32 %v7128, 7
        %v7130 = vsub.s32 %v7127, %v7129
        %v7131 = vrot.slane %v7124, %v7130
        %v7132 = vcombine.low %v7131, %v4311
        %v7133 = vcombine.low %v3599, %v3627
        %v7135 = vunpack.c.l.s4 1966171168
        %v7136 = vunpack.c.0.s8 %v7135
        %v7137 = vlaneseq
        %v7138 = vshrl.u32 %v7137, 7
        %v7139 = vsub.s32 %v7136, %v7138
        %v7140 = vrot.slane %v7133, %v7139
        %v7141 = vcombine.low %v7140, %v4336
        %v7142 = vcombine.low %v3648, %v3676
        %v7144 = vunpack.c.l.s4 1966171168
        %v7145 = vunpack.c.0.s8 %v7144
        %v7146 = vlaneseq
        %v7147 = vshrl.u32 %v7146, 7
        %v7148 = vsub.s32 %v7145, %v7147
        %v7149 = vrot.slane %v7142, %v7148
        %v7150 = vcombine.low %v7149, %v4361
        %v7151 = vcombine.low %v3697, %v3725
        %v7152 = vcombine.low %v3732, %v3739
        %v7154 = vunpack.c.l.s4 1966171168
        %v7155 = vunpack.c.0.s8 %v7154
        %v7156 = vlaneseq
        %v7157 = vshrl.u32 %v7156, 7
        %v7158 = vsub.s32 %v7155, %v7157
        %v7159 = vrot.slane %v7151, %v7158
        %v7161 = vunpack.c.l.s4 1966171168
        %v7162 = vunpack.c.0.s8 %v7161
        %v7163 = vlaneseq
        %v7164 = vshrl.u32 %v7163, 7
        %v7165 = vsub.s32 %v7162, %v7164
        %v7166 = vrot.slane %v7152, %v7165
        %v7167 = vcombine.low %v7159, %v7166
        %v7168 = vcombine.low %v3781, %v3788
        %v7170 = vunpack.c.l.s4 1966171168
        %v7171 = vunpack.c.0.s8 %v7170
        %v7172 = vlaneseq
        %v7173 = vshrl.u32 %v7172, 7
        %v7174 = vsub.s32 %v7171, %v7173
        %v7175 = vrot.slane %v7168, %v7174
        %v7176 = vcombine.low %v4412, %v7175
        %v7177 = vcombine.low %v3830, %v3837
        %v7179 = vunpack.c.l.s4 1966171168
        %v7180 = vunpack.c.0.s8 %v7179
        %v7181 = vlaneseq
        %v7182 = vshrl.u32 %v7181, 7
        %v7183 = vsub.s32 %v7180, %v7182
        %v7184 = vrot.slane %v7177, %v7183
        %v7185 = vcombine.low %v4437, %v7184
        %v7186 = vcombine.low %v3879, %v3886
        %v7188 = vunpack.c.l.s4 1966171168
        %v7189 = vunpack.c.0.s8 %v7188
        %v7190 = vlaneseq
        %v7191 = vshrl.u32 %v7190, 7
        %v7192 = vsub.s32 %v7189, %v7191
        %v7193 = vrot.slane %v7186, %v7192
        %v7194 = vcombine.low %v4462, %v7193
        %v7195 = vcombine.low %v3893, %v3918
        %v7197 = vunpack.c.l.s4 1966171168
        %v7198 = vunpack.c.0.s8 %v7197
        %v7199 = vlaneseq
        %v7200 = vshrl.u32 %v7199, 7
        %v7201 = vsub.s32 %v7198, %v7200
        %v7202 = vrot.slane %v7195, %v7201
        %v7203 = vcombine.low %v7202, %v4510
        %v7204 = vcombine.low %v4730, %v6083
        %v7205 = vcombine.low %v6084, %v6085
        %v7206 = vcombine.low %v6100, %v6107
        %v7208 = vunpack.c.l.s4 1966171168
        %v7209 = vunpack.c.0.s8 %v7208
        %v7210 = vlaneseq
        %v7211 = vshrl.u32 %v7210, 7
        %v7212 = vsub.s32 %v7209, %v7211
        %v7213 = vrot.slane %v7204, %v7212
        %v7215 = vunpack.c.l.s4 1966171168
        %v7216 = vunpack.c.0.s8 %v7215
        %v7217 = vlaneseq
        %v7218 = vshrl.u32 %v7217, 7
        %v7219 = vsub.s32 %v7216, %v7218
        %v7220 = vrot.slane %v7205, %v7219
        %v7222 = vunpack.c.l.s4 1966171168
        %v7223 = vunpack.c.0.s8 %v7222
        %v7224 = vlaneseq
        %v7225 = vshrl.u32 %v7224, 7
        %v7226 = vsub.s32 %v7223, %v7225
        %v7227 = vrot.slane %v7206, %v7226
        %v7228 = vcombine.low %v4519, %v7213
        %v7229 = vcombine.low %v7220, %v7227
        %v7231 = vunpack.c.l.s4 1966171168
        %v7232 = vunpack.c.0.s8 %v7231
        %v7233 = vlaneseq
        %v7234 = vshrl.u32 %v7233, 7
        %v7235 = vsub.s32 %v7232, %v7234
        %v7236 = vrot.slane %v7228, %v7235
        %v7238 = vunpack.c.l.s4 1966171168
        %v7239 = vunpack.c.0.s8 %v7238
        %v7240 = vlaneseq
        %v7241 = vshrl.u32 %v7240, 7
        %v7242 = vsub.s32 %v7239, %v7241
        %v7243 = vrot.slane %v7229, %v7242
        %v7244 = vcombine.low %v7236, %v7243
        %v7245 = vcombine.low %v6108, %v6565
        %v7247 = vunpack.c.l.s4 1966171168
        %v7248 = vunpack.c.0.s8 %v7247
        %v7249 = vlaneseq
        %v7250 = vshrl.u32 %v7249, 7
        %v7251 = vsub.s32 %v7248, %v7250
        %v7252 = vrot.slane %v7245, %v7251
        %v7254 = vunpack.c.l.s4 1966171168
        %v7255 = vunpack.c.0.s8 %v7254
        %v7256 = vlaneseq
        %v7257 = vshrl.u32 %v7256, 7
        %v7258 = vsub.s32 %v7255, %v7257
        %v7259 = vrot.slane %v7252, %v7258
        %v7261 = vsel %vm2360, %v7105, 0
        %v7264 = vsel %vm2360, %v7114, 0
        %v7267 = vsel %vm2360, %v7123, 0
        %v7270 = vsel %vm2360, %v7132, 0
        %v7273 = vsel %vm2360, %v7141, 0
        %v7276 = vsel %vm2360, %v7150, 0
        %v7279 = vsel %vm2360, %v7167, 0
        %v7282 = vsel %vm2360, %v7176, 0
        %v7285 = vsel %vm2360, %v7185, 0
        %v7288 = vsel %vm2360, %v7194, 0
        %v7291 = vsel %vm2360, %v7203, 0
        %v7294 = vsel %vm2360, %v7244, 0
        %v7297 = vsel %vm2360, %v7259, 0
        %v7300 = vsel %vm2400, %v7096, 0
        %7302 = vmatprep.subr.bf16.mxu0 0
        %7303 = vmatpush1.bf16.msra.mxu0 %v7300
        %7304 = vmatprep.subr.bf16.mxu0 0
        %7305 = vmatpush1.bf16.msra.mxu0 0
        %7306 = vmatprep.subr.bf16.mxu0 0
        %7307 = vmatpush1.bf16.msra.mxu0 0
        %7308 = vmatprep.subr.bf16.mxu0 0
        %7309 = vmatpush1.bf16.msra.mxu0 0
        %7310 = vmatprep.subr.bf16.mxu0 0
        %7311 = vmatpush1.bf16.msra.mxu0 0
        %7312 = vmatprep.subr.bf16.mxu0 0
        %7313 = vmatpush1.bf16.msra.mxu0 0
        %7314 = vmatprep.subr.bf16.mxu0 0
        %7315 = vmatpush1.bf16.msra.mxu0 0
        %7316 = vmatprep.subr.bf16.mxu0 0
        %7317 = vmatpush1.bf16.msra.mxu0 0
        %7318 = vmatprep.subr.bf16.mxu0 0
        %7319 = vmatpush1.bf16.msra.mxu0 0
        %7320 = vmatprep.subr.bf16.mxu0 0
        %7321 = vmatpush1.bf16.msra.mxu0 0
        %7322 = vmatprep.subr.bf16.mxu0 0
        %7323 = vmatpush1.bf16.msra.mxu0 0
        %7324 = vmatprep.subr.bf16.mxu0 0
        %7325 = vmatpush1.bf16.msra.mxu0 0
        %7326 = vmatprep.subr.bf16.mxu0 0
        %7327 = vmatpush1.bf16.msra.mxu0 0
        %7328 = vmatprep.subr.bf16.mxu0 0
        %7329 = vmatpush1.bf16.msra.mxu0 0
        %7330 = vmatprep.subr.bf16.mxu0 0
        %7331 = vmatpush1.bf16.msra.mxu0 0
        %7332 = vmatprep.subr.bf16.mxu0 0
        %7333 = vmatpush1.bf16.msra.mxu0 0
        %7334 = vmatprep.mubr.bf16.mxu0 0
        %7335 = vmatmul.mubr.bf16.gmra.mrb[0].mxu0 %v7261
        %v7336 = vpop.f32.mrb[0].mxu0
        %v7337 = vadd.f32 0.0, %v7336
        %v7338 = vpop.f32.mrb[0].mxu0
        %v7339 = vpop.f32.mrb[0].mxu0
        %v7340 = vadd.f32 0.0, %v7339
        %v7341 = vpop.f32.mrb[0].mxu0
        %7342 = vmatprep.mubr.bf16.mxu0 0
        %7343 = vmatmul.mubr.bf16.gmra.mrb[0].mxu0 %v7264
        %v7344 = vpop.f32.mrb[0].mxu0
        %v7345 = vadd.f32 0.0, %v7344
        %v7346 = vpop.f32.mrb[0].mxu0
        %v7347 = vpop.f32.mrb[0].mxu0
        %v7348 = vadd.f32 0.0, %v7347
        %v7349 = vpop.f32.mrb[0].mxu0
        %7350 = vmatprep.mubr.bf16.mxu0 0
        %7351 = vmatmul.mubr.bf16.gmra.mrb[0].mxu0 %v7267
        %v7352 = vpop.f32.mrb[0].mxu0
        %v7353 = vadd.f32 0.0, %v7352
        %v7354 = vpop.f32.mrb[0].mxu0
        %v7355 = vpop.f32.mrb[0].mxu0
        %v7356 = vadd.f32 0.0, %v7355
        %v7357 = vpop.f32.mrb[0].mxu0
        %7358 = vmatprep.mubr.bf16.mxu0 0
        %7359 = vmatmul.mubr.bf16.gmra.mrb[0].mxu0 %v7270
        %v7360 = vpop.f32.mrb[0].mxu0
        %v7361 = vadd.f32 0.0, %v7360
        %v7362 = vpop.f32.mrb[0].mxu0
        %v7363 = vpop.f32.mrb[0].mxu0
        %v7364 = vadd.f32 0.0, %v7363
        %v7365 = vpop.f32.mrb[0].mxu0
        %7366 = vmatprep.mubr.bf16.mxu0 0
        %7367 = vmatmul.mubr.bf16.gmra.mrb[0].mxu0 %v7273
        %v7368 = vpop.f32.mrb[0].mxu0
        %v7369 = vadd.f32 0.0, %v7368
        %v7370 = vpop.f32.mrb[0].mxu0
        %v7371 = vpop.f32.mrb[0].mxu0
        %v7372 = vadd.f32 0.0, %v7371
        %v7373 = vpop.f32.mrb[0].mxu0
        %7374 = vmatprep.mubr.bf16.mxu0 0
        %7375 = vmatmul.mubr.bf16.gmra.mrb[0].mxu0 %v7276
        %v7376 = vpop.f32.mrb[0].mxu0
        %v7377 = vadd.f32 0.0, %v7376
        %v7378 = vpop.f32.mrb[0].mxu0
        %v7379 = vpop.f32.mrb[0].mxu0
        %v7380 = vadd.f32 0.0, %v7379
        %v7381 = vpop.f32.mrb[0].mxu0
        %7382 = vmatprep.mubr.bf16.mxu0 0
        %7383 = vmatmul.mubr.bf16.gmra.mrb[0].mxu0 %v7279
        %v7384 = vpop.f32.mrb[0].mxu0
        %v7385 = vadd.f32 0.0, %v7384
        %v7386 = vpop.f32.mrb[0].mxu0
        %v7387 = vpop.f32.mrb[0].mxu0
        %v7388 = vadd.f32 0.0, %v7387
        %v7389 = vpop.f32.mrb[0].mxu0
        %7390 = vmatprep.mubr.bf16.mxu0 0
        %7391 = vmatmul.mubr.bf16.gmra.mrb[0].mxu0 %v7282
        %v7392 = vpop.f32.mrb[0].mxu0
        %v7393 = vadd.f32 0.0, %v7392
        %v7394 = vpop.f32.mrb[0].mxu0
        %v7395 = vpop.f32.mrb[0].mxu0
        %v7396 = vadd.f32 0.0, %v7395
        %v7397 = vpop.f32.mrb[0].mxu0
        %7398 = vmatprep.mubr.bf16.mxu0 0
        %7399 = vmatmul.mubr.bf16.gmra.mrb[0].mxu0 %v7285
        %v7400 = vpop.f32.mrb[0].mxu0
        %v7401 = vadd.f32 0.0, %v7400
        %v7402 = vpop.f32.mrb[0].mxu0
        %v7403 = vpop.f32.mrb[0].mxu0
        %v7404 = vadd.f32 0.0, %v7403
        %v7405 = vpop.f32.mrb[0].mxu0
        %7406 = vmatprep.mubr.bf16.mxu0 0
        %7407 = vmatmul.mubr.bf16.gmra.mrb[0].mxu0 %v7288
        %v7408 = vpop.f32.mrb[0].mxu0
        %v7409 = vadd.f32 0.0, %v7408
        %v7410 = vpop.f32.mrb[0].mxu0
        %v7411 = vpop.f32.mrb[0].mxu0
        %v7412 = vadd.f32 0.0, %v7411
        %v7413 = vpop.f32.mrb[0].mxu0
        %7414 = vmatprep.mubr.bf16.mxu0 0
        %7415 = vmatmul.mubr.bf16.gmra.mrb[0].mxu0 %v7291
        %v7416 = vpop.f32.mrb[0].mxu0
        %v7417 = vadd.f32 0.0, %v7416
        %v7418 = vpop.f32.mrb[0].mxu0
        %v7419 = vpop.f32.mrb[0].mxu0
        %v7420 = vadd.f32 0.0, %v7419
        %v7421 = vpop.f32.mrb[0].mxu0
        %7422 = vmatprep.mubr.bf16.mxu0 0
        %7423 = vmatmul.mubr.bf16.gmra.mrb[0].mxu0 %v7294
        %v7424 = vpop.f32.mrb[0].mxu0
        %v7425 = vadd.f32 0.0, %v7424
        %v7426 = vpop.f32.mrb[0].mxu0
        %v7427 = vpop.f32.mrb[0].mxu0
        %v7428 = vadd.f32 0.0, %v7427
        %v7429 = vpop.f32.mrb[0].mxu0
        %7430 = vmatprep.mubr.bf16.mxu0 0
        %7431 = vmatmul.mubr.bf16.gmra.mrb[0].mxu0 %v7297
        %v7432 = vpop.f32.mrb[0].mxu0
        %v7433 = vadd.f32 0.0, %v7432
        %v7434 = vpop.f32.mrb[0].mxu0
        %v7435 = vpop.f32.mrb[0].mxu0
        %v7436 = vpop.f32.mrb[0].mxu0
        %7437 = vdwg.mxu0
        %v7438 = vadd.f32 %v7070, %v7337
        %v7439 = vadd.f32 %v7071, %v7340
        %v7440 = vadd.f32 %v7072, %v7345
        %v7441 = vadd.f32 %v7073, %v7348
        %v7442 = vadd.f32 %v7074, %v7353
        %v7443 = vadd.f32 %v7075, %v7356
        %v7444 = vadd.f32 %v7076, %v7361
        %v7445 = vadd.f32 %v7077, %v7364
        %v7446 = vadd.f32 %v7078, %v7369
        %v7447 = vadd.f32 %v7079, %v7372
        %v7448 = vadd.f32 %v7080, %v7377
        %v7449 = vadd.f32 %v7081, %v7380
        %v7450 = vadd.f32 %v7082, %v7385
        %v7451 = vadd.f32 %v7083, %v7388
        %v7452 = vadd.f32 %v7084, %v7393
        %v7453 = vadd.f32 %v7085, %v7396
        %v7454 = vadd.f32 %v7086, %v7401
        %v7455 = vadd.f32 %v7087, %v7404
        %v7456 = vadd.f32 %v7088, %v7409
        %v7457 = vadd.f32 %v7089, %v7412
        %v7458 = vadd.f32 %v7090, %v7417
        %v7459 = vadd.f32 %v7091, %v7420
        %v7460 = vadd.f32 %v7092, %v7425
        %v7461 = vadd.f32 %v7093, %v7428
        %v7462 = vadd.f32 %v7094, %v7433
        %v7463 = vpack.c.bf16 %v7439, %v7438
        %v7464 = vpack.c.bf16 %v7441, %v7440
        %v7465 = vpack.c.bf16 %v7443, %v7442
        %v7466 = vpack.c.bf16 %v7445, %v7444
        %v7467 = vpack.c.bf16 %v7447, %v7446
        %v7468 = vpack.c.bf16 %v7449, %v7448
        %v7469 = vpack.c.bf16 %v7451, %v7450
        %v7470 = vpack.c.bf16 %v7453, %v7452
        %v7471 = vpack.c.bf16 %v7455, %v7454
        %v7472 = vpack.c.bf16 %v7457, %v7456
        %v7473 = vpack.c.bf16 %v7459, %v7458
        %v7474 = vpack.c.bf16 %v7461, %v7460
        %v7475 = vpack.c.bf16 %v7462, %v7462
        %v7489 = vunpack.c.l.b16 %v7463
        %v7490 = vunpack.c.h.b16 %v7463
        %v7491 = vunpack.c.l.b16 %v7464
        %v7492 = vunpack.c.h.b16 %v7464
        %v7493 = vunpack.c.l.b16 %v7465
        %v7494 = vunpack.c.h.b16 %v7465
        %v7495 = vunpack.c.l.b16 %v7466
        %v7496 = vunpack.c.h.b16 %v7466
        %v7497 = vunpack.c.l.b16 %v7467
        %v7498 = vunpack.c.h.b16 %v7467
        %v7499 = vunpack.c.l.b16 %v7468
        %v7500 = vunpack.c.h.b16 %v7468
        %v7501 = vunpack.c.l.b16 %v7469
        %v7502 = vunpack.c.h.b16 %v7469
        %v7503 = vunpack.c.l.b16 %v7470
        %v7504 = vunpack.c.h.b16 %v7470
        %v7505 = vunpack.c.l.b16 %v7471
        %v7506 = vunpack.c.h.b16 %v7471
        %v7507 = vunpack.c.l.b16 %v7472
        %v7508 = vunpack.c.h.b16 %v7472
        %v7509 = vunpack.c.l.b16 %v7473
        %v7510 = vunpack.c.h.b16 %v7473
        %v7511 = vunpack.c.l.b16 %v7474
        %v7512 = vunpack.c.h.b16 %v7474
        %v7513 = vunpack.c.l.b16 %v7475
        %v7514 = vpack.c.b16 %v7489, %v7489
        %v7515 = vpack.c.b16 %v7490, %v7490
        %v7516 = vpack.c.b16 %v7491, %v7491
        %v7517 = vpack.c.b16 %v7492, %v7492
        %v7518 = vpack.c.b16 %v7493, %v7493
        %v7519 = vpack.c.b16 %v7494, %v7494
        %v7520 = vpack.c.b16 %v7495, %v7495
        %v7521 = vpack.c.b16 %v7496, %v7496
        %v7522 = vpack.c.b16 %v7497, %v7497
        %v7523 = vpack.c.b16 %v7498, %v7498
        %v7524 = vpack.c.b16 %v7499, %v7499
        %v7525 = vpack.c.b16 %v7500, %v7500
        %v7526 = vpack.c.b16 %v7501, %v7501
        %v7527 = vpack.c.b16 %v7502, %v7502
        %v7528 = vpack.c.b16 %v7503, %v7503
        %v7529 = vpack.c.b16 %v7504, %v7504
        %v7530 = vpack.c.b16 %v7505, %v7505
        %v7531 = vpack.c.b16 %v7506, %v7506
        %v7532 = vpack.c.b16 %v7507, %v7507
        %v7533 = vpack.c.b16 %v7508, %v7508
        %v7534 = vpack.c.b16 %v7509, %v7509
        %v7535 = vpack.c.b16 %v7510, %v7510
        %v7536 = vpack.c.b16 %v7511, %v7511
        %v7537 = vpack.c.b16 %v7512, %v7512
        %v7538 = vpack.c.b16 %v7513, %v7513
        %7564 = vst [vmem:[%s206] sm:$0xf] %v7514
        %7565 = vst [vmem:[%s206 + $0x4] sm:$0xf] %v7515
        %7566 = vst [vmem:[%s206 + $0x8] sm:$0xf] %v7516
        %7567 = vst [vmem:[%s206 + $0xc] sm:$0xf] %v7517
        %7568 = vst [vmem:[%s206 + $0x10] sm:$0xf] %v7518
        %7569 = vst [vmem:[%s206 + $0x14] sm:$0xf] %v7519
        %7570 = vst [vmem:[%s206 + $0x18] sm:$0xf] %v7520
        %7571 = vst [vmem:[%s206 + $0x1c] sm:$0xf] %v7521
        %7572 = vst [vmem:[%s206 + $0x20] sm:$0xf] %v7522
        %7573 = vst [vmem:[%s206 + $0x24] sm:$0xf] %v7523
        %7574 = vst [vmem:[%s206 + $0x28] sm:$0xf] %v7524
        %7575 = vst [vmem:[%s206 + $0x2c] sm:$0xf] %v7525
        %7576 = vst [vmem:[%s206 + $0x30] sm:$0xf] %v7526
        %7577 = vst [vmem:[%s206 + $0x34] sm:$0xf] %v7527
        %7578 = vst [vmem:[%s206 + $0x38] sm:$0xf] %v7528
        %7579 = vst [vmem:[%s206 + $0x3c] sm:$0xf] %v7529
        %7580 = vst [vmem:[%s206 + $0x40] sm:$0xf] %v7530
        %7581 = vst [vmem:[%s206 + $0x44] sm:$0xf] %v7531
        %7582 = vst [vmem:[%s206 + $0x48] sm:$0xf] %v7532
        %7583 = vst [vmem:[%s206 + $0x4c] sm:$0xf] %v7533
        %7584 = vst [vmem:[%s206 + $0x50] sm:$0xf] %v7534
        %7585 = vst [vmem:[%s206 + $0x54] sm:$0xf] %v7535
        %7586 = vst [vmem:[%s206 + $0x58] sm:$0xf] %v7536
        %7587 = vst [vmem:[%s206 + $0x5c] sm:$0xf] %v7537
        %7588 = vst [vmem:[%s206 + $0x60] sm:$0x3] %v7538
        %s7589 = sand.u32 %s103, 1
        %s7590 = scalar_lea.sflag [#allocation4], %s7589
        %s7591 = sand.u32 %s103, 1
        %s7592 = smul.addr %s7591, 100
        %s7593 = scalar_lea.vmem [#allocation7], %s7592
        // Predicated region
        $region37: #{conv2d_modified.1} parent=27 // pred_check
          %p7594 = pneg %p113
        $region38: #{conv2d_modified.1} parent=27 // pred_check_branch
          %7596 = sbr.rel (%p7594) target = $region40
        $region39: #{conv2d_modified.1} parent=27 // pred_region
          %s7597 = smul.u32 25, %s27
          %s7599 = ssub.s32 1600, 1600
          %7600 = vsyncadd %s7590, %s7599
          %s7601 = sadd.s32 %s25, %s7597
          %s7602 = smul.addr %s26, 25
          %s7603 = sadd.s32 %s7601, %s7602
          %s7604 = smul.addr %s7603, 64
          %s7605 = scalar_lea.hbm %s2, %s7604
          %s7606 = sshll.u32 %s7593, 4
          %s7607 = int_to_ptr.vmem [resolvable:$true] %s7606
          %7612 = dma.vmem_to_hbm [thread:$0]  %s7607, 1600, %s7605, %s7590, 64, 64, 4
        $region40: #{conv2d_modified.1} parent=27 // pred_fallthru
          _
      $region28: #{conv2d_modified.1} parent=5 // pred_fallthru
        _
      %p7613 = scmp.le.s32.totalorder 2, %s15
      // Predicated region
      $region41: #{conv2d_modified.1} parent=5 // pred_check
        %p7614 = pneg %p7613
      $region42: #{conv2d_modified.1} parent=5 // pred_check_branch
        %7616 = sbr.rel (%p7614) target = $region44
      $region43: #{conv2d_modified.1} parent=5 // pred_region
        %s7617 = ssub.s32 %s15, 2
        // Predicated region
        $region45: #{conv2d_modified.1} parent=43 // pred_check
          %p7618 = pneg %p119
        $region46: #{conv2d_modified.1} parent=43 // pred_check_branch
          %7620 = sbr.rel (%p7618) target = $region48
        $region47: #{conv2d_modified.1} parent=43 // pred_region
          %s7621 = sand.u32 %s104, 1
          %s7622 = scalar_lea.sflag [#allocation4], %s7621
          %s7623 = sand.u32 %s104, 1
          %s7624 = smul.addr %s7623, 100
          %s7625 = scalar_lea.vmem [#allocation7], %s7624
          %7626 = dma.done %s7622, 1600
        $region48: #{conv2d_modified.1} parent=43 // pred_fallthru
          _
      $region44: #{conv2d_modified.1} parent=5 // pred_fallthru
        _
    $region6: #{conv2d_modified.1} parent=1 // loop_footer
      %s19 = sadd.s32 1, %s15
    $region7: #{conv2d_modified.1} parent=1 // loop_footer_branch
      %14 = sbr.rel target = $region3
    $region8: #{conv2d_modified.1} parent=1 // loop_exit
      _
    %7627 = vsyncpa [#allocation3], 1
    %s7628 = scalar_lea.sflag [#allocation3], 1
    %7629 = vsyncpa %s7628, 1
    %7630 = vsyncpa [#allocation6], 1
    %7631 = vsyncpa [#allocation4], 1
    %s7632 = scalar_lea.sflag [#allocation4], 1
    %7633 = vsyncpa %s7632, 1

</llo_original>
